<compile_context>
chip_gen: v6e
topology: v6e:2x2x1
jax: 0.10.0
libtpu: 0.0.40
codegen_flags: <defaults>
</compile_context>

<pallas_src>
import jax
import jax.numpy as jnp
from jax import lax
from jax.experimental import pallas as pl
from jax.experimental.pallas import tpu as pltpu

EPS = 1e-5          # nn.BatchNorm2d default
LANES = 128


def _round_up(x, m):
    return (x + m - 1) // m * m


def _make_conv_stats_kernel(H, W, WP2, Cin, CP):
    """Pass 1: 3x3 conv as 9 shifted MXU matmuls + per-image BN partial stats."""
    ext_rows = H * WP2

    def kernel(x_ref, w_ref, act_ref, sum_ref, ssq_ref):
        # x_ref: [1, PIMG, Cin] bf16 -- row-flattened padded image (+ guard rows)
        # w_ref: [9, Cin, CP]  bf16 -- one [Cin, CP] weight slab per 3x3 tap
        x_all = x_ref[0].astype(jnp.float32)                      # [PIMG, Cin]
        acc = jnp.zeros((ext_rows, CP), jnp.float32)
        for t in range(9):
            ky, kx = divmod(t, 3)
            off = ky * WP2 + kx                                   # tap shift
            lhs = x_all[off:off + ext_rows, :].astype(jnp.bfloat16)
            acc = acc + jnp.dot(lhs, w_ref[t],
                                preferred_element_type=jnp.float32)
        # keep only the W valid columns of each output row (rest is halo junk)
        rows = [acc[y * WP2:y * WP2 + W, :][None] for y in range(H)]
        valid = jnp.concatenate(rows, axis=0)                     # [H, W, CP] f32
        act_ref[0] = valid
        # per-image, per-channel partial statistics (finalised in the wrapper)
        sum_ref[...] = jnp.sum(jnp.sum(valid, axis=0, keepdims=True),
                               axis=1, keepdims=True)
        ssq_ref[...] = jnp.sum(jnp.sum(valid * valid, axis=0, keepdims=True),
                               axis=1, keepdims=True)

    return kernel


def _make_bn_relu_pool_kernel(H, W, Ho, Wo, CP):
    """Pass 2: fused BN-affine + ReLU + 3x3/stride-2 max-pool, all in VMEM."""

    def kernel(act_ref, scale_ref, shift_ref, out_ref):
        # act_ref: [1, H, W, CP] f32; scale/shift: [1, 1, CP] f32
        y = act_ref[0] * scale_ref[...] + shift_ref[...]          # BN affine
        y = jnp.maximum(y, 0.0)                                   # ReLU
        out_rows = []
        for yo in range(Ho):
            band = jnp.maximum(jnp.maximum(y[2 * yo], y[2 * yo + 1]),
                               y[2 * yo + 2])                     # [W, CP]
            slide = jnp.maximum(jnp.maximum(band[0:W - 2], band[1:W - 1]),
                                band[2:W])                        # [W-2, CP]
            cols = [slide[2 * xo:2 * xo + 1, :] for xo in range(Wo)]
            out_rows.append(jnp.concatenate(cols, axis=0)[None])  # [1, Wo, CP]
        out_ref[0] = jnp.concatenate(out_rows, axis=0)            # [Ho, Wo, CP]

    return kernel


def block_forward(x_nchw, weight, gamma, beta):
    """x: [N,Cin,H,W]; weight: [Cout,Cin,3,3]; gamma/beta: [Cout] -> NCHW out."""
    N, Cin, H, W = x_nchw.shape
    Cout = weight.shape[0]
    f32 = jnp.float32

    Hp = H + 2
    WP2 = _round_up(W + 2, 8)            # padded row width (8-aligned rows)
    EXTRA = 8                            # guard rows so tap shifts never read OOB
    PIMG = Hp * WP2 + EXTRA
    EXT_ROWS = H * WP2
    CP = _round_up(Cout, LANES)          # lane-dense channel dim (=128)
    Ho = (H - 3) // 2 + 1
    Wo = (W - 3) // 2 + 1

    # ---- operand prep (cheap glue: 1x input + halo; no im2col, no view stacks)
    x_nhwc = jnp.transpose(x_nchw.astype(f32), (0, 2, 3, 1))      # NHWC
    xpad = jnp.pad(x_nhwc, ((0, 0), (1, 1), (1, WP2 - W - 1), (0, 0)))
    xflat = jnp.pad(xpad.reshape(N, Hp * WP2, Cin),
                    ((0, 0), (0, EXTRA), (0, 0))).astype(jnp.bfloat16)

    wt = jnp.transpose(weight.astype(f32), (2, 3, 1, 0)).reshape(9, Cin, Cout)
    w_taps = jnp.zeros((9, Cin, CP), f32).at[:, :, :Cout].set(wt)
    w_taps = w_taps.astype(jnp.bfloat16)

    gamma_p = jnp.zeros((1, 1, CP), f32).at[0, 0, :Cout].set(gamma.astype(f32))
    beta_p = jnp.zeros((1, 1, CP), f32).at[0, 0, :Cout].set(beta.astype(f32))

    cparams = pltpu.CompilerParams(dimension_semantics=("parallel",),
                                   vmem_limit_bytes=32 * 1024 * 1024)

    # ---- pass 1: conv (9 shifted bf16 MXU matmuls) + BN partial statistics
    conv_kernel = _make_conv_stats_kernel(H, W, WP2, Cin, CP)
    act, csum, cssq = pl.pallas_call(
        conv_kernel,
        grid=(N,),
        in_specs=[
            pl.BlockSpec((1, PIMG, Cin), lambda n: (n, 0, 0)),
            pl.BlockSpec((9, Cin, CP), lambda n: (0, 0, 0)),
        ],
        out_specs=[
            pl.BlockSpec((1, H, W, CP), lambda n: (n, 0, 0, 0)),
            pl.BlockSpec((1, 1, CP), lambda n: (n, 0, 0)),
            pl.BlockSpec((1, 1, CP), lambda n: (n, 0, 0)),
        ],
        out_shape=[
            jax.ShapeDtypeStruct((N, H, W, CP), f32),
            jax.ShapeDtypeStruct((N, 1, CP), f32),
            jax.ShapeDtypeStruct((N, 1, CP), f32),
        ],
        compiler_params=cparams,
        cost_estimate=pl.CostEstimate(
            flops=2 * N * EXT_ROWS * Cin * CP * 9,
            transcendentals=0,
            bytes_accessed=(xflat.size * 2 + w_taps.size * 2
                            + N * H * W * CP * 4)),
    )(xflat, w_taps)

    # ---- tiny BN finalisation: per-channel scale/shift ([1,1,128] vectors)
    cnt = float(N * H * W)
    mean = jnp.sum(csum, axis=0, keepdims=True) / cnt             # [1,1,CP]
    ex2 = jnp.sum(cssq, axis=0, keepdims=True) / cnt
    var = jnp.maximum(ex2 - mean * mean, 0.0)                     # biased (torch)
    inv = lax.rsqrt(var + EPS)
    scale = gamma_p * inv
    shift = beta_p - mean * scale

    # ---- pass 2: fused normalize + ReLU + 3x3/stride-2 max-pool
    pool_kernel = _make_bn_relu_pool_kernel(H, W, Ho, Wo, CP)
    pooled = pl.pallas_call(
        pool_kernel,
        grid=(N,),
        in_specs=[
            pl.BlockSpec((1, H, W, CP), lambda n: (n, 0, 0, 0)),
            pl.BlockSpec((1, 1, CP), lambda n: (0, 0, 0)),
            pl.BlockSpec((1, 1, CP), lambda n: (0, 0, 0)),
        ],
        out_specs=pl.BlockSpec((1, Ho, Wo, CP), lambda n: (n, 0, 0, 0)),
        out_shape=jax.ShapeDtypeStruct((N, Ho, Wo, CP), f32),
        compiler_params=cparams,
        cost_estimate=pl.CostEstimate(
            flops=N * H * W * CP * 2 + N * Ho * Wo * CP * 9,
            transcendentals=0,
            bytes_accessed=N * H * W * CP * 4 + N * Ho * Wo * CP * 4),
    )(act, scale, shift)

    # drop the channel padding, return NCHW like the PyTorch module
    return jnp.transpose(pooled[:, :, :, :Cout], (0, 3, 1, 2))


def _reference(x_nchw, weight, gamma, beta):
    """Pure-JAX f32 reference of the same forward pass (for verification)."""
    conv = lax.conv_general_dilated(
        x_nchw, weight, window_strides=(1, 1), padding=((1, 1), (1, 1)),
        dimension_numbers=("NCHW", "OIHW", "NCHW"))
    mean = conv.mean(axis=(0, 2, 3), keepdims=True)
    var = conv.var(axis=(0, 2, 3), keepdims=True)       # biased, like torch BN train
    y = (conv - mean) * lax.rsqrt(var + EPS)
    y = y * gamma.reshape(1, -1, 1, 1) + beta.reshape(1, -1, 1, 1)
    y = jnp.maximum(y, 0.0)
    return lax.reduce_window(y, -jnp.inf, lax.max,
                             window_dimensions=(1, 1, 3, 3),
                             window_strides=(1, 1, 2, 2), padding="VALID")


if __name__ == "__main__":
    key = jax.random.PRNGKey(0)
    k1, k2 = jax.random.split(key)

    N, Cin, Cout, H, W = 2, 4, 8, 16, 16
    x = jax.random.normal(k1, (N, Cin, H, W), jnp.float32)
    weight = jax.random.normal(k2, (Cout, Cin, 3, 3), jnp.float32) * 0.1
    gamma = jnp.ones((Cout,), jnp.float32)   # nn.BatchNorm2d default init
    beta = jnp.zeros((Cout,), jnp.float32)

    out = jax.block_until_ready(block_forward(x, weight, gamma, beta))
    assert out.shape == (N, Cout, 7, 7), out.shape

    # The kernel feeds bf16 operands to the MXU (per the perf review), so check
    # tightly against the same math on bf16-rounded operands (kernel logic) ...
    xr = x.astype(jnp.bfloat16).astype(jnp.float32)
    wr = weight.astype(jnp.bfloat16).astype(jnp.float32)
    ref_bf16_ops = jax.block_until_ready(_reference(xr, wr, gamma, beta))
    err_logic = float(jnp.max(jnp.abs(out - ref_bf16_ops)))
    assert jnp.allclose(out, ref_bf16_ops, rtol=2e-3, atol=2e-3), err_logic

    # ... and loosely against the pure-f32 reference (bounds bf16 input rounding).
    ref_f32 = jax.block_until_ready(_reference(x, weight, gamma, beta))
    err_f32 = float(jnp.max(jnp.abs(out - ref_f32)))
    assert jnp.allclose(out, ref_f32, rtol=7e-2, atol=7e-2), err_f32

    print("KERNEL_OK")
</pallas_src>

<mosaic_0001>
module attributes {stable_mosaic.version = 11 : i64} {
  func.func @kernel(%arg0: i32, %arg1: memref<1x440x4xbf16, #tpu.memory_space<vmem>>, %arg2: memref<9x4x128xbf16, #tpu.memory_space<vmem>>, %arg3: memref<1x16x16x128xf32, #tpu.memory_space<vmem>>, %arg4: memref<1x1x128xf32, #tpu.memory_space<vmem>>, %arg5: memref<1x1x128xf32, #tpu.memory_space<vmem>>) attributes {dimension_semantics = [#tpu.dimension_semantics<parallel>], iteration_bounds = array<i64: 2>, scalar_prefetch = 0 : i64, scratch_operands = 0 : i64, tpu.core_type = #tpu.core_type<tc>, window_params = [{transform_indices = @transform_0, window_bounds = array<i64: 1, 440, 4>}, {pipeline_mode = #tpu.pipeline_mode<synchronous>, transform_indices = @transform_1, window_bounds = array<i64: 9, 4, 128>}, {transform_indices = @transform_2, window_bounds = array<i64: 1, 16, 16, 128>}, {transform_indices = @transform_3, window_bounds = array<i64: 1, 1, 128>}, {transform_indices = @transform_4, window_bounds = array<i64: 1, 1, 128>}]} {
    %c0 = arith.constant 0 : index
    %c0_0 = arith.constant 0 : index
    %c0_1 = arith.constant 0 : index
    %0 = vector.load %arg1[%c0, %c0_0, %c0_1] : memref<1x440x4xbf16, #tpu.memory_space<vmem>>, vector<1x440x4xbf16>
    %1 = vector.shape_cast %0 : vector<1x440x4xbf16> to vector<440x4xbf16>
    %2 = arith.extf %1 : vector<440x4xbf16> to vector<440x4xf32>
    %cst = arith.constant 0.000000e+00 : f32
    %3 = vector.broadcast %cst : f32 to vector<384x128xf32>
    %4 = vector.extract_strided_slice %2 {offsets = [0, 0], sizes = [384, 4], strides = [1, 1]} : vector<440x4xf32> to vector<384x4xf32>
    %5 = arith.truncf %4 : vector<384x4xf32> to vector<384x4xbf16>
    %c0_2 = arith.constant 0 : index
    %c0_3 = arith.constant 0 : index
    %c0_4 = arith.constant 0 : index
    %6 = vector.load %arg2[%c0_2, %c0_3, %c0_4] : memref<9x4x128xbf16, #tpu.memory_space<vmem>>, vector<1x4x128xbf16>
    %7 = vector.shape_cast %6 : vector<1x4x128xbf16> to vector<4x128xbf16>
    %cst_5 = arith.constant dense<0.000000e+00> : vector<384x128xf32>
    %8 = tpu.matmul %5, %7, %cst_5 {dimension_numbers = #tpu.dot_dimension_numbers<[1], [0], [0], [1], [0, 0, 1, 1], [], []>} : vector<384x4xbf16>, vector<4x128xbf16>, vector<384x128xf32> -> vector<384x128xf32>
    %9 = arith.addf %3, %8 : vector<384x128xf32>
    %10 = vector.extract_strided_slice %2 {offsets = [1, 0], sizes = [384, 4], strides = [1, 1]} : vector<440x4xf32> to vector<384x4xf32>
    %11 = arith.truncf %10 : vector<384x4xf32> to vector<384x4xbf16>
    %c1 = arith.constant 1 : index
    %c0_6 = arith.constant 0 : index
    %c0_7 = arith.constant 0 : index
    %12 = vector.load %arg2[%c1, %c0_6, %c0_7] : memref<9x4x128xbf16, #tpu.memory_space<vmem>>, vector<1x4x128xbf16>
    %13 = vector.shape_cast %12 : vector<1x4x128xbf16> to vector<4x128xbf16>
    %cst_8 = arith.constant dense<0.000000e+00> : vector<384x128xf32>
    %14 = tpu.matmul %11, %13, %cst_8 {dimension_numbers = #tpu.dot_dimension_numbers<[1], [0], [0], [1], [0, 0, 1, 1], [], []>} : vector<384x4xbf16>, vector<4x128xbf16>, vector<384x128xf32> -> vector<384x128xf32>
    %15 = arith.addf %9, %14 : vector<384x128xf32>
    %16 = vector.extract_strided_slice %2 {offsets = [2, 0], sizes = [384, 4], strides = [1, 1]} : vector<440x4xf32> to vector<384x4xf32>
    %17 = arith.truncf %16 : vector<384x4xf32> to vector<384x4xbf16>
    %c2 = arith.constant 2 : index
    %c0_9 = arith.constant 0 : index
    %c0_10 = arith.constant 0 : index
    %18 = vector.load %arg2[%c2, %c0_9, %c0_10] : memref<9x4x128xbf16, #tpu.memory_space<vmem>>, vector<1x4x128xbf16>
    %19 = vector.shape_cast %18 : vector<1x4x128xbf16> to vector<4x128xbf16>
    %cst_11 = arith.constant dense<0.000000e+00> : vector<384x128xf32>
    %20 = tpu.matmul %17, %19, %cst_11 {dimension_numbers = #tpu.dot_dimension_numbers<[1], [0], [0], [1], [0, 0, 1, 1], [], []>} : vector<384x4xbf16>, vector<4x128xbf16>, vector<384x128xf32> -> vector<384x128xf32>
    %21 = arith.addf %15, %20 : vector<384x128xf32>
    %22 = vector.extract_strided_slice %2 {offsets = [24, 0], sizes = [384, 4], strides = [1, 1]} : vector<440x4xf32> to vector<384x4xf32>
    %23 = arith.truncf %22 : vector<384x4xf32> to vector<384x4xbf16>
    %c3 = arith.constant 3 : index
    %c0_12 = arith.constant 0 : index
    %c0_13 = arith.constant 0 : index
    %24 = vector.load %arg2[%c3, %c0_12, %c0_13] : memref<9x4x128xbf16, #tpu.memory_space<vmem>>, vector<1x4x128xbf16>
    %25 = vector.shape_cast %24 : vector<1x4x128xbf16> to vector<4x128xbf16>
    %cst_14 = arith.constant dense<0.000000e+00> : vector<384x128xf32>
    %26 = tpu.matmul %23, %25, %cst_14 {dimension_numbers = #tpu.dot_dimension_numbers<[1], [0], [0], [1], [0, 0, 1, 1], [], []>} : vector<384x4xbf16>, vector<4x128xbf16>, vector<384x128xf32> -> vector<384x128xf32>
    %27 = arith.addf %21, %26 : vector<384x128xf32>
    %28 = vector.extract_strided_slice %2 {offsets = [25, 0], sizes = [384, 4], strides = [1, 1]} : vector<440x4xf32> to vector<384x4xf32>
    %29 = arith.truncf %28 : vector<384x4xf32> to vector<384x4xbf16>
    %c4 = arith.constant 4 : index
    %c0_15 = arith.constant 0 : index
    %c0_16 = arith.constant 0 : index
    %30 = vector.load %arg2[%c4, %c0_15, %c0_16] : memref<9x4x128xbf16, #tpu.memory_space<vmem>>, vector<1x4x128xbf16>
    %31 = vector.shape_cast %30 : vector<1x4x128xbf16> to vector<4x128xbf16>
    %cst_17 = arith.constant dense<0.000000e+00> : vector<384x128xf32>
    %32 = tpu.matmul %29, %31, %cst_17 {dimension_numbers = #tpu.dot_dimension_numbers<[1], [0], [0], [1], [0, 0, 1, 1], [], []>} : vector<384x4xbf16>, vector<4x128xbf16>, vector<384x128xf32> -> vector<384x128xf32>
    %33 = arith.addf %27, %32 : vector<384x128xf32>
    %34 = vector.extract_strided_slice %2 {offsets = [26, 0], sizes = [384, 4], strides = [1, 1]} : vector<440x4xf32> to vector<384x4xf32>
    %35 = arith.truncf %34 : vector<384x4xf32> to vector<384x4xbf16>
    %c5 = arith.constant 5 : index
    %c0_18 = arith.constant 0 : index
    %c0_19 = arith.constant 0 : index
    %36 = vector.load %arg2[%c5, %c0_18, %c0_19] : memref<9x4x128xbf16, #tpu.memory_space<vmem>>, vector<1x4x128xbf16>
    %37 = vector.shape_cast %36 : vector<1x4x128xbf16> to vector<4x128xbf16>
    %cst_20 = arith.constant dense<0.000000e+00> : vector<384x128xf32>
    %38 = tpu.matmul %35, %37, %cst_20 {dimension_numbers = #tpu.dot_dimension_numbers<[1], [0], [0], [1], [0, 0, 1, 1], [], []>} : vector<384x4xbf16>, vector<4x128xbf16>, vector<384x128xf32> -> vector<384x128xf32>
    %39 = arith.addf %33, %38 : vector<384x128xf32>
    %40 = vector.extract_strided_slice %2 {offsets = [48, 0], sizes = [384, 4], strides = [1, 1]} : vector<440x4xf32> to vector<384x4xf32>
    %41 = arith.truncf %40 : vector<384x4xf32> to vector<384x4xbf16>
    %c6 = arith.constant 6 : index
    %c0_21 = arith.constant 0 : index
    %c0_22 = arith.constant 0 : index
    %42 = vector.load %arg2[%c6, %c0_21, %c0_22] : memref<9x4x128xbf16, #tpu.memory_space<vmem>>, vector<1x4x128xbf16>
    %43 = vector.shape_cast %42 : vector<1x4x128xbf16> to vector<4x128xbf16>
    %cst_23 = arith.constant dense<0.000000e+00> : vector<384x128xf32>
    %44 = tpu.matmul %41, %43, %cst_23 {dimension_numbers = #tpu.dot_dimension_numbers<[1], [0], [0], [1], [0, 0, 1, 1], [], []>} : vector<384x4xbf16>, vector<4x128xbf16>, vector<384x128xf32> -> vector<384x128xf32>
    %45 = arith.addf %39, %44 : vector<384x128xf32>
    %46 = vector.extract_strided_slice %2 {offsets = [49, 0], sizes = [384, 4], strides = [1, 1]} : vector<440x4xf32> to vector<384x4xf32>
    %47 = arith.truncf %46 : vector<384x4xf32> to vector<384x4xbf16>
    %c7 = arith.constant 7 : index
    %c0_24 = arith.constant 0 : index
    %c0_25 = arith.constant 0 : index
    %48 = vector.load %arg2[%c7, %c0_24, %c0_25] : memref<9x4x128xbf16, #tpu.memory_space<vmem>>, vector<1x4x128xbf16>
    %49 = vector.shape_cast %48 : vector<1x4x128xbf16> to vector<4x128xbf16>
    %cst_26 = arith.constant dense<0.000000e+00> : vector<384x128xf32>
    %50 = tpu.matmul %47, %49, %cst_26 {dimension_numbers = #tpu.dot_dimension_numbers<[1], [0], [0], [1], [0, 0, 1, 1], [], []>} : vector<384x4xbf16>, vector<4x128xbf16>, vector<384x128xf32> -> vector<384x128xf32>
    %51 = arith.addf %45, %50 : vector<384x128xf32>
    %52 = vector.extract_strided_slice %2 {offsets = [50, 0], sizes = [384, 4], strides = [1, 1]} : vector<440x4xf32> to vector<384x4xf32>
    %53 = arith.truncf %52 : vector<384x4xf32> to vector<384x4xbf16>
    %c8 = arith.constant 8 : index
    %c0_27 = arith.constant 0 : index
    %c0_28 = arith.constant 0 : index
    %54 = vector.load %arg2[%c8, %c0_27, %c0_28] : memref<9x4x128xbf16, #tpu.memory_space<vmem>>, vector<1x4x128xbf16>
    %55 = vector.shape_cast %54 : vector<1x4x128xbf16> to vector<4x128xbf16>
    %cst_29 = arith.constant dense<0.000000e+00> : vector<384x128xf32>
    %56 = tpu.matmul %53, %55, %cst_29 {dimension_numbers = #tpu.dot_dimension_numbers<[1], [0], [0], [1], [0, 0, 1, 1], [], []>} : vector<384x4xbf16>, vector<4x128xbf16>, vector<384x128xf32> -> vector<384x128xf32>
    %57 = arith.addf %51, %56 : vector<384x128xf32>
    %58 = vector.extract_strided_slice %57 {offsets = [0, 0], sizes = [16, 128], strides = [1, 1]} : vector<384x128xf32> to vector<16x128xf32>
    %59 = vector.shape_cast %58 : vector<16x128xf32> to vector<1x16x128xf32>
    %60 = vector.extract_strided_slice %57 {offsets = [24, 0], sizes = [16, 128], strides = [1, 1]} : vector<384x128xf32> to vector<16x128xf32>
    %61 = vector.shape_cast %60 : vector<16x128xf32> to vector<1x16x128xf32>
    %62 = vector.extract_strided_slice %57 {offsets = [48, 0], sizes = [16, 128], strides = [1, 1]} : vector<384x128xf32> to vector<16x128xf32>
    %63 = vector.shape_cast %62 : vector<16x128xf32> to vector<1x16x128xf32>
    %64 = vector.extract_strided_slice %57 {offsets = [72, 0], sizes = [16, 128], strides = [1, 1]} : vector<384x128xf32> to vector<16x128xf32>
    %65 = vector.shape_cast %64 : vector<16x128xf32> to vector<1x16x128xf32>
    %66 = vector.extract_strided_slice %57 {offsets = [96, 0], sizes = [16, 128], strides = [1, 1]} : vector<384x128xf32> to vector<16x128xf32>
    %67 = vector.shape_cast %66 : vector<16x128xf32> to vector<1x16x128xf32>
    %68 = vector.extract_strided_slice %57 {offsets = [120, 0], sizes = [16, 128], strides = [1, 1]} : vector<384x128xf32> to vector<16x128xf32>
    %69 = vector.shape_cast %68 : vector<16x128xf32> to vector<1x16x128xf32>
    %70 = vector.extract_strided_slice %57 {offsets = [144, 0], sizes = [16, 128], strides = [1, 1]} : vector<384x128xf32> to vector<16x128xf32>
    %71 = vector.shape_cast %70 : vector<16x128xf32> to vector<1x16x128xf32>
    %72 = vector.extract_strided_slice %57 {offsets = [168, 0], sizes = [16, 128], strides = [1, 1]} : vector<384x128xf32> to vector<16x128xf32>
    %73 = vector.shape_cast %72 : vector<16x128xf32> to vector<1x16x128xf32>
    %74 = vector.extract_strided_slice %57 {offsets = [192, 0], sizes = [16, 128], strides = [1, 1]} : vector<384x128xf32> to vector<16x128xf32>
    %75 = vector.shape_cast %74 : vector<16x128xf32> to vector<1x16x128xf32>
    %76 = vector.extract_strided_slice %57 {offsets = [216, 0], sizes = [16, 128], strides = [1, 1]} : vector<384x128xf32> to vector<16x128xf32>
    %77 = vector.shape_cast %76 : vector<16x128xf32> to vector<1x16x128xf32>
    %78 = vector.extract_strided_slice %57 {offsets = [240, 0], sizes = [16, 128], strides = [1, 1]} : vector<384x128xf32> to vector<16x128xf32>
    %79 = vector.shape_cast %78 : vector<16x128xf32> to vector<1x16x128xf32>
    %80 = vector.extract_strided_slice %57 {offsets = [264, 0], sizes = [16, 128], strides = [1, 1]} : vector<384x128xf32> to vector<16x128xf32>
    %81 = vector.shape_cast %80 : vector<16x128xf32> to vector<1x16x128xf32>
    %82 = vector.extract_strided_slice %57 {offsets = [288, 0], sizes = [16, 128], strides = [1, 1]} : vector<384x128xf32> to vector<16x128xf32>
    %83 = vector.shape_cast %82 : vector<16x128xf32> to vector<1x16x128xf32>
    %84 = vector.extract_strided_slice %57 {offsets = [312, 0], sizes = [16, 128], strides = [1, 1]} : vector<384x128xf32> to vector<16x128xf32>
    %85 = vector.shape_cast %84 : vector<16x128xf32> to vector<1x16x128xf32>
    %86 = vector.extract_strided_slice %57 {offsets = [336, 0], sizes = [16, 128], strides = [1, 1]} : vector<384x128xf32> to vector<16x128xf32>
    %87 = vector.shape_cast %86 : vector<16x128xf32> to vector<1x16x128xf32>
    %88 = vector.extract_strided_slice %57 {offsets = [360, 0], sizes = [16, 128], strides = [1, 1]} : vector<384x128xf32> to vector<16x128xf32>
    %89 = vector.shape_cast %88 : vector<16x128xf32> to vector<1x16x128xf32>
    %90 = tpu.concatenate %59, %61, %63, %65, %67, %69, %71, %73, %75, %77, %79, %81, %83, %85, %87, %89 in 0 : vector<1x16x128xf32>, vector<1x16x128xf32>, vector<1x16x128xf32>, vector<1x16x128xf32>, vector<1x16x128xf32>, vector<1x16x128xf32>, vector<1x16x128xf32>, vector<1x16x128xf32>, vector<1x16x128xf32>, vector<1x16x128xf32>, vector<1x16x128xf32>, vector<1x16x128xf32>, vector<1x16x128xf32>, vector<1x16x128xf32>, vector<1x16x128xf32>, vector<1x16x128xf32> -> vector<16x16x128xf32>
    %c0_30 = arith.constant 0 : index
    %c0_31 = arith.constant 0 : index
    %c0_32 = arith.constant 0 : index
    %c0_33 = arith.constant 0 : index
    %91 = vector.load %arg3[%c0_30, %c0_31, %c0_32, %c0_33] : memref<1x16x16x128xf32, #tpu.memory_space<vmem>>, vector<1x16x16x128xf32>
    %92 = vector.shape_cast %91 : vector<1x16x16x128xf32> to vector<16x16x128xf32>
    %93 = vector.shape_cast %90 : vector<16x16x128xf32> to vector<1x16x16x128xf32>
    tpu.vector_store %arg3[%c0_30, %c0_31, %c0_32, %c0_33], %93 {strides = array<i32>} : memref<1x16x16x128xf32, #tpu.memory_space<vmem>>, vector<1x16x16x128xf32>,
    %cst_34 = arith.constant dense<0.000000e+00> : vector<16x128xf32>
    %94 = vector.multi_reduction <add>, %90, %cst_34 [0] : vector<16x16x128xf32> to vector<16x128xf32>
    %95 = vector.shape_cast %94 : vector<16x128xf32> to vector<1x16x128xf32>
    %cst_35 = arith.constant dense<0.000000e+00> : vector<1x128xf32>
    %96 = vector.multi_reduction <add>, %95, %cst_35 [1] : vector<1x16x128xf32> to vector<1x128xf32>
    %97 = vector.shape_cast %96 : vector<1x128xf32> to vector<1x1x128xf32>
    %c0_36 = arith.constant 0 : index
    %c0_37 = arith.constant 0 : index
    %c0_38 = arith.constant 0 : index
    %98 = vector.load %arg4[%c0_36, %c0_37, %c0_38] : memref<1x1x128xf32, #tpu.memory_space<vmem>>, vector<1x1x128xf32>
    tpu.vector_store %arg4[%c0_36, %c0_37, %c0_38], %97 {strides = array<i32>} : memref<1x1x128xf32, #tpu.memory_space<vmem>>, vector<1x1x128xf32>,
    %99 = arith.mulf %90, %90 : vector<16x16x128xf32>
    %cst_39 = arith.constant dense<0.000000e+00> : vector<16x128xf32>
    %100 = vector.multi_reduction <add>, %99, %cst_39 [0] : vector<16x16x128xf32> to vector<16x128xf32>
    %101 = vector.shape_cast %100 : vector<16x128xf32> to vector<1x16x128xf32>
    %cst_40 = arith.constant dense<0.000000e+00> : vector<1x128xf32>
    %102 = vector.multi_reduction <add>, %101, %cst_40 [1] : vector<1x16x128xf32> to vector<1x128xf32>
    %103 = vector.shape_cast %102 : vector<1x128xf32> to vector<1x1x128xf32>
    %c0_41 = arith.constant 0 : index
    %c0_42 = arith.constant 0 : index
    %c0_43 = arith.constant 0 : index
    %104 = vector.load %arg5[%c0_41, %c0_42, %c0_43] : memref<1x1x128xf32, #tpu.memory_space<vmem>>, vector<1x1x128xf32>
    tpu.vector_store %arg5[%c0_41, %c0_42, %c0_43], %103 {strides = array<i32>} : memref<1x1x128xf32, #tpu.memory_space<vmem>>, vector<1x1x128xf32>,
    return
  }
  func.func @transform_0(%arg0: i32) -> (i32, i32, i32) {
    %c0_i32 = arith.constant 0 : i32
    %c0_i32_0 = arith.constant 0 : i32
    %c0_i32_1 = arith.constant 0 : i32
    return %arg0, %c0_i32, %c0_i32_0 : i32, i32, i32
  }
  func.func @transform_1(%arg0: i32) -> (i32, i32, i32) {
    %c0_i32 = arith.constant 0 : i32
    %c0_i32_0 = arith.constant 0 : i32
    %c0_i32_1 = arith.constant 0 : i32
    %c0_i32_2 = arith.constant 0 : i32
    return %c0_i32, %c0_i32_0, %c0_i32_1 : i32, i32, i32
  }
  func.func @transform_2(%arg0: i32) -> (i32, i32, i32, i32) {
    %c0_i32 = arith.constant 0 : i32
    %c0_i32_0 = arith.constant 0 : i32
    %c0_i32_1 = arith.constant 0 : i32
    %c0_i32_2 = arith.constant 0 : i32
    return %arg0, %c0_i32, %c0_i32_0, %c0_i32_1 : i32, i32, i32, i32
  }
  func.func @transform_3(%arg0: i32) -> (i32, i32, i32) {
    %c0_i32 = arith.constant 0 : i32
    %c0_i32_0 = arith.constant 0 : i32
    %c0_i32_1 = arith.constant 0 : i32
    return %arg0, %c0_i32, %c0_i32_0 : i32, i32, i32
  }
  func.func @transform_4(%arg0: i32) -> (i32, i32, i32) {
    %c0_i32 = arith.constant 0 : i32
    %c0_i32_0 = arith.constant 0 : i32
    %c0_i32_1 = arith.constant 0 : i32
    return %arg0, %c0_i32, %c0_i32_0 : i32, i32, i32
  }
}

</mosaic_0001>

<llo_original>
// kernel: tpu_custom_call.1
$region0: #{tpu_custom_call.1}
  #allocation0 [shape = 'u32[]', space=smem, size = 0x4, offset = 0x4, fixed_abs, tag = 'smem constant byte address 0x4 - core index']
  #allocation1 [shape = 'u32[144,128]{1,0:T(1,128)}', space=vmem, size = 0x12000, scoped, tag = 'internal scratch']
  %s0 = inlined_call_operand.vmem [shape: bf16[2,440,4], index: 0, kind: input, shape index: {}]
  %s1 = inlined_call_operand.vmem [shape: bf16[9,4,128], index: 1, kind: input, shape index: {}]
  %s2 = inlined_call_operand.hbm [shape: f32[2,16,16,128], index: 2, kind: output, shape index: {0}]
  %s3 = inlined_call_operand.hbm [shape: f32[2,1,128], index: 3, kind: output, shape index: {1}]
  %s4 = inlined_call_operand.hbm [shape: f32[2,1,128], index: 4, kind: output, shape index: {2}]
  %5 = xla_tuple %s2, %s3, %s4
  %s6 = sld [smem:[#allocation0]]
  $region57: #{tpu_custom_call.1} parent=0
    _
  %s8 = ssub.s32 1, %s6
  %s9 = scalar_select 0, %s8, %s6
  $region1: #{tpu_custom_call.1} parent=0
    #allocation2 [shape = 'u8[262144]{0}', space=vmem, size = 0x40000, scoped, tag = 'output window, operand 0']
    #allocation3 [shape = 's32[2]{0}', space=sflag, size = 0x8, scoped, tag = 'scoped memory for tpu_custom_call.1']
    #allocation4 [shape = 'u8[1024]{0}', space=vmem, size = 0x400, scoped, tag = 'output window, operand 1']
    #allocation5 [shape = 's32[2]{0}', space=sflag, size = 0x8, scoped, tag = 'scoped memory for tpu_custom_call.1']
    #allocation6 [shape = 'u8[1024]{0}', space=vmem, size = 0x400, scoped, tag = 'output window, operand 2']
    %10 = vsyncpa [#allocation3], 0
    %s11 = scalar_lea.sflag [#allocation3], 1
    %12 = vsyncpa %s11, 0
    %13 = vsyncpa [#allocation5], 0
    %s14 = scalar_lea.sflag [#allocation5], 1
    %15 = vsyncpa %s14, 0
    loop: start=0, step=1, limit=4
    $region2: #{tpu_custom_call.1} parent=1 // loop_pre_header
      _
    $region3: #{tpu_custom_call.1} parent=1 // loop_header
      %s17 = sphi 0, %s21
      %p18 = scmp.ge.s32.totalorder %s17, 4
      %s27 = sphi 0, %s29
      %s30 = sphi 0, %s27
      %s31 = sphi 0, %s30
      %s47 = sphi 0, %s31
      %s51 = sphi 0, %s51
      %s53 = sphi 0, %s51
      %s54 = sphi 0, %s53
      %s68 = sphi 0, %s54
      %s74 = sphi 0, %s76
      %s77 = sphi 0, %s74
      %s78 = sphi 0, %s77
      %s94 = sphi 0, %s78
      %s100 = sphi 0, %s102
      %s103 = sphi 0, %s100
      %s104 = sphi 0, %s103
      %s120 = sphi 0, %s104
      %s126 = sphi 0, %s128
      %s129 = sphi 0, %s126
      %s130 = sphi 0, %s129
      %s146 = sphi 0, %s130
    $region4: #{tpu_custom_call.1} parent=1 // loop_header_branch
      %20 = sbr.rel (%p18) target = $region8
    $region5: #{tpu_custom_call.1} parent=1 // loop_body
      %s22 = ssub.s32 %s17, 1
      %s23 = ssub.s32 %s17, 2
      %s24 = sadd.s32 %s17, 1
      %s25 = ssub.s32 %s17, %s24
      %p26 = scmp.eq.s32.totalorder %s25, 0
      %s28 = sadd.s32 %s27, 1
      %s29 = scalar_select %p26, %s27, %s28
      %p32 = pneg %p26
      %p33 = scmp.eq.s32.totalorder %s17, 1
      %p34 = por %p32, %p33
      %p35 = scmp.ne.s32.totalorder %s27, %s30
      %p36 = scmp.eq.s32.totalorder %s17, 0
      %p37 = por %p35, %p36
      %p38 = scmp.ne.s32.totalorder %s27, %s30
      %p39 = scmp.eq.s32.totalorder %s22, 1
      %p40 = por %p38, %p39
      %p41 = scmp.ne.s32.totalorder %s30, %s31
      %p42 = scmp.eq.s32.totalorder %s22, 0
      %p43 = por %p41, %p42
      %p44 = scmp.ne.s32.totalorder %s30, %s31
      %p45 = scmp.eq.s32.totalorder %s23, 1
      %p46 = por %p44, %p45
      %p48 = scmp.ne.s32.totalorder %s31, %s47
      %p49 = scmp.eq.s32.totalorder %s23, 0
      %p50 = por %p48, %p49
      %s52 = sadd.s32 %s51, 1
      %p55 = scmp.eq.s32.totalorder %s17, 1
      %p56 = scmp.ne.s32.totalorder %s51, %s53
      %p57 = scmp.eq.s32.totalorder %s17, 0
      %p58 = por %p56, %p57
      %p59 = scmp.ne.s32.totalorder %s51, %s53
      %p60 = scmp.eq.s32.totalorder %s22, 1
      %p61 = por %p59, %p60
      %p62 = scmp.ne.s32.totalorder %s53, %s54
      %p63 = scmp.eq.s32.totalorder %s22, 0
      %p64 = por %p62, %p63
      %p65 = scmp.ne.s32.totalorder %s53, %s54
      %p66 = scmp.eq.s32.totalorder %s23, 1
      %p67 = por %p65, %p66
      %p69 = scmp.ne.s32.totalorder %s54, %s68
      %p70 = scmp.eq.s32.totalorder %s23, 0
      %p71 = por %p69, %p70
      %s72 = ssub.s32 %s17, %s24
      %p73 = scmp.eq.s32.totalorder %s72, 0
      %s75 = sadd.s32 %s74, 1
      %s76 = scalar_select %p73, %s74, %s75
      %p79 = pneg %p73
      %p80 = scmp.eq.s32.totalorder %s17, 1
      %p81 = por %p79, %p80
      %p82 = scmp.ne.s32.totalorder %s74, %s77
      %p83 = scmp.eq.s32.totalorder %s17, 0
      %p84 = por %p82, %p83
      %p85 = scmp.ne.s32.totalorder %s74, %s77
      %p86 = scmp.eq.s32.totalorder %s22, 1
      %p87 = por %p85, %p86
      %p88 = scmp.ne.s32.totalorder %s77, %s78
      %p89 = scmp.eq.s32.totalorder %s22, 0
      %p90 = por %p88, %p89
      %p91 = scmp.ne.s32.totalorder %s77, %s78
      %p92 = scmp.eq.s32.totalorder %s23, 1
      %p93 = por %p91, %p92
      %p95 = scmp.ne.s32.totalorder %s78, %s94
      %p96 = scmp.eq.s32.totalorder %s23, 0
      %p97 = por %p95, %p96
      %s98 = ssub.s32 %s17, %s24
      %p99 = scmp.eq.s32.totalorder %s98, 0
      %s101 = sadd.s32 %s100, 1
      %s102 = scalar_select %p99, %s100, %s101
      %p105 = pneg %p99
      %p106 = scmp.eq.s32.totalorder %s17, 1
      %p107 = por %p105, %p106
      %p108 = scmp.ne.s32.totalorder %s100, %s103
      %p109 = scmp.eq.s32.totalorder %s17, 0
      %p110 = por %p108, %p109
      %p111 = scmp.ne.s32.totalorder %s100, %s103
      %p112 = scmp.eq.s32.totalorder %s22, 1
      %p113 = por %p111, %p112
      %p114 = scmp.ne.s32.totalorder %s103, %s104
      %p115 = scmp.eq.s32.totalorder %s22, 0
      %p116 = por %p114, %p115
      %p117 = scmp.ne.s32.totalorder %s103, %s104
      %p118 = scmp.eq.s32.totalorder %s23, 1
      %p119 = por %p117, %p118
      %p121 = scmp.ne.s32.totalorder %s104, %s120
      %p122 = scmp.eq.s32.totalorder %s23, 0
      %p123 = por %p121, %p122
      %s124 = ssub.s32 %s17, %s24
      %p125 = scmp.eq.s32.totalorder %s124, 0
      %s127 = sadd.s32 %s126, 1
      %s128 = scalar_select %p125, %s126, %s127
      %p131 = pneg %p125
      %p132 = scmp.eq.s32.totalorder %s17, 1
      %p133 = por %p131, %p132
      %p134 = scmp.ne.s32.totalorder %s126, %s129
      %p135 = scmp.eq.s32.totalorder %s17, 0
      %p136 = por %p134, %p135
      %p137 = scmp.ne.s32.totalorder %s126, %s129
      %p138 = scmp.eq.s32.totalorder %s22, 1
      %p139 = por %p137, %p138
      %p140 = scmp.ne.s32.totalorder %s129, %s130
      %p141 = scmp.eq.s32.totalorder %s22, 0
      %p142 = por %p140, %p141
      %p143 = scmp.ne.s32.totalorder %s129, %s130
      %p144 = scmp.eq.s32.totalorder %s23, 1
      %p145 = por %p143, %p144
      %p147 = scmp.ne.s32.totalorder %s130, %s146
      %p148 = scmp.eq.s32.totalorder %s23, 0
      %p149 = por %p147, %p148
      %p150 = scmp.le.s32.totalorder 1, %s17
      %p151 = scmp.lt.s32.totalorder %s17, 3
      %p152 = pnand %p150, %p151
      %p153 = pneg %p152
      // Predicated region
      $region9: #{tpu_custom_call.1} parent=5 // pred_check
        _
      $region10: #{tpu_custom_call.1} parent=5 // pred_check_branch
        %155 = sbr.rel (%p152) target = $region12
      $region11: #{tpu_custom_call.1} parent=5 // pred_region
        %s156 = ssub.s32 %s17, 1
        // Predicated region
        $region13: #{tpu_custom_call.1} parent=11 // pred_check
          %p157 = pneg %p64
        $region14: #{tpu_custom_call.1} parent=11 // pred_check_branch
          %159 = sbr.rel (%p157) target = $region16
        $region15: #{tpu_custom_call.1} parent=11 // pred_region
          _
        $region16: #{tpu_custom_call.1} parent=11 // pred_fallthru
          _
      $region12: #{tpu_custom_call.1} parent=5 // pred_fallthru
        _
      %p160 = scmp.lt.s32.totalorder %s17, 2
      // Predicated region
      $region17: #{tpu_custom_call.1} parent=5 // pred_check
        %p161 = pneg %p160
      $region18: #{tpu_custom_call.1} parent=5 // pred_check_branch
        %163 = sbr.rel (%p161) target = $region20
      $region19: #{tpu_custom_call.1} parent=5 // pred_region
        // Predicated region
        $region21: #{tpu_custom_call.1} parent=19 // pred_check
          %p164 = pneg %p37
        $region22: #{tpu_custom_call.1} parent=19 // pred_check_branch
          %166 = sbr.rel (%p164) target = $region24
        $region23: #{tpu_custom_call.1} parent=19 // pred_region
          %p167 = scmp.lt.s32.totalorder %s17, 1
          %s168 = scalar_select %p167, %s17, 1
          %s169 = smul.addr %s168, 55
          %s170 = smul.addr %s169, 4
          %s171 = scalar_lea.vmem %s0, %s170
        $region24: #{tpu_custom_call.1} parent=19 // pred_fallthru
          _
      $region20: #{tpu_custom_call.1} parent=5 // pred_fallthru
        _
      %p172 = scmp.le.s32.totalorder 1, %s17
      %p173 = scmp.lt.s32.totalorder %s17, 3
      %p174 = pnand %p172, %p173
      %p175 = pneg %p174
      // Predicated region
      $region25: #{tpu_custom_call.1} parent=5 // pred_check
        _
      $region26: #{tpu_custom_call.1} parent=5 // pred_check_branch
        %177 = sbr.rel (%p174) target = $region28
      $region27: #{tpu_custom_call.1} parent=5 // pred_region
        %s178 = ssub.s32 %s17, 1
        %p179 = scmp.lt.s32.totalorder %s22, 1
        %s180 = scalar_select %p179, %s22, 1
        %s181 = smul.addr %s180, 55
        %s182 = smul.addr %s181, 4
        %s183 = scalar_lea.vmem %s0, %s182
        %p184 = pneg %p43
        %p185 = pneg %p40
        %p186 = pneg %p64
        %p187 = pneg %p61
        %p188 = pneg %p90
        %p189 = pneg %p87
        %s190 = sand.u32 %s77, 1
        %s191 = scalar_lea.sflag [#allocation3], %s190
        %s192 = sand.u32 %s77, 1
        %s193 = smul.addr %s192, 256
        %s194 = scalar_lea.vmem [#allocation2], %s193
        %p195 = pneg %p116
        %p196 = pneg %p113
        %s197 = sand.u32 %s22, 1
        %s198 = scalar_lea.sflag [#allocation5], %s197
        %s199 = sand.u32 %s103, 1
        %s200 = scalar_lea.vmem [#allocation4], %s199
        %p201 = pneg %p142
        %p202 = pneg %p139
        %s203 = sand.u32 %s22, 1
        %s204 = scalar_lea.sflag [#allocation5], %s203
        %s205 = sand.u32 %s129, 1
        %s206 = scalar_lea.vmem [#allocation6], %s205
        %p207 = scmp.lt.s32.totalorder %s22, 1
        %s208 = scalar_select %p207, %s22, 1
        %s209 = smul.addr %s208, 55
        %s210 = smul.addr %s209, 4
        %s211 = scalar_lea.vmem %s0, %s210
        %v213 = vld [vmem:[%s211] sm:$0xf]
        %v214 = vld [vmem:[%s211 + $0x4] sm:$0xf]
        %v215 = vld [vmem:[%s211 + $0x8] sm:$0xf]
        %v216 = vld [vmem:[%s211 + $0xc] sm:$0xf]
        %v217 = vld [vmem:[%s211 + $0x10] sm:$0xf]
        %v218 = vld [vmem:[%s211 + $0x14] sm:$0xf]
        %v219 = vld [vmem:[%s211 + $0x18] sm:$0xf]
        %v220 = vld [vmem:[%s211 + $0x1c] sm:$0xf]
        %v221 = vld [vmem:[%s211 + $0x20] sm:$0xf]
        %v222 = vld [vmem:[%s211 + $0x24] sm:$0xf]
        %v223 = vld [vmem:[%s211 + $0x28] sm:$0xf]
        %v224 = vld [vmem:[%s211 + $0x2c] sm:$0xf]
        %v225 = vld [vmem:[%s211 + $0x30] sm:$0xf]
        %v226 = vld [vmem:[%s211 + $0x34] sm:$0xf]
        %v227 = vld [vmem:[%s211 + $0x38] sm:$0xf]
        %v228 = vld [vmem:[%s211 + $0x3c] sm:$0xf]
        %v229 = vld [vmem:[%s211 + $0x40] sm:$0xf]
        %v230 = vld [vmem:[%s211 + $0x44] sm:$0xf]
        %v231 = vld [vmem:[%s211 + $0x48] sm:$0xf]
        %v232 = vld [vmem:[%s211 + $0x4c] sm:$0xf]
        %v233 = vld [vmem:[%s211 + $0x50] sm:$0xf]
        %v234 = vld [vmem:[%s211 + $0x54] sm:$0xf]
        %v235 = vld [vmem:[%s211 + $0x58] sm:$0xf]
        %v236 = vld [vmem:[%s211 + $0x5c] sm:$0xf]
        %v237 = vld [vmem:[%s211 + $0x60] sm:$0xf]
        %v238 = vld [vmem:[%s211 + $0x64] sm:$0xf]
        %v239 = vld [vmem:[%s211 + $0x68] sm:$0xf]
        %v240 = vld [vmem:[%s211 + $0x6c] sm:$0xf]
        %v241 = vld [vmem:[%s211 + $0x70] sm:$0xf]
        %v242 = vld [vmem:[%s211 + $0x74] sm:$0xf]
        %v243 = vld [vmem:[%s211 + $0x78] sm:$0xf]
        %v244 = vld [vmem:[%s211 + $0x7c] sm:$0xf]
        %v245 = vld [vmem:[%s211 + $0x80] sm:$0xf]
        %v246 = vld [vmem:[%s211 + $0x84] sm:$0xf]
        %v247 = vld [vmem:[%s211 + $0x88] sm:$0xf]
        %v248 = vld [vmem:[%s211 + $0x8c] sm:$0xf]
        %v249 = vld [vmem:[%s211 + $0x90] sm:$0xf]
        %v250 = vld [vmem:[%s211 + $0x94] sm:$0xf]
        %v251 = vld [vmem:[%s211 + $0x98] sm:$0xf]
        %v252 = vld [vmem:[%s211 + $0x9c] sm:$0xf]
        %v253 = vld [vmem:[%s211 + $0xa0] sm:$0xf]
        %v254 = vld [vmem:[%s211 + $0xa4] sm:$0xf]
        %v255 = vld [vmem:[%s211 + $0xa8] sm:$0xf]
        %v256 = vld [vmem:[%s211 + $0xac] sm:$0xf]
        %v257 = vld [vmem:[%s211 + $0xb0] sm:$0xf]
        %v258 = vld [vmem:[%s211 + $0xb4] sm:$0xf]
        %v259 = vld [vmem:[%s211 + $0xb8] sm:$0xf]
        %v260 = vld [vmem:[%s211 + $0xbc] sm:$0xf]
        %v261 = vld [vmem:[%s211 + $0xc0] sm:$0xf]
        %v262 = vld [vmem:[%s211 + $0xc4] sm:$0xf]
        %v263 = vld [vmem:[%s211 + $0xc8] sm:$0xf]
        %v264 = vld [vmem:[%s211 + $0xcc] sm:$0xf]
        %v265 = vld [vmem:[%s211 + $0xd0] sm:$0xf]
        %v266 = vld [vmem:[%s211 + $0xd4] sm:$0xf]
        %v267 = vld [vmem:[%s211 + $0xd8] sm:$0xf]
        %v268 = vunpack.c.l.bf16 %v213
        %v269 = vunpack.c.l.bf16 %v214
        %v270 = vunpack.c.l.bf16 %v215
        %v271 = vunpack.c.l.bf16 %v216
        %v272 = vunpack.c.l.bf16 %v217
        %v273 = vunpack.c.l.bf16 %v218
        %v274 = vunpack.c.l.bf16 %v219
        %v275 = vunpack.c.l.bf16 %v220
        %v276 = vunpack.c.l.bf16 %v221
        %v277 = vunpack.c.l.bf16 %v222
        %v278 = vunpack.c.l.bf16 %v223
        %v279 = vunpack.c.l.bf16 %v224
        %v280 = vunpack.c.l.bf16 %v225
        %v281 = vunpack.c.l.bf16 %v226
        %v282 = vunpack.c.l.bf16 %v227
        %v283 = vunpack.c.l.bf16 %v228
        %v284 = vunpack.c.l.bf16 %v229
        %v285 = vunpack.c.l.bf16 %v230
        %v286 = vunpack.c.l.bf16 %v231
        %v287 = vunpack.c.l.bf16 %v232
        %v288 = vunpack.c.l.bf16 %v233
        %v289 = vunpack.c.l.bf16 %v234
        %v290 = vunpack.c.l.bf16 %v235
        %v291 = vunpack.c.l.bf16 %v236
        %v292 = vunpack.c.l.bf16 %v237
        %v293 = vunpack.c.l.bf16 %v238
        %v294 = vunpack.c.l.bf16 %v239
        %v295 = vunpack.c.l.bf16 %v240
        %v296 = vunpack.c.l.bf16 %v241
        %v297 = vunpack.c.l.bf16 %v242
        %v298 = vunpack.c.l.bf16 %v243
        %v299 = vunpack.c.l.bf16 %v244
        %v300 = vunpack.c.l.bf16 %v245
        %v301 = vunpack.c.l.bf16 %v246
        %v302 = vunpack.c.l.bf16 %v247
        %v303 = vunpack.c.l.bf16 %v248
        %v304 = vunpack.c.l.bf16 %v249
        %v305 = vunpack.c.l.bf16 %v250
        %v306 = vunpack.c.l.bf16 %v251
        %v307 = vunpack.c.l.bf16 %v252
        %v308 = vunpack.c.l.bf16 %v253
        %v309 = vunpack.c.l.bf16 %v254
        %v310 = vunpack.c.l.bf16 %v255
        %v311 = vunpack.c.l.bf16 %v256
        %v312 = vunpack.c.l.bf16 %v257
        %v313 = vunpack.c.l.bf16 %v258
        %v314 = vunpack.c.l.bf16 %v259
        %v315 = vunpack.c.l.bf16 %v260
        %v316 = vunpack.c.l.bf16 %v261
        %v317 = vunpack.c.l.bf16 %v262
        %v318 = vunpack.c.l.bf16 %v263
        %v319 = vunpack.c.l.bf16 %v264
        %v320 = vunpack.c.l.bf16 %v265
        %v321 = vunpack.c.l.bf16 %v266
        %v322 = vunpack.c.l.bf16 %v267
        %v323 = vpack.c.bf16 %v269, %v268
        %v324 = vpack.c.bf16 %v271, %v270
        %v325 = vpack.c.bf16 %v273, %v272
        %v326 = vpack.c.bf16 %v275, %v274
        %v327 = vpack.c.bf16 %v277, %v276
        %v328 = vpack.c.bf16 %v279, %v278
        %v329 = vpack.c.bf16 %v281, %v280
        %v330 = vpack.c.bf16 %v283, %v282
        %v331 = vpack.c.bf16 %v285, %v284
        %v332 = vpack.c.bf16 %v287, %v286
        %v333 = vpack.c.bf16 %v289, %v288
        %v334 = vpack.c.bf16 %v291, %v290
        %v335 = vpack.c.bf16 %v293, %v292
        %v336 = vpack.c.bf16 %v295, %v294
        %v337 = vpack.c.bf16 %v297, %v296
        %v338 = vpack.c.bf16 %v299, %v298
        %v339 = vpack.c.bf16 %v301, %v300
        %v340 = vpack.c.bf16 %v303, %v302
        %v341 = vpack.c.bf16 %v305, %v304
        %v342 = vpack.c.bf16 %v307, %v306
        %v343 = vpack.c.bf16 %v309, %v308
        %v344 = vpack.c.bf16 %v311, %v310
        %v345 = vpack.c.bf16 %v313, %v312
        %v346 = vpack.c.bf16 %v315, %v314
        %v347 = vld [vmem:[%s1] sm:$0x3]
        %v348 = vpack.c.bf16 %v316, %v316
        %s349 = scalar_lea.vmem %s1, 2
        %v350 = vld [vmem:[%s349] sm:$0x3]
        %vm351 = vsmask.f32 7424
        %v353 = vshrl.u32 %v323, 16
        %v355 = vshll.u32 %v323, 16
        %v357 = vrot.slane %v355, 1
        %v358 = vor.u32 %v353, %v357
        %v360 = vshll.u32 %v324, 16
        %v362 = vrot.slane %v360, 1
        %v363 = vsel %vm351, %v358, %v362
        %v364 = vshrl.u32 %v324, 16
        %v366 = vor.u32 %v364, %v362
        %v368 = vshll.u32 %v325, 16
        %v370 = vrot.slane %v368, 1
        %v371 = vsel %vm351, %v366, %v370
        %v372 = vshrl.u32 %v325, 16
        %v374 = vor.u32 %v372, %v370
        %v376 = vshll.u32 %v326, 16
        %v378 = vrot.slane %v376, 1
        %v379 = vsel %vm351, %v374, %v378
        %v380 = vshrl.u32 %v326, 16
        %v382 = vor.u32 %v380, %v378
        %v384 = vshll.u32 %v327, 16
        %v386 = vrot.slane %v384, 1
        %v387 = vsel %vm351, %v382, %v386
        %v388 = vshrl.u32 %v327, 16
        %v390 = vor.u32 %v388, %v386
        %v392 = vshll.u32 %v328, 16
        %v394 = vrot.slane %v392, 1
        %v395 = vsel %vm351, %v390, %v394
        %v396 = vshrl.u32 %v328, 16
        %v398 = vor.u32 %v396, %v394
        %v400 = vshll.u32 %v329, 16
        %v402 = vrot.slane %v400, 1
        %v403 = vsel %vm351, %v398, %v402
        %v404 = vshrl.u32 %v329, 16
        %v406 = vor.u32 %v404, %v402
        %v408 = vshll.u32 %v330, 16
        %v410 = vrot.slane %v408, 1
        %v411 = vsel %vm351, %v406, %v410
        %v412 = vshrl.u32 %v330, 16
        %v414 = vor.u32 %v412, %v410
        %v416 = vshll.u32 %v331, 16
        %v418 = vrot.slane %v416, 1
        %v419 = vsel %vm351, %v414, %v418
        %v420 = vshrl.u32 %v331, 16
        %v422 = vor.u32 %v420, %v418
        %v424 = vshll.u32 %v332, 16
        %v426 = vrot.slane %v424, 1
        %v427 = vsel %vm351, %v422, %v426
        %v428 = vshrl.u32 %v332, 16
        %v430 = vor.u32 %v428, %v426
        %v432 = vshll.u32 %v333, 16
        %v434 = vrot.slane %v432, 1
        %v435 = vsel %vm351, %v430, %v434
        %v436 = vshrl.u32 %v333, 16
        %v438 = vor.u32 %v436, %v434
        %v440 = vshll.u32 %v334, 16
        %v442 = vrot.slane %v440, 1
        %v443 = vsel %vm351, %v438, %v442
        %v444 = vshrl.u32 %v334, 16
        %v446 = vor.u32 %v444, %v442
        %v448 = vshll.u32 %v335, 16
        %v450 = vrot.slane %v448, 1
        %v451 = vsel %vm351, %v446, %v450
        %v452 = vshrl.u32 %v335, 16
        %v454 = vor.u32 %v452, %v450
        %v456 = vshll.u32 %v336, 16
        %v458 = vrot.slane %v456, 1
        %v459 = vsel %vm351, %v454, %v458
        %v460 = vshrl.u32 %v336, 16
        %v462 = vor.u32 %v460, %v458
        %v464 = vshll.u32 %v337, 16
        %v466 = vrot.slane %v464, 1
        %v467 = vsel %vm351, %v462, %v466
        %v468 = vshrl.u32 %v337, 16
        %v470 = vor.u32 %v468, %v466
        %v472 = vshll.u32 %v338, 16
        %v474 = vrot.slane %v472, 1
        %v475 = vsel %vm351, %v470, %v474
        %v476 = vshrl.u32 %v338, 16
        %v478 = vor.u32 %v476, %v474
        %v480 = vshll.u32 %v339, 16
        %v482 = vrot.slane %v480, 1
        %v483 = vsel %vm351, %v478, %v482
        %v484 = vshrl.u32 %v339, 16
        %v486 = vor.u32 %v484, %v482
        %v488 = vshll.u32 %v340, 16
        %v490 = vrot.slane %v488, 1
        %v491 = vsel %vm351, %v486, %v490
        %v492 = vshrl.u32 %v340, 16
        %v494 = vor.u32 %v492, %v490
        %v496 = vshll.u32 %v341, 16
        %v498 = vrot.slane %v496, 1
        %v499 = vsel %vm351, %v494, %v498
        %v500 = vshrl.u32 %v341, 16
        %v502 = vor.u32 %v500, %v498
        %v504 = vshll.u32 %v342, 16
        %v506 = vrot.slane %v504, 1
        %v507 = vsel %vm351, %v502, %v506
        %v508 = vshrl.u32 %v342, 16
        %v510 = vor.u32 %v508, %v506
        %v512 = vshll.u32 %v343, 16
        %v514 = vrot.slane %v512, 1
        %v515 = vsel %vm351, %v510, %v514
        %v516 = vshrl.u32 %v343, 16
        %v518 = vor.u32 %v516, %v514
        %v520 = vshll.u32 %v344, 16
        %v522 = vrot.slane %v520, 1
        %v523 = vsel %vm351, %v518, %v522
        %v524 = vshrl.u32 %v344, 16
        %v526 = vor.u32 %v524, %v522
        %v528 = vshll.u32 %v345, 16
        %v530 = vrot.slane %v528, 1
        %v531 = vsel %vm351, %v526, %v530
        %v532 = vshrl.u32 %v345, 16
        %v534 = vor.u32 %v532, %v530
        %v536 = vshll.u32 %v346, 16
        %v538 = vrot.slane %v536, 1
        %v539 = vsel %vm351, %v534, %v538
        %v540 = vshrl.u32 %v346, 16
        %v542 = vor.u32 %v540, %v538
        %v544 = vshll.u32 %v348, 16
        %v546 = vrot.slane %v544, 1
        %v547 = vsel %vm351, %v542, %v546
        %vm548 = vcmask 31744
        %v550 = vsel %vm548, %v363, 0
        %v553 = vsel %vm548, %v371, 0
        %v556 = vsel %vm548, %v379, 0
        %v559 = vsel %vm548, %v387, 0
        %v562 = vsel %vm548, %v395, 0
        %v565 = vsel %vm548, %v403, 0
        %v568 = vsel %vm548, %v411, 0
        %v571 = vsel %vm548, %v419, 0
        %v574 = vsel %vm548, %v427, 0
        %v577 = vsel %vm548, %v435, 0
        %v580 = vsel %vm548, %v443, 0
        %v583 = vsel %vm548, %v451, 0
        %v586 = vsel %vm548, %v459, 0
        %v589 = vsel %vm548, %v467, 0
        %v592 = vsel %vm548, %v475, 0
        %v595 = vsel %vm548, %v483, 0
        %v598 = vsel %vm548, %v491, 0
        %v601 = vsel %vm548, %v499, 0
        %v604 = vsel %vm548, %v507, 0
        %v607 = vsel %vm548, %v515, 0
        %v610 = vsel %vm548, %v523, 0
        %v613 = vsel %vm548, %v531, 0
        %v616 = vsel %vm548, %v539, 0
        %v619 = vsel %vm548, %v547, 0
        %vm621 = vcmask 1041408
        %v623 = vsel %vm621, %v350, 0
        %625 = vmatprep.subr.bf16.mxu0 0
        %626 = vmatpush1.bf16.msra.mxu0 0
        %627 = vmatprep.subr.bf16.mxu0 0
        %628 = vmatpush1.bf16.msra.mxu0 0
        %629 = vmatprep.subr.bf16.mxu0 0
        %630 = vmatpush1.bf16.msra.mxu0 0
        %631 = vmatprep.subr.bf16.mxu0 0
        %632 = vmatpush1.bf16.msra.mxu0 0
        %633 = vmatprep.subr.bf16.mxu0 0
        %634 = vmatpush1.bf16.msra.mxu0 0
        %635 = vmatprep.subr.bf16.mxu0 0
        %636 = vmatpush1.bf16.msra.mxu0 0
        %637 = vmatprep.subr.bf16.mxu0 0
        %638 = vmatpush1.bf16.msra.mxu0 0
        %639 = vmatprep.subr.bf16.mxu0 0
        %640 = vmatpush1.bf16.msra.mxu0 %v623
        %641 = vmatprep.subr.bf16.mxu0 0
        %642 = vmatpush2.bf16.msra.mxu0 0
        %643 = vmatprep.subr.bf16.mxu0 0
        %644 = vmatpush2.bf16.msra.mxu0 0
        %645 = vmatprep.subr.bf16.mxu0 0
        %646 = vmatpush2.bf16.msra.mxu0 0
        %647 = vmatprep.subr.bf16.mxu0 0
        %648 = vmatpush2.bf16.msra.mxu0 0
        %649 = vmatprep.subr.bf16.mxu0 0
        %650 = vmatpush2.bf16.msra.mxu0 0
        %651 = vmatprep.subr.bf16.mxu0 0
        %652 = vmatpush2.bf16.msra.mxu0 0
        %653 = vmatprep.subr.bf16.mxu0 0
        %654 = vmatpush2.bf16.msra.mxu0 0
        %655 = vmatprep.subr.bf16.mxu0 0
        %656 = vmatpush2.bf16.msra.mxu0 0
        %657 = vmatprep.mubr.bf16.mxu0 0
        %658 = vmatmul.mubr.bf16.gmra.mxu0 %v550
        %v659 = vpop.f32.mrf.mxu0
        %v660 = vadd.f32 0.0, %v659
        %v661 = vpop.f32.mrf.mxu0
        %v662 = vpop.f32.mrf.mxu0
        %v663 = vadd.f32 0.0, %v662
        %v664 = vpop.f32.mrf.mxu0
        %665 = vmatprep.mubr.bf16.mxu0 0
        %666 = vmatmul.mubr.bf16.gmra.mxu0 %v553
        %v667 = vpop.f32.mrf.mxu0
        %v668 = vpop.f32.mrf.mxu0
        %v669 = vpop.f32.mrf.mxu0
        %v670 = vadd.f32 0.0, %v669
        %v671 = vpop.f32.mrf.mxu0
        %672 = vmatprep.mubr.bf16.mxu0 0
        %673 = vmatmul.mubr.bf16.gmra.mxu0 %v556
        %v674 = vpop.f32.mrf.mxu0
        %v675 = vadd.f32 0.0, %v674
        %v676 = vpop.f32.mrf.mxu0
        %v677 = vpop.f32.mrf.mxu0
        %v678 = vpop.f32.mrf.mxu0
        %679 = vmatprep.mubr.bf16.mxu0 0
        %680 = vmatmul.mubr.bf16.gmra.mxu0 %v559
        %v681 = vpop.f32.mrf.mxu0
        %v682 = vadd.f32 0.0, %v681
        %v683 = vpop.f32.mrf.mxu0
        %v684 = vpop.f32.mrf.mxu0
        %v685 = vadd.f32 0.0, %v684
        %v686 = vpop.f32.mrf.mxu0
        %687 = vmatprep.mubr.bf16.mxu0 0
        %688 = vmatmul.mubr.bf16.gmra.mxu0 %v562
        %v689 = vpop.f32.mrf.mxu0
        %v690 = vpop.f32.mrf.mxu0
        %v691 = vpop.f32.mrf.mxu0
        %v692 = vadd.f32 0.0, %v691
        %v693 = vpop.f32.mrf.mxu0
        %694 = vmatprep.mubr.bf16.mxu0 0
        %695 = vmatmul.mubr.bf16.gmra.mxu0 %v565
        %v696 = vpop.f32.mrf.mxu0
        %v697 = vadd.f32 0.0, %v696
        %v698 = vpop.f32.mrf.mxu0
        %v699 = vpop.f32.mrf.mxu0
        %v700 = vpop.f32.mrf.mxu0
        %701 = vmatprep.mubr.bf16.mxu0 0
        %702 = vmatmul.mubr.bf16.gmra.mxu0 %v568
        %v703 = vpop.f32.mrf.mxu0
        %v704 = vadd.f32 0.0, %v703
        %v705 = vpop.f32.mrf.mxu0
        %v706 = vpop.f32.mrf.mxu0
        %v707 = vadd.f32 0.0, %v706
        %v708 = vpop.f32.mrf.mxu0
        %709 = vmatprep.mubr.bf16.mxu0 0
        %710 = vmatmul.mubr.bf16.gmra.mxu0 %v571
        %v711 = vpop.f32.mrf.mxu0
        %v712 = vpop.f32.mrf.mxu0
        %v713 = vpop.f32.mrf.mxu0
        %v714 = vadd.f32 0.0, %v713
        %v715 = vpop.f32.mrf.mxu0
        %716 = vmatprep.mubr.bf16.mxu0 0
        %717 = vmatmul.mubr.bf16.gmra.mxu0 %v574
        %v718 = vpop.f32.mrf.mxu0
        %v719 = vadd.f32 0.0, %v718
        %v720 = vpop.f32.mrf.mxu0
        %v721 = vpop.f32.mrf.mxu0
        %v722 = vpop.f32.mrf.mxu0
        %723 = vmatprep.mubr.bf16.mxu0 0
        %724 = vmatmul.mubr.bf16.gmra.mxu0 %v577
        %v725 = vpop.f32.mrf.mxu0
        %v726 = vadd.f32 0.0, %v725
        %v727 = vpop.f32.mrf.mxu0
        %v728 = vpop.f32.mrf.mxu0
        %v729 = vadd.f32 0.0, %v728
        %v730 = vpop.f32.mrf.mxu0
        %731 = vmatprep.mubr.bf16.mxu0 0
        %732 = vmatmul.mubr.bf16.gmra.mxu0 %v580
        %v733 = vpop.f32.mrf.mxu0
        %v734 = vpop.f32.mrf.mxu0
        %v735 = vpop.f32.mrf.mxu0
        %v736 = vadd.f32 0.0, %v735
        %v737 = vpop.f32.mrf.mxu0
        %738 = vmatprep.mubr.bf16.mxu0 0
        %739 = vmatmul.mubr.bf16.gmra.mxu0 %v583
        %v740 = vpop.f32.mrf.mxu0
        %v741 = vadd.f32 0.0, %v740
        %v742 = vpop.f32.mrf.mxu0
        %v743 = vpop.f32.mrf.mxu0
        %v744 = vpop.f32.mrf.mxu0
        %745 = vmatprep.mubr.bf16.mxu0 0
        %746 = vmatmul.mubr.bf16.gmra.mxu0 %v586
        %v747 = vpop.f32.mrf.mxu0
        %v748 = vadd.f32 0.0, %v747
        %v749 = vpop.f32.mrf.mxu0
        %v750 = vpop.f32.mrf.mxu0
        %v751 = vadd.f32 0.0, %v750
        %v752 = vpop.f32.mrf.mxu0
        %753 = vmatprep.mubr.bf16.mxu0 0
        %754 = vmatmul.mubr.bf16.gmra.mxu0 %v589
        %v755 = vpop.f32.mrf.mxu0
        %v756 = vpop.f32.mrf.mxu0
        %v757 = vpop.f32.mrf.mxu0
        %v758 = vadd.f32 0.0, %v757
        %v759 = vpop.f32.mrf.mxu0
        %760 = vmatprep.mubr.bf16.mxu0 0
        %761 = vmatmul.mubr.bf16.gmra.mxu0 %v592
        %v762 = vpop.f32.mrf.mxu0
        %v763 = vadd.f32 0.0, %v762
        %v764 = vpop.f32.mrf.mxu0
        %v765 = vpop.f32.mrf.mxu0
        %v766 = vpop.f32.mrf.mxu0
        %767 = vmatprep.mubr.bf16.mxu0 0
        %768 = vmatmul.mubr.bf16.gmra.mxu0 %v595
        %v769 = vpop.f32.mrf.mxu0
        %v770 = vadd.f32 0.0, %v769
        %v771 = vpop.f32.mrf.mxu0
        %v772 = vpop.f32.mrf.mxu0
        %v773 = vadd.f32 0.0, %v772
        %v774 = vpop.f32.mrf.mxu0
        %775 = vmatprep.mubr.bf16.mxu0 0
        %776 = vmatmul.mubr.bf16.gmra.mxu0 %v598
        %v777 = vpop.f32.mrf.mxu0
        %v778 = vpop.f32.mrf.mxu0
        %v779 = vpop.f32.mrf.mxu0
        %v780 = vadd.f32 0.0, %v779
        %v781 = vpop.f32.mrf.mxu0
        %782 = vmatprep.mubr.bf16.mxu0 0
        %783 = vmatmul.mubr.bf16.gmra.mxu0 %v601
        %v784 = vpop.f32.mrf.mxu0
        %v785 = vadd.f32 0.0, %v784
        %v786 = vpop.f32.mrf.mxu0
        %v787 = vpop.f32.mrf.mxu0
        %v788 = vpop.f32.mrf.mxu0
        %789 = vmatprep.mubr.bf16.mxu0 0
        %790 = vmatmul.mubr.bf16.gmra.mxu0 %v604
        %v791 = vpop.f32.mrf.mxu0
        %v792 = vadd.f32 0.0, %v791
        %v793 = vpop.f32.mrf.mxu0
        %v794 = vpop.f32.mrf.mxu0
        %v795 = vadd.f32 0.0, %v794
        %v796 = vpop.f32.mrf.mxu0
        %797 = vmatprep.mubr.bf16.mxu0 0
        %798 = vmatmul.mubr.bf16.gmra.mxu0 %v607
        %v799 = vpop.f32.mrf.mxu0
        %v800 = vpop.f32.mrf.mxu0
        %v801 = vpop.f32.mrf.mxu0
        %v802 = vadd.f32 0.0, %v801
        %v803 = vpop.f32.mrf.mxu0
        %804 = vmatprep.mubr.bf16.mxu0 0
        %805 = vmatmul.mubr.bf16.gmra.mxu0 %v610
        %v806 = vpop.f32.mrf.mxu0
        %v807 = vadd.f32 0.0, %v806
        %v808 = vpop.f32.mrf.mxu0
        %v809 = vpop.f32.mrf.mxu0
        %v810 = vpop.f32.mrf.mxu0
        %811 = vmatprep.mubr.bf16.mxu0 0
        %812 = vmatmul.mubr.bf16.gmra.mxu0 %v613
        %v813 = vpop.f32.mrf.mxu0
        %v814 = vadd.f32 0.0, %v813
        %v815 = vpop.f32.mrf.mxu0
        %v816 = vpop.f32.mrf.mxu0
        %v817 = vadd.f32 0.0, %v816
        %v818 = vpop.f32.mrf.mxu0
        %819 = vmatprep.mubr.bf16.mxu0 0
        %820 = vmatmul.mubr.bf16.gmra.mxu0 %v616
        %v821 = vpop.f32.mrf.mxu0
        %v822 = vpop.f32.mrf.mxu0
        %v823 = vpop.f32.mrf.mxu0
        %v824 = vadd.f32 0.0, %v823
        %v825 = vpop.f32.mrf.mxu0
        %826 = vmatprep.mubr.bf16.mxu0 0
        %827 = vmatmul.mubr.bf16.gmra.mxu0 %v619
        %v828 = vpop.f32.mrf.mxu0
        %v829 = vadd.f32 0.0, %v828
        %v830 = vpop.f32.mrf.mxu0
        %v831 = vpop.f32.mrf.mxu0
        %v832 = vpop.f32.mrf.mxu0
        %833 = vdwg.mxu0
        %v834 = vsel %vm548, %v323, 0
        %v836 = vsel %vm548, %v324, 0
        %v838 = vsel %vm548, %v325, 0
        %v840 = vsel %vm548, %v326, 0
        %v842 = vsel %vm548, %v327, 0
        %v844 = vsel %vm548, %v328, 0
        %v846 = vsel %vm548, %v329, 0
        %v848 = vsel %vm548, %v330, 0
        %v850 = vsel %vm548, %v331, 0
        %v852 = vsel %vm548, %v332, 0
        %v854 = vsel %vm548, %v333, 0
        %v856 = vsel %vm548, %v334, 0
        %v858 = vsel %vm548, %v335, 0
        %v860 = vsel %vm548, %v336, 0
        %v862 = vsel %vm548, %v337, 0
        %v864 = vsel %vm548, %v338, 0
        %v866 = vsel %vm548, %v339, 0
        %v868 = vsel %vm548, %v340, 0
        %v870 = vsel %vm548, %v341, 0
        %v872 = vsel %vm548, %v342, 0
        %v874 = vsel %vm548, %v343, 0
        %v876 = vsel %vm548, %v344, 0
        %v878 = vsel %vm548, %v345, 0
        %v880 = vsel %vm548, %v346, 0
        %v883 = vsel %vm621, %v347, 0
        %885 = vmatprep.subr.bf16.mxu0 0
        %886 = vmatpush1.bf16.msra.mxu0 0
        %887 = vmatprep.subr.bf16.mxu0 0
        %888 = vmatpush1.bf16.msra.mxu0 0
        %889 = vmatprep.subr.bf16.mxu0 0
        %890 = vmatpush1.bf16.msra.mxu0 0
        %891 = vmatprep.subr.bf16.mxu0 0
        %892 = vmatpush1.bf16.msra.mxu0 0
        %893 = vmatprep.subr.bf16.mxu0 0
        %894 = vmatpush1.bf16.msra.mxu0 0
        %895 = vmatprep.subr.bf16.mxu0 0
        %896 = vmatpush1.bf16.msra.mxu0 0
        %897 = vmatprep.subr.bf16.mxu0 0
        %898 = vmatpush1.bf16.msra.mxu0 0
        %899 = vmatprep.subr.bf16.mxu0 0
        %900 = vmatpush1.bf16.msra.mxu0 %v883
        %901 = vmatprep.subr.bf16.mxu0 0
        %902 = vmatpush2.bf16.msra.mxu0 0
        %903 = vmatprep.subr.bf16.mxu0 0
        %904 = vmatpush2.bf16.msra.mxu0 0
        %905 = vmatprep.subr.bf16.mxu0 0
        %906 = vmatpush2.bf16.msra.mxu0 0
        %907 = vmatprep.subr.bf16.mxu0 0
        %908 = vmatpush2.bf16.msra.mxu0 0
        %909 = vmatprep.subr.bf16.mxu0 0
        %910 = vmatpush2.bf16.msra.mxu0 0
        %911 = vmatprep.subr.bf16.mxu0 0
        %912 = vmatpush2.bf16.msra.mxu0 0
        %913 = vmatprep.subr.bf16.mxu0 0
        %914 = vmatpush2.bf16.msra.mxu0 0
        %915 = vmatprep.subr.bf16.mxu0 0
        %916 = vmatpush2.bf16.msra.mxu0 0
        %917 = vmatprep.mubr.bf16.mxu0 0
        %918 = vmatmul.mubr.bf16.gmra.mxu0 %v834
        %v919 = vpop.f32.mrf.mxu0
        %v920 = vadd.f32 %v660, %v919
        %v921 = vpop.f32.mrf.mxu0
        %v922 = vpop.f32.mrf.mxu0
        %v923 = vadd.f32 %v663, %v922
        %v924 = vpop.f32.mrf.mxu0
        %925 = vmatprep.mubr.bf16.mxu0 0
        %926 = vmatmul.mubr.bf16.gmra.mxu0 %v836
        %v927 = vpop.f32.mrf.mxu0
        %v928 = vpop.f32.mrf.mxu0
        %v929 = vpop.f32.mrf.mxu0
        %v930 = vadd.f32 %v670, %v929
        %v931 = vpop.f32.mrf.mxu0
        %932 = vmatprep.mubr.bf16.mxu0 0
        %933 = vmatmul.mubr.bf16.gmra.mxu0 %v838
        %v934 = vpop.f32.mrf.mxu0
        %v935 = vadd.f32 %v675, %v934
        %v936 = vpop.f32.mrf.mxu0
        %v937 = vpop.f32.mrf.mxu0
        %v938 = vpop.f32.mrf.mxu0
        %939 = vmatprep.mubr.bf16.mxu0 0
        %940 = vmatmul.mubr.bf16.gmra.mxu0 %v840
        %v941 = vpop.f32.mrf.mxu0
        %v942 = vadd.f32 %v682, %v941
        %v943 = vpop.f32.mrf.mxu0
        %v944 = vpop.f32.mrf.mxu0
        %v945 = vadd.f32 %v685, %v944
        %v946 = vpop.f32.mrf.mxu0
        %947 = vmatprep.mubr.bf16.mxu0 0
        %948 = vmatmul.mubr.bf16.gmra.mxu0 %v842
        %v949 = vpop.f32.mrf.mxu0
        %v950 = vpop.f32.mrf.mxu0
        %v951 = vpop.f32.mrf.mxu0
        %v952 = vadd.f32 %v692, %v951
        %v953 = vpop.f32.mrf.mxu0
        %954 = vmatprep.mubr.bf16.mxu0 0
        %955 = vmatmul.mubr.bf16.gmra.mxu0 %v844
        %v956 = vpop.f32.mrf.mxu0
        %v957 = vadd.f32 %v697, %v956
        %v958 = vpop.f32.mrf.mxu0
        %v959 = vpop.f32.mrf.mxu0
        %v960 = vpop.f32.mrf.mxu0
        %961 = vmatprep.mubr.bf16.mxu0 0
        %962 = vmatmul.mubr.bf16.gmra.mxu0 %v846
        %v963 = vpop.f32.mrf.mxu0
        %v964 = vadd.f32 %v704, %v963
        %v965 = vpop.f32.mrf.mxu0
        %v966 = vpop.f32.mrf.mxu0
        %v967 = vadd.f32 %v707, %v966
        %v968 = vpop.f32.mrf.mxu0
        %969 = vmatprep.mubr.bf16.mxu0 0
        %970 = vmatmul.mubr.bf16.gmra.mxu0 %v848
        %v971 = vpop.f32.mrf.mxu0
        %v972 = vpop.f32.mrf.mxu0
        %v973 = vpop.f32.mrf.mxu0
        %v974 = vadd.f32 %v714, %v973
        %v975 = vpop.f32.mrf.mxu0
        %976 = vmatprep.mubr.bf16.mxu0 0
        %977 = vmatmul.mubr.bf16.gmra.mxu0 %v850
        %v978 = vpop.f32.mrf.mxu0
        %v979 = vadd.f32 %v719, %v978
        %v980 = vpop.f32.mrf.mxu0
        %v981 = vpop.f32.mrf.mxu0
        %v982 = vpop.f32.mrf.mxu0
        %983 = vmatprep.mubr.bf16.mxu0 0
        %984 = vmatmul.mubr.bf16.gmra.mxu0 %v852
        %v985 = vpop.f32.mrf.mxu0
        %v986 = vadd.f32 %v726, %v985
        %v987 = vpop.f32.mrf.mxu0
        %v988 = vpop.f32.mrf.mxu0
        %v989 = vadd.f32 %v729, %v988
        %v990 = vpop.f32.mrf.mxu0
        %991 = vmatprep.mubr.bf16.mxu0 0
        %992 = vmatmul.mubr.bf16.gmra.mxu0 %v854
        %v993 = vpop.f32.mrf.mxu0
        %v994 = vpop.f32.mrf.mxu0
        %v995 = vpop.f32.mrf.mxu0
        %v996 = vadd.f32 %v736, %v995
        %v997 = vpop.f32.mrf.mxu0
        %998 = vmatprep.mubr.bf16.mxu0 0
        %999 = vmatmul.mubr.bf16.gmra.mxu0 %v856
        %v1000 = vpop.f32.mrf.mxu0
        %v1001 = vadd.f32 %v741, %v1000
        %v1002 = vpop.f32.mrf.mxu0
        %v1003 = vpop.f32.mrf.mxu0
        %v1004 = vpop.f32.mrf.mxu0
        %1005 = vmatprep.mubr.bf16.mxu0 0
        %1006 = vmatmul.mubr.bf16.gmra.mxu0 %v858
        %v1007 = vpop.f32.mrf.mxu0
        %v1008 = vadd.f32 %v748, %v1007
        %v1009 = vpop.f32.mrf.mxu0
        %v1010 = vpop.f32.mrf.mxu0
        %v1011 = vadd.f32 %v751, %v1010
        %v1012 = vpop.f32.mrf.mxu0
        %1013 = vmatprep.mubr.bf16.mxu0 0
        %1014 = vmatmul.mubr.bf16.gmra.mxu0 %v860
        %v1015 = vpop.f32.mrf.mxu0
        %v1016 = vpop.f32.mrf.mxu0
        %v1017 = vpop.f32.mrf.mxu0
        %v1018 = vadd.f32 %v758, %v1017
        %v1019 = vpop.f32.mrf.mxu0
        %1020 = vmatprep.mubr.bf16.mxu0 0
        %1021 = vmatmul.mubr.bf16.gmra.mxu0 %v862
        %v1022 = vpop.f32.mrf.mxu0
        %v1023 = vadd.f32 %v763, %v1022
        %v1024 = vpop.f32.mrf.mxu0
        %v1025 = vpop.f32.mrf.mxu0
        %v1026 = vpop.f32.mrf.mxu0
        %1027 = vmatprep.mubr.bf16.mxu0 0
        %1028 = vmatmul.mubr.bf16.gmra.mxu0 %v864
        %v1029 = vpop.f32.mrf.mxu0
        %v1030 = vadd.f32 %v770, %v1029
        %v1031 = vpop.f32.mrf.mxu0
        %v1032 = vpop.f32.mrf.mxu0
        %v1033 = vadd.f32 %v773, %v1032
        %v1034 = vpop.f32.mrf.mxu0
        %1035 = vmatprep.mubr.bf16.mxu0 0
        %1036 = vmatmul.mubr.bf16.gmra.mxu0 %v866
        %v1037 = vpop.f32.mrf.mxu0
        %v1038 = vpop.f32.mrf.mxu0
        %v1039 = vpop.f32.mrf.mxu0
        %v1040 = vadd.f32 %v780, %v1039
        %v1041 = vpop.f32.mrf.mxu0
        %1042 = vmatprep.mubr.bf16.mxu0 0
        %1043 = vmatmul.mubr.bf16.gmra.mxu0 %v868
        %v1044 = vpop.f32.mrf.mxu0
        %v1045 = vadd.f32 %v785, %v1044
        %v1046 = vpop.f32.mrf.mxu0
        %v1047 = vpop.f32.mrf.mxu0
        %v1048 = vpop.f32.mrf.mxu0
        %1049 = vmatprep.mubr.bf16.mxu0 0
        %1050 = vmatmul.mubr.bf16.gmra.mxu0 %v870
        %v1051 = vpop.f32.mrf.mxu0
        %v1052 = vadd.f32 %v792, %v1051
        %v1053 = vpop.f32.mrf.mxu0
        %v1054 = vpop.f32.mrf.mxu0
        %v1055 = vadd.f32 %v795, %v1054
        %v1056 = vpop.f32.mrf.mxu0
        %1057 = vmatprep.mubr.bf16.mxu0 0
        %1058 = vmatmul.mubr.bf16.gmra.mxu0 %v872
        %v1059 = vpop.f32.mrf.mxu0
        %v1060 = vpop.f32.mrf.mxu0
        %v1061 = vpop.f32.mrf.mxu0
        %v1062 = vadd.f32 %v802, %v1061
        %v1063 = vpop.f32.mrf.mxu0
        %1064 = vmatprep.mubr.bf16.mxu0 0
        %1065 = vmatmul.mubr.bf16.gmra.mxu0 %v874
        %v1066 = vpop.f32.mrf.mxu0
        %v1067 = vadd.f32 %v807, %v1066
        %v1068 = vpop.f32.mrf.mxu0
        %v1069 = vpop.f32.mrf.mxu0
        %v1070 = vpop.f32.mrf.mxu0
        %1071 = vmatprep.mubr.bf16.mxu0 0
        %1072 = vmatmul.mubr.bf16.gmra.mxu0 %v876
        %v1073 = vpop.f32.mrf.mxu0
        %v1074 = vadd.f32 %v814, %v1073
        %v1075 = vpop.f32.mrf.mxu0
        %v1076 = vpop.f32.mrf.mxu0
        %v1077 = vadd.f32 %v817, %v1076
        %v1078 = vpop.f32.mrf.mxu0
        %1079 = vmatprep.mubr.bf16.mxu0 0
        %1080 = vmatmul.mubr.bf16.gmra.mxu0 %v878
        %v1081 = vpop.f32.mrf.mxu0
        %v1082 = vpop.f32.mrf.mxu0
        %v1083 = vpop.f32.mrf.mxu0
        %v1084 = vadd.f32 %v824, %v1083
        %v1085 = vpop.f32.mrf.mxu0
        %1086 = vmatprep.mubr.bf16.mxu0 0
        %1087 = vmatmul.mubr.bf16.gmra.mxu0 %v880
        %v1088 = vpop.f32.mrf.mxu0
        %v1089 = vadd.f32 %v829, %v1088
        %v1090 = vpop.f32.mrf.mxu0
        %v1091 = vpop.f32.mrf.mxu0
        %v1092 = vpop.f32.mrf.mxu0
        %1093 = vdwg.mxu0
        %s1094 = scalar_lea.vmem %s1, 4
        %v1095 = vld [vmem:[%s1094] sm:$0x3]
        %vm1121 = vcmask 1046528
        %v1122 = vrot.slane %v323, 1
        %v1123 = vrot.slane %v324, 1
        %v1124 = vsel %vm1121, %v1122, %v1123
        %v1125 = vrot.slane %v325, 1
        %v1126 = vsel %vm1121, %v1123, %v1125
        %v1127 = vrot.slane %v326, 1
        %v1128 = vsel %vm1121, %v1125, %v1127
        %v1129 = vrot.slane %v327, 1
        %v1130 = vsel %vm1121, %v1127, %v1129
        %v1131 = vrot.slane %v328, 1
        %v1132 = vsel %vm1121, %v1129, %v1131
        %v1133 = vrot.slane %v329, 1
        %v1134 = vsel %vm1121, %v1131, %v1133
        %v1135 = vrot.slane %v330, 1
        %v1136 = vsel %vm1121, %v1133, %v1135
        %v1137 = vrot.slane %v331, 1
        %v1138 = vsel %vm1121, %v1135, %v1137
        %v1139 = vrot.slane %v332, 1
        %v1140 = vsel %vm1121, %v1137, %v1139
        %v1141 = vrot.slane %v333, 1
        %v1142 = vsel %vm1121, %v1139, %v1141
        %v1143 = vrot.slane %v334, 1
        %v1144 = vsel %vm1121, %v1141, %v1143
        %v1145 = vrot.slane %v335, 1
        %v1146 = vsel %vm1121, %v1143, %v1145
        %v1147 = vrot.slane %v336, 1
        %v1148 = vsel %vm1121, %v1145, %v1147
        %v1149 = vrot.slane %v337, 1
        %v1150 = vsel %vm1121, %v1147, %v1149
        %v1151 = vrot.slane %v338, 1
        %v1152 = vsel %vm1121, %v1149, %v1151
        %v1153 = vrot.slane %v339, 1
        %v1154 = vsel %vm1121, %v1151, %v1153
        %v1155 = vrot.slane %v340, 1
        %v1156 = vsel %vm1121, %v1153, %v1155
        %v1157 = vrot.slane %v341, 1
        %v1158 = vsel %vm1121, %v1155, %v1157
        %v1159 = vrot.slane %v342, 1
        %v1160 = vsel %vm1121, %v1157, %v1159
        %v1161 = vrot.slane %v343, 1
        %v1162 = vsel %vm1121, %v1159, %v1161
        %v1163 = vrot.slane %v344, 1
        %v1164 = vsel %vm1121, %v1161, %v1163
        %v1165 = vrot.slane %v345, 1
        %v1166 = vsel %vm1121, %v1163, %v1165
        %v1167 = vrot.slane %v346, 1
        %v1168 = vsel %vm1121, %v1165, %v1167
        %v1169 = vrot.slane %v348, 1
        %v1170 = vsel %vm1121, %v1167, %v1169
        %v1172 = vsel %vm548, %v1124, 0
        %v1175 = vsel %vm548, %v1126, 0
        %v1178 = vsel %vm548, %v1128, 0
        %v1181 = vsel %vm548, %v1130, 0
        %v1184 = vsel %vm548, %v1132, 0
        %v1187 = vsel %vm548, %v1134, 0
        %v1190 = vsel %vm548, %v1136, 0
        %v1193 = vsel %vm548, %v1138, 0
        %v1196 = vsel %vm548, %v1140, 0
        %v1199 = vsel %vm548, %v1142, 0
        %v1202 = vsel %vm548, %v1144, 0
        %v1205 = vsel %vm548, %v1146, 0
        %v1208 = vsel %vm548, %v1148, 0
        %v1211 = vsel %vm548, %v1150, 0
        %v1214 = vsel %vm548, %v1152, 0
        %v1217 = vsel %vm548, %v1154, 0
        %v1220 = vsel %vm548, %v1156, 0
        %v1223 = vsel %vm548, %v1158, 0
        %v1226 = vsel %vm548, %v1160, 0
        %v1229 = vsel %vm548, %v1162, 0
        %v1232 = vsel %vm548, %v1164, 0
        %v1235 = vsel %vm548, %v1166, 0
        %v1238 = vsel %vm548, %v1168, 0
        %v1241 = vsel %vm548, %v1170, 0
        %v1244 = vsel %vm621, %v1095, 0
        %1246 = vmatprep.subr.bf16.mxu0 0
        %1247 = vmatpush1.bf16.msra.mxu0 0
        %1248 = vmatprep.subr.bf16.mxu0 0
        %1249 = vmatpush1.bf16.msra.mxu0 0
        %1250 = vmatprep.subr.bf16.mxu0 0
        %1251 = vmatpush1.bf16.msra.mxu0 0
        %1252 = vmatprep.subr.bf16.mxu0 0
        %1253 = vmatpush1.bf16.msra.mxu0 0
        %1254 = vmatprep.subr.bf16.mxu0 0
        %1255 = vmatpush1.bf16.msra.mxu0 0
        %1256 = vmatprep.subr.bf16.mxu0 0
        %1257 = vmatpush1.bf16.msra.mxu0 0
        %1258 = vmatprep.subr.bf16.mxu0 0
        %1259 = vmatpush1.bf16.msra.mxu0 0
        %1260 = vmatprep.subr.bf16.mxu0 0
        %1261 = vmatpush1.bf16.msra.mxu0 %v1244
        %1262 = vmatprep.subr.bf16.mxu0 0
        %1263 = vmatpush2.bf16.msra.mxu0 0
        %1264 = vmatprep.subr.bf16.mxu0 0
        %1265 = vmatpush2.bf16.msra.mxu0 0
        %1266 = vmatprep.subr.bf16.mxu0 0
        %1267 = vmatpush2.bf16.msra.mxu0 0
        %1268 = vmatprep.subr.bf16.mxu0 0
        %1269 = vmatpush2.bf16.msra.mxu0 0
        %1270 = vmatprep.subr.bf16.mxu0 0
        %1271 = vmatpush2.bf16.msra.mxu0 0
        %1272 = vmatprep.subr.bf16.mxu0 0
        %1273 = vmatpush2.bf16.msra.mxu0 0
        %1274 = vmatprep.subr.bf16.mxu0 0
        %1275 = vmatpush2.bf16.msra.mxu0 0
        %1276 = vmatprep.subr.bf16.mxu0 0
        %1277 = vmatpush2.bf16.msra.mxu0 0
        %1278 = vmatprep.mubr.bf16.mxu0 0
        %1279 = vmatmul.mubr.bf16.gmra.mxu0 %v1172
        %v1280 = vpop.f32.mrf.mxu0
        %v1281 = vadd.f32 0.0, %v1280
        %v1282 = vpop.f32.mrf.mxu0
        %v1283 = vpop.f32.mrf.mxu0
        %v1284 = vadd.f32 0.0, %v1283
        %v1285 = vpop.f32.mrf.mxu0
        %1286 = vmatprep.mubr.bf16.mxu0 0
        %1287 = vmatmul.mubr.bf16.gmra.mxu0 %v1175
        %v1288 = vpop.f32.mrf.mxu0
        %v1289 = vpop.f32.mrf.mxu0
        %v1290 = vpop.f32.mrf.mxu0
        %v1291 = vadd.f32 0.0, %v1290
        %v1292 = vpop.f32.mrf.mxu0
        %1293 = vmatprep.mubr.bf16.mxu0 0
        %1294 = vmatmul.mubr.bf16.gmra.mxu0 %v1178
        %v1295 = vpop.f32.mrf.mxu0
        %v1296 = vadd.f32 0.0, %v1295
        %v1297 = vpop.f32.mrf.mxu0
        %v1298 = vpop.f32.mrf.mxu0
        %v1299 = vpop.f32.mrf.mxu0
        %1300 = vmatprep.mubr.bf16.mxu0 0
        %1301 = vmatmul.mubr.bf16.gmra.mxu0 %v1181
        %v1302 = vpop.f32.mrf.mxu0
        %v1303 = vadd.f32 0.0, %v1302
        %v1304 = vpop.f32.mrf.mxu0
        %v1305 = vpop.f32.mrf.mxu0
        %v1306 = vadd.f32 0.0, %v1305
        %v1307 = vpop.f32.mrf.mxu0
        %1308 = vmatprep.mubr.bf16.mxu0 0
        %1309 = vmatmul.mubr.bf16.gmra.mxu0 %v1184
        %v1310 = vpop.f32.mrf.mxu0
        %v1311 = vpop.f32.mrf.mxu0
        %v1312 = vpop.f32.mrf.mxu0
        %v1313 = vadd.f32 0.0, %v1312
        %v1314 = vpop.f32.mrf.mxu0
        %1315 = vmatprep.mubr.bf16.mxu0 0
        %1316 = vmatmul.mubr.bf16.gmra.mxu0 %v1187
        %v1317 = vpop.f32.mrf.mxu0
        %v1318 = vadd.f32 0.0, %v1317
        %v1319 = vpop.f32.mrf.mxu0
        %v1320 = vpop.f32.mrf.mxu0
        %v1321 = vpop.f32.mrf.mxu0
        %1322 = vmatprep.mubr.bf16.mxu0 0
        %1323 = vmatmul.mubr.bf16.gmra.mxu0 %v1190
        %v1324 = vpop.f32.mrf.mxu0
        %v1325 = vadd.f32 0.0, %v1324
        %v1326 = vpop.f32.mrf.mxu0
        %v1327 = vpop.f32.mrf.mxu0
        %v1328 = vadd.f32 0.0, %v1327
        %v1329 = vpop.f32.mrf.mxu0
        %1330 = vmatprep.mubr.bf16.mxu0 0
        %1331 = vmatmul.mubr.bf16.gmra.mxu0 %v1193
        %v1332 = vpop.f32.mrf.mxu0
        %v1333 = vpop.f32.mrf.mxu0
        %v1334 = vpop.f32.mrf.mxu0
        %v1335 = vadd.f32 0.0, %v1334
        %v1336 = vpop.f32.mrf.mxu0
        %1337 = vmatprep.mubr.bf16.mxu0 0
        %1338 = vmatmul.mubr.bf16.gmra.mxu0 %v1196
        %v1339 = vpop.f32.mrf.mxu0
        %v1340 = vadd.f32 0.0, %v1339
        %v1341 = vpop.f32.mrf.mxu0
        %v1342 = vpop.f32.mrf.mxu0
        %v1343 = vpop.f32.mrf.mxu0
        %1344 = vmatprep.mubr.bf16.mxu0 0
        %1345 = vmatmul.mubr.bf16.gmra.mxu0 %v1199
        %v1346 = vpop.f32.mrf.mxu0
        %v1347 = vadd.f32 0.0, %v1346
        %v1348 = vpop.f32.mrf.mxu0
        %v1349 = vpop.f32.mrf.mxu0
        %v1350 = vadd.f32 0.0, %v1349
        %v1351 = vpop.f32.mrf.mxu0
        %1352 = vmatprep.mubr.bf16.mxu0 0
        %1353 = vmatmul.mubr.bf16.gmra.mxu0 %v1202
        %v1354 = vpop.f32.mrf.mxu0
        %v1355 = vpop.f32.mrf.mxu0
        %v1356 = vpop.f32.mrf.mxu0
        %v1357 = vadd.f32 0.0, %v1356
        %v1358 = vpop.f32.mrf.mxu0
        %1359 = vmatprep.mubr.bf16.mxu0 0
        %1360 = vmatmul.mubr.bf16.gmra.mxu0 %v1205
        %v1361 = vpop.f32.mrf.mxu0
        %v1362 = vadd.f32 0.0, %v1361
        %v1363 = vpop.f32.mrf.mxu0
        %v1364 = vpop.f32.mrf.mxu0
        %v1365 = vpop.f32.mrf.mxu0
        %1366 = vmatprep.mubr.bf16.mxu0 0
        %1367 = vmatmul.mubr.bf16.gmra.mxu0 %v1208
        %v1368 = vpop.f32.mrf.mxu0
        %v1369 = vadd.f32 0.0, %v1368
        %v1370 = vpop.f32.mrf.mxu0
        %v1371 = vpop.f32.mrf.mxu0
        %v1372 = vadd.f32 0.0, %v1371
        %v1373 = vpop.f32.mrf.mxu0
        %1374 = vmatprep.mubr.bf16.mxu0 0
        %1375 = vmatmul.mubr.bf16.gmra.mxu0 %v1211
        %v1376 = vpop.f32.mrf.mxu0
        %v1377 = vpop.f32.mrf.mxu0
        %v1378 = vpop.f32.mrf.mxu0
        %v1379 = vadd.f32 0.0, %v1378
        %v1380 = vpop.f32.mrf.mxu0
        %1381 = vmatprep.mubr.bf16.mxu0 0
        %1382 = vmatmul.mubr.bf16.gmra.mxu0 %v1214
        %v1383 = vpop.f32.mrf.mxu0
        %v1384 = vadd.f32 0.0, %v1383
        %v1385 = vpop.f32.mrf.mxu0
        %v1386 = vpop.f32.mrf.mxu0
        %v1387 = vpop.f32.mrf.mxu0
        %1388 = vmatprep.mubr.bf16.mxu0 0
        %1389 = vmatmul.mubr.bf16.gmra.mxu0 %v1217
        %v1390 = vpop.f32.mrf.mxu0
        %v1391 = vadd.f32 0.0, %v1390
        %v1392 = vpop.f32.mrf.mxu0
        %v1393 = vpop.f32.mrf.mxu0
        %v1394 = vadd.f32 0.0, %v1393
        %v1395 = vpop.f32.mrf.mxu0
        %1396 = vmatprep.mubr.bf16.mxu0 0
        %1397 = vmatmul.mubr.bf16.gmra.mxu0 %v1220
        %v1398 = vpop.f32.mrf.mxu0
        %v1399 = vpop.f32.mrf.mxu0
        %v1400 = vpop.f32.mrf.mxu0
        %v1401 = vadd.f32 0.0, %v1400
        %v1402 = vpop.f32.mrf.mxu0
        %1403 = vmatprep.mubr.bf16.mxu0 0
        %1404 = vmatmul.mubr.bf16.gmra.mxu0 %v1223
        %v1405 = vpop.f32.mrf.mxu0
        %v1406 = vadd.f32 0.0, %v1405
        %v1407 = vpop.f32.mrf.mxu0
        %v1408 = vpop.f32.mrf.mxu0
        %v1409 = vpop.f32.mrf.mxu0
        %1410 = vmatprep.mubr.bf16.mxu0 0
        %1411 = vmatmul.mubr.bf16.gmra.mxu0 %v1226
        %v1412 = vpop.f32.mrf.mxu0
        %v1413 = vadd.f32 0.0, %v1412
        %v1414 = vpop.f32.mrf.mxu0
        %v1415 = vpop.f32.mrf.mxu0
        %v1416 = vadd.f32 0.0, %v1415
        %v1417 = vpop.f32.mrf.mxu0
        %1418 = vmatprep.mubr.bf16.mxu0 0
        %1419 = vmatmul.mubr.bf16.gmra.mxu0 %v1229
        %v1420 = vpop.f32.mrf.mxu0
        %v1421 = vpop.f32.mrf.mxu0
        %v1422 = vpop.f32.mrf.mxu0
        %v1423 = vadd.f32 0.0, %v1422
        %v1424 = vpop.f32.mrf.mxu0
        %1425 = vmatprep.mubr.bf16.mxu0 0
        %1426 = vmatmul.mubr.bf16.gmra.mxu0 %v1232
        %v1427 = vpop.f32.mrf.mxu0
        %v1428 = vadd.f32 0.0, %v1427
        %v1429 = vpop.f32.mrf.mxu0
        %v1430 = vpop.f32.mrf.mxu0
        %v1431 = vpop.f32.mrf.mxu0
        %1432 = vmatprep.mubr.bf16.mxu0 0
        %1433 = vmatmul.mubr.bf16.gmra.mxu0 %v1235
        %v1434 = vpop.f32.mrf.mxu0
        %v1435 = vadd.f32 0.0, %v1434
        %v1436 = vpop.f32.mrf.mxu0
        %v1437 = vpop.f32.mrf.mxu0
        %v1438 = vadd.f32 0.0, %v1437
        %v1439 = vpop.f32.mrf.mxu0
        %1440 = vmatprep.mubr.bf16.mxu0 0
        %1441 = vmatmul.mubr.bf16.gmra.mxu0 %v1238
        %v1442 = vpop.f32.mrf.mxu0
        %v1443 = vpop.f32.mrf.mxu0
        %v1444 = vpop.f32.mrf.mxu0
        %v1445 = vadd.f32 0.0, %v1444
        %v1446 = vpop.f32.mrf.mxu0
        %1447 = vmatprep.mubr.bf16.mxu0 0
        %1448 = vmatmul.mubr.bf16.gmra.mxu0 %v1241
        %v1449 = vpop.f32.mrf.mxu0
        %v1450 = vadd.f32 0.0, %v1449
        %v1451 = vpop.f32.mrf.mxu0
        %v1452 = vpop.f32.mrf.mxu0
        %v1453 = vpop.f32.mrf.mxu0
        %1454 = vdwg.mxu0
        %v1455 = vadd.f32 %v920, %v1281
        %v1456 = vadd.f32 %v923, %v1284
        %v1457 = vadd.f32 %v930, %v1291
        %v1458 = vadd.f32 %v935, %v1296
        %v1459 = vadd.f32 %v942, %v1303
        %v1460 = vadd.f32 %v945, %v1306
        %v1461 = vadd.f32 %v952, %v1313
        %v1462 = vadd.f32 %v957, %v1318
        %v1463 = vadd.f32 %v964, %v1325
        %v1464 = vadd.f32 %v967, %v1328
        %v1465 = vadd.f32 %v974, %v1335
        %v1466 = vadd.f32 %v979, %v1340
        %v1467 = vadd.f32 %v986, %v1347
        %v1468 = vadd.f32 %v989, %v1350
        %v1469 = vadd.f32 %v996, %v1357
        %v1470 = vadd.f32 %v1001, %v1362
        %v1471 = vadd.f32 %v1008, %v1369
        %v1472 = vadd.f32 %v1011, %v1372
        %v1473 = vadd.f32 %v1018, %v1379
        %v1474 = vadd.f32 %v1023, %v1384
        %v1475 = vadd.f32 %v1030, %v1391
        %v1476 = vadd.f32 %v1033, %v1394
        %v1477 = vadd.f32 %v1040, %v1401
        %v1478 = vadd.f32 %v1045, %v1406
        %v1479 = vadd.f32 %v1052, %v1413
        %v1480 = vadd.f32 %v1055, %v1416
        %v1481 = vadd.f32 %v1062, %v1423
        %v1482 = vadd.f32 %v1067, %v1428
        %v1483 = vadd.f32 %v1074, %v1435
        %v1484 = vadd.f32 %v1077, %v1438
        %v1485 = vadd.f32 %v1084, %v1445
        %v1486 = vadd.f32 %v1089, %v1450
        %v1487 = vpack.c.bf16 %v272, %v271
        %v1488 = vpack.c.bf16 %v274, %v273
        %v1489 = vpack.c.bf16 %v276, %v275
        %v1490 = vpack.c.bf16 %v278, %v277
        %v1491 = vpack.c.bf16 %v280, %v279
        %v1492 = vpack.c.bf16 %v282, %v281
        %v1493 = vpack.c.bf16 %v284, %v283
        %v1494 = vpack.c.bf16 %v286, %v285
        %v1495 = vpack.c.bf16 %v288, %v287
        %v1496 = vpack.c.bf16 %v290, %v289
        %v1497 = vpack.c.bf16 %v292, %v291
        %v1498 = vpack.c.bf16 %v294, %v293
        %v1499 = vpack.c.bf16 %v296, %v295
        %v1500 = vpack.c.bf16 %v298, %v297
        %v1501 = vpack.c.bf16 %v300, %v299
        %v1502 = vpack.c.bf16 %v302, %v301
        %v1503 = vpack.c.bf16 %v304, %v303
        %v1504 = vpack.c.bf16 %v306, %v305
        %v1505 = vpack.c.bf16 %v308, %v307
        %v1506 = vpack.c.bf16 %v310, %v309
        %v1507 = vpack.c.bf16 %v312, %v311
        %v1508 = vpack.c.bf16 %v314, %v313
        %v1509 = vpack.c.bf16 %v316, %v315
        %v1510 = vpack.c.bf16 %v318, %v317
        %s1511 = scalar_lea.vmem %s1, 6
        %v1512 = vld [vmem:[%s1511] sm:$0x3]
        %v1514 = vsel %vm548, %v1487, 0
        %v1517 = vsel %vm548, %v1488, 0
        %v1520 = vsel %vm548, %v1489, 0
        %v1523 = vsel %vm548, %v1490, 0
        %v1526 = vsel %vm548, %v1491, 0
        %v1529 = vsel %vm548, %v1492, 0
        %v1532 = vsel %vm548, %v1493, 0
        %v1535 = vsel %vm548, %v1494, 0
        %v1538 = vsel %vm548, %v1495, 0
        %v1541 = vsel %vm548, %v1496, 0
        %v1544 = vsel %vm548, %v1497, 0
        %v1547 = vsel %vm548, %v1498, 0
        %v1550 = vsel %vm548, %v1499, 0
        %v1553 = vsel %vm548, %v1500, 0
        %v1556 = vsel %vm548, %v1501, 0
        %v1559 = vsel %vm548, %v1502, 0
        %v1562 = vsel %vm548, %v1503, 0
        %v1565 = vsel %vm548, %v1504, 0
        %v1568 = vsel %vm548, %v1505, 0
        %v1571 = vsel %vm548, %v1506, 0
        %v1574 = vsel %vm548, %v1507, 0
        %v1577 = vsel %vm548, %v1508, 0
        %v1580 = vsel %vm548, %v1509, 0
        %v1583 = vsel %vm548, %v1510, 0
        %v1586 = vsel %vm621, %v1512, 0
        %1588 = vmatprep.subr.bf16.mxu0 0
        %1589 = vmatpush1.bf16.msra.mxu0 0
        %1590 = vmatprep.subr.bf16.mxu0 0
        %1591 = vmatpush1.bf16.msra.mxu0 0
        %1592 = vmatprep.subr.bf16.mxu0 0
        %1593 = vmatpush1.bf16.msra.mxu0 0
        %1594 = vmatprep.subr.bf16.mxu0 0
        %1595 = vmatpush1.bf16.msra.mxu0 0
        %1596 = vmatprep.subr.bf16.mxu0 0
        %1597 = vmatpush1.bf16.msra.mxu0 0
        %1598 = vmatprep.subr.bf16.mxu0 0
        %1599 = vmatpush1.bf16.msra.mxu0 0
        %1600 = vmatprep.subr.bf16.mxu0 0
        %1601 = vmatpush1.bf16.msra.mxu0 0
        %1602 = vmatprep.subr.bf16.mxu0 0
        %1603 = vmatpush1.bf16.msra.mxu0 %v1586
        %1604 = vmatprep.subr.bf16.mxu0 0
        %1605 = vmatpush2.bf16.msra.mxu0 0
        %1606 = vmatprep.subr.bf16.mxu0 0
        %1607 = vmatpush2.bf16.msra.mxu0 0
        %1608 = vmatprep.subr.bf16.mxu0 0
        %1609 = vmatpush2.bf16.msra.mxu0 0
        %1610 = vmatprep.subr.bf16.mxu0 0
        %1611 = vmatpush2.bf16.msra.mxu0 0
        %1612 = vmatprep.subr.bf16.mxu0 0
        %1613 = vmatpush2.bf16.msra.mxu0 0
        %1614 = vmatprep.subr.bf16.mxu0 0
        %1615 = vmatpush2.bf16.msra.mxu0 0
        %1616 = vmatprep.subr.bf16.mxu0 0
        %1617 = vmatpush2.bf16.msra.mxu0 0
        %1618 = vmatprep.subr.bf16.mxu0 0
        %1619 = vmatpush2.bf16.msra.mxu0 0
        %1620 = vmatprep.mubr.bf16.mxu0 0
        %1621 = vmatmul.mubr.bf16.gmra.mxu0 %v1514
        %v1622 = vpop.f32.mrf.mxu0
        %v1623 = vadd.f32 0.0, %v1622
        %v1624 = vpop.f32.mrf.mxu0
        %v1625 = vpop.f32.mrf.mxu0
        %v1626 = vadd.f32 0.0, %v1625
        %v1627 = vpop.f32.mrf.mxu0
        %1628 = vmatprep.mubr.bf16.mxu0 0
        %1629 = vmatmul.mubr.bf16.gmra.mxu0 %v1517
        %v1630 = vpop.f32.mrf.mxu0
        %v1631 = vpop.f32.mrf.mxu0
        %v1632 = vpop.f32.mrf.mxu0
        %v1633 = vadd.f32 0.0, %v1632
        %v1634 = vpop.f32.mrf.mxu0
        %1635 = vmatprep.mubr.bf16.mxu0 0
        %1636 = vmatmul.mubr.bf16.gmra.mxu0 %v1520
        %v1637 = vpop.f32.mrf.mxu0
        %v1638 = vadd.f32 0.0, %v1637
        %v1639 = vpop.f32.mrf.mxu0
        %v1640 = vpop.f32.mrf.mxu0
        %v1641 = vpop.f32.mrf.mxu0
        %1642 = vmatprep.mubr.bf16.mxu0 0
        %1643 = vmatmul.mubr.bf16.gmra.mxu0 %v1523
        %v1644 = vpop.f32.mrf.mxu0
        %v1645 = vadd.f32 0.0, %v1644
        %v1646 = vpop.f32.mrf.mxu0
        %v1647 = vpop.f32.mrf.mxu0
        %v1648 = vadd.f32 0.0, %v1647
        %v1649 = vpop.f32.mrf.mxu0
        %1650 = vmatprep.mubr.bf16.mxu0 0
        %1651 = vmatmul.mubr.bf16.gmra.mxu0 %v1526
        %v1652 = vpop.f32.mrf.mxu0
        %v1653 = vpop.f32.mrf.mxu0
        %v1654 = vpop.f32.mrf.mxu0
        %v1655 = vadd.f32 0.0, %v1654
        %v1656 = vpop.f32.mrf.mxu0
        %1657 = vmatprep.mubr.bf16.mxu0 0
        %1658 = vmatmul.mubr.bf16.gmra.mxu0 %v1529
        %v1659 = vpop.f32.mrf.mxu0
        %v1660 = vadd.f32 0.0, %v1659
        %v1661 = vpop.f32.mrf.mxu0
        %v1662 = vpop.f32.mrf.mxu0
        %v1663 = vpop.f32.mrf.mxu0
        %1664 = vmatprep.mubr.bf16.mxu0 0
        %1665 = vmatmul.mubr.bf16.gmra.mxu0 %v1532
        %v1666 = vpop.f32.mrf.mxu0
        %v1667 = vadd.f32 0.0, %v1666
        %v1668 = vpop.f32.mrf.mxu0
        %v1669 = vpop.f32.mrf.mxu0
        %v1670 = vadd.f32 0.0, %v1669
        %v1671 = vpop.f32.mrf.mxu0
        %1672 = vmatprep.mubr.bf16.mxu0 0
        %1673 = vmatmul.mubr.bf16.gmra.mxu0 %v1535
        %v1674 = vpop.f32.mrf.mxu0
        %v1675 = vpop.f32.mrf.mxu0
        %v1676 = vpop.f32.mrf.mxu0
        %v1677 = vadd.f32 0.0, %v1676
        %v1678 = vpop.f32.mrf.mxu0
        %1679 = vmatprep.mubr.bf16.mxu0 0
        %1680 = vmatmul.mubr.bf16.gmra.mxu0 %v1538
        %v1681 = vpop.f32.mrf.mxu0
        %v1682 = vadd.f32 0.0, %v1681
        %v1683 = vpop.f32.mrf.mxu0
        %v1684 = vpop.f32.mrf.mxu0
        %v1685 = vpop.f32.mrf.mxu0
        %1686 = vmatprep.mubr.bf16.mxu0 0
        %1687 = vmatmul.mubr.bf16.gmra.mxu0 %v1541
        %v1688 = vpop.f32.mrf.mxu0
        %v1689 = vadd.f32 0.0, %v1688
        %v1690 = vpop.f32.mrf.mxu0
        %v1691 = vpop.f32.mrf.mxu0
        %v1692 = vadd.f32 0.0, %v1691
        %v1693 = vpop.f32.mrf.mxu0
        %1694 = vmatprep.mubr.bf16.mxu0 0
        %1695 = vmatmul.mubr.bf16.gmra.mxu0 %v1544
        %v1696 = vpop.f32.mrf.mxu0
        %v1697 = vpop.f32.mrf.mxu0
        %v1698 = vpop.f32.mrf.mxu0
        %v1699 = vadd.f32 0.0, %v1698
        %v1700 = vpop.f32.mrf.mxu0
        %1701 = vmatprep.mubr.bf16.mxu0 0
        %1702 = vmatmul.mubr.bf16.gmra.mxu0 %v1547
        %v1703 = vpop.f32.mrf.mxu0
        %v1704 = vadd.f32 0.0, %v1703
        %v1705 = vpop.f32.mrf.mxu0
        %v1706 = vpop.f32.mrf.mxu0
        %v1707 = vpop.f32.mrf.mxu0
        %1708 = vmatprep.mubr.bf16.mxu0 0
        %1709 = vmatmul.mubr.bf16.gmra.mxu0 %v1550
        %v1710 = vpop.f32.mrf.mxu0
        %v1711 = vadd.f32 0.0, %v1710
        %v1712 = vpop.f32.mrf.mxu0
        %v1713 = vpop.f32.mrf.mxu0
        %v1714 = vadd.f32 0.0, %v1713
        %v1715 = vpop.f32.mrf.mxu0
        %1716 = vmatprep.mubr.bf16.mxu0 0
        %1717 = vmatmul.mubr.bf16.gmra.mxu0 %v1553
        %v1718 = vpop.f32.mrf.mxu0
        %v1719 = vpop.f32.mrf.mxu0
        %v1720 = vpop.f32.mrf.mxu0
        %v1721 = vadd.f32 0.0, %v1720
        %v1722 = vpop.f32.mrf.mxu0
        %1723 = vmatprep.mubr.bf16.mxu0 0
        %1724 = vmatmul.mubr.bf16.gmra.mxu0 %v1556
        %v1725 = vpop.f32.mrf.mxu0
        %v1726 = vadd.f32 0.0, %v1725
        %v1727 = vpop.f32.mrf.mxu0
        %v1728 = vpop.f32.mrf.mxu0
        %v1729 = vpop.f32.mrf.mxu0
        %1730 = vmatprep.mubr.bf16.mxu0 0
        %1731 = vmatmul.mubr.bf16.gmra.mxu0 %v1559
        %v1732 = vpop.f32.mrf.mxu0
        %v1733 = vadd.f32 0.0, %v1732
        %v1734 = vpop.f32.mrf.mxu0
        %v1735 = vpop.f32.mrf.mxu0
        %v1736 = vadd.f32 0.0, %v1735
        %v1737 = vpop.f32.mrf.mxu0
        %1738 = vmatprep.mubr.bf16.mxu0 0
        %1739 = vmatmul.mubr.bf16.gmra.mxu0 %v1562
        %v1740 = vpop.f32.mrf.mxu0
        %v1741 = vpop.f32.mrf.mxu0
        %v1742 = vpop.f32.mrf.mxu0
        %v1743 = vadd.f32 0.0, %v1742
        %v1744 = vpop.f32.mrf.mxu0
        %1745 = vmatprep.mubr.bf16.mxu0 0
        %1746 = vmatmul.mubr.bf16.gmra.mxu0 %v1565
        %v1747 = vpop.f32.mrf.mxu0
        %v1748 = vadd.f32 0.0, %v1747
        %v1749 = vpop.f32.mrf.mxu0
        %v1750 = vpop.f32.mrf.mxu0
        %v1751 = vpop.f32.mrf.mxu0
        %1752 = vmatprep.mubr.bf16.mxu0 0
        %1753 = vmatmul.mubr.bf16.gmra.mxu0 %v1568
        %v1754 = vpop.f32.mrf.mxu0
        %v1755 = vadd.f32 0.0, %v1754
        %v1756 = vpop.f32.mrf.mxu0
        %v1757 = vpop.f32.mrf.mxu0
        %v1758 = vadd.f32 0.0, %v1757
        %v1759 = vpop.f32.mrf.mxu0
        %1760 = vmatprep.mubr.bf16.mxu0 0
        %1761 = vmatmul.mubr.bf16.gmra.mxu0 %v1571
        %v1762 = vpop.f32.mrf.mxu0
        %v1763 = vpop.f32.mrf.mxu0
        %v1764 = vpop.f32.mrf.mxu0
        %v1765 = vadd.f32 0.0, %v1764
        %v1766 = vpop.f32.mrf.mxu0
        %1767 = vmatprep.mubr.bf16.mxu0 0
        %1768 = vmatmul.mubr.bf16.gmra.mxu0 %v1574
        %v1769 = vpop.f32.mrf.mxu0
        %v1770 = vadd.f32 0.0, %v1769
        %v1771 = vpop.f32.mrf.mxu0
        %v1772 = vpop.f32.mrf.mxu0
        %v1773 = vpop.f32.mrf.mxu0
        %1774 = vmatprep.mubr.bf16.mxu0 0
        %1775 = vmatmul.mubr.bf16.gmra.mxu0 %v1577
        %v1776 = vpop.f32.mrf.mxu0
        %v1777 = vadd.f32 0.0, %v1776
        %v1778 = vpop.f32.mrf.mxu0
        %v1779 = vpop.f32.mrf.mxu0
        %v1780 = vadd.f32 0.0, %v1779
        %v1781 = vpop.f32.mrf.mxu0
        %1782 = vmatprep.mubr.bf16.mxu0 0
        %1783 = vmatmul.mubr.bf16.gmra.mxu0 %v1580
        %v1784 = vpop.f32.mrf.mxu0
        %v1785 = vpop.f32.mrf.mxu0
        %v1786 = vpop.f32.mrf.mxu0
        %v1787 = vadd.f32 0.0, %v1786
        %v1788 = vpop.f32.mrf.mxu0
        %1789 = vmatprep.mubr.bf16.mxu0 0
        %1790 = vmatmul.mubr.bf16.gmra.mxu0 %v1583
        %v1791 = vpop.f32.mrf.mxu0
        %v1792 = vadd.f32 0.0, %v1791
        %v1793 = vpop.f32.mrf.mxu0
        %v1794 = vpop.f32.mrf.mxu0
        %v1795 = vpop.f32.mrf.mxu0
        %1796 = vdwg.mxu0
        %v1797 = vadd.f32 %v1455, %v1623
        %v1798 = vadd.f32 %v1456, %v1626
        %v1799 = vadd.f32 %v1457, %v1633
        %v1800 = vadd.f32 %v1458, %v1638
        %v1801 = vadd.f32 %v1459, %v1645
        %v1802 = vadd.f32 %v1460, %v1648
        %v1803 = vadd.f32 %v1461, %v1655
        %v1804 = vadd.f32 %v1462, %v1660
        %v1805 = vadd.f32 %v1463, %v1667
        %v1806 = vadd.f32 %v1464, %v1670
        %v1807 = vadd.f32 %v1465, %v1677
        %v1808 = vadd.f32 %v1466, %v1682
        %v1809 = vadd.f32 %v1467, %v1689
        %v1810 = vadd.f32 %v1468, %v1692
        %v1811 = vadd.f32 %v1469, %v1699
        %v1812 = vadd.f32 %v1470, %v1704
        %v1813 = vadd.f32 %v1471, %v1711
        %v1814 = vadd.f32 %v1472, %v1714
        %v1815 = vadd.f32 %v1473, %v1721
        %v1816 = vadd.f32 %v1474, %v1726
        %v1817 = vadd.f32 %v1475, %v1733
        %v1818 = vadd.f32 %v1476, %v1736
        %v1819 = vadd.f32 %v1477, %v1743
        %v1820 = vadd.f32 %v1478, %v1748
        %v1821 = vadd.f32 %v1479, %v1755
        %v1822 = vadd.f32 %v1480, %v1758
        %v1823 = vadd.f32 %v1481, %v1765
        %v1824 = vadd.f32 %v1482, %v1770
        %v1825 = vadd.f32 %v1483, %v1777
        %v1826 = vadd.f32 %v1484, %v1780
        %v1827 = vadd.f32 %v1485, %v1787
        %v1828 = vadd.f32 %v1486, %v1792
        %v1829 = vpack.c.bf16 %v319, %v319
        %s1830 = scalar_lea.vmem %s1, 8
        %v1831 = vld [vmem:[%s1830] sm:$0x3]
        %v1832 = vshrl.u32 %v1487, 16
        %v1834 = vshll.u32 %v1487, 16
        %v1836 = vrot.slane %v1834, 1
        %v1837 = vor.u32 %v1832, %v1836
        %v1838 = vshll.u32 %v1488, 16
        %v1840 = vrot.slane %v1838, 1
        %v1841 = vsel %vm351, %v1837, %v1840
        %v1842 = vshrl.u32 %v1488, 16
        %v1844 = vor.u32 %v1842, %v1840
        %v1845 = vshll.u32 %v1489, 16
        %v1847 = vrot.slane %v1845, 1
        %v1848 = vsel %vm351, %v1844, %v1847
        %v1849 = vshrl.u32 %v1489, 16
        %v1851 = vor.u32 %v1849, %v1847
        %v1852 = vshll.u32 %v1490, 16
        %v1854 = vrot.slane %v1852, 1
        %v1855 = vsel %vm351, %v1851, %v1854
        %v1856 = vshrl.u32 %v1490, 16
        %v1858 = vor.u32 %v1856, %v1854
        %v1859 = vshll.u32 %v1491, 16
        %v1861 = vrot.slane %v1859, 1
        %v1862 = vsel %vm351, %v1858, %v1861
        %v1863 = vshrl.u32 %v1491, 16
        %v1865 = vor.u32 %v1863, %v1861
        %v1866 = vshll.u32 %v1492, 16
        %v1868 = vrot.slane %v1866, 1
        %v1869 = vsel %vm351, %v1865, %v1868
        %v1870 = vshrl.u32 %v1492, 16
        %v1872 = vor.u32 %v1870, %v1868
        %v1873 = vshll.u32 %v1493, 16
        %v1875 = vrot.slane %v1873, 1
        %v1876 = vsel %vm351, %v1872, %v1875
        %v1877 = vshrl.u32 %v1493, 16
        %v1879 = vor.u32 %v1877, %v1875
        %v1880 = vshll.u32 %v1494, 16
        %v1882 = vrot.slane %v1880, 1
        %v1883 = vsel %vm351, %v1879, %v1882
        %v1884 = vshrl.u32 %v1494, 16
        %v1886 = vor.u32 %v1884, %v1882
        %v1887 = vshll.u32 %v1495, 16
        %v1889 = vrot.slane %v1887, 1
        %v1890 = vsel %vm351, %v1886, %v1889
        %v1891 = vshrl.u32 %v1495, 16
        %v1893 = vor.u32 %v1891, %v1889
        %v1894 = vshll.u32 %v1496, 16
        %v1896 = vrot.slane %v1894, 1
        %v1897 = vsel %vm351, %v1893, %v1896
        %v1898 = vshrl.u32 %v1496, 16
        %v1900 = vor.u32 %v1898, %v1896
        %v1901 = vshll.u32 %v1497, 16
        %v1903 = vrot.slane %v1901, 1
        %v1904 = vsel %vm351, %v1900, %v1903
        %v1905 = vshrl.u32 %v1497, 16
        %v1907 = vor.u32 %v1905, %v1903
        %v1908 = vshll.u32 %v1498, 16
        %v1910 = vrot.slane %v1908, 1
        %v1911 = vsel %vm351, %v1907, %v1910
        %v1912 = vshrl.u32 %v1498, 16
        %v1914 = vor.u32 %v1912, %v1910
        %v1915 = vshll.u32 %v1499, 16
        %v1917 = vrot.slane %v1915, 1
        %v1918 = vsel %vm351, %v1914, %v1917
        %v1919 = vshrl.u32 %v1499, 16
        %v1921 = vor.u32 %v1919, %v1917
        %v1922 = vshll.u32 %v1500, 16
        %v1924 = vrot.slane %v1922, 1
        %v1925 = vsel %vm351, %v1921, %v1924
        %v1926 = vshrl.u32 %v1500, 16
        %v1928 = vor.u32 %v1926, %v1924
        %v1929 = vshll.u32 %v1501, 16
        %v1931 = vrot.slane %v1929, 1
        %v1932 = vsel %vm351, %v1928, %v1931
        %v1933 = vshrl.u32 %v1501, 16
        %v1935 = vor.u32 %v1933, %v1931
        %v1936 = vshll.u32 %v1502, 16
        %v1938 = vrot.slane %v1936, 1
        %v1939 = vsel %vm351, %v1935, %v1938
        %v1940 = vshrl.u32 %v1502, 16
        %v1942 = vor.u32 %v1940, %v1938
        %v1943 = vshll.u32 %v1503, 16
        %v1945 = vrot.slane %v1943, 1
        %v1946 = vsel %vm351, %v1942, %v1945
        %v1947 = vshrl.u32 %v1503, 16
        %v1949 = vor.u32 %v1947, %v1945
        %v1950 = vshll.u32 %v1504, 16
        %v1952 = vrot.slane %v1950, 1
        %v1953 = vsel %vm351, %v1949, %v1952
        %v1954 = vshrl.u32 %v1504, 16
        %v1956 = vor.u32 %v1954, %v1952
        %v1957 = vshll.u32 %v1505, 16
        %v1959 = vrot.slane %v1957, 1
        %v1960 = vsel %vm351, %v1956, %v1959
        %v1961 = vshrl.u32 %v1505, 16
        %v1963 = vor.u32 %v1961, %v1959
        %v1964 = vshll.u32 %v1506, 16
        %v1966 = vrot.slane %v1964, 1
        %v1967 = vsel %vm351, %v1963, %v1966
        %v1968 = vshrl.u32 %v1506, 16
        %v1970 = vor.u32 %v1968, %v1966
        %v1971 = vshll.u32 %v1507, 16
        %v1973 = vrot.slane %v1971, 1
        %v1974 = vsel %vm351, %v1970, %v1973
        %v1975 = vshrl.u32 %v1507, 16
        %v1977 = vor.u32 %v1975, %v1973
        %v1978 = vshll.u32 %v1508, 16
        %v1980 = vrot.slane %v1978, 1
        %v1981 = vsel %vm351, %v1977, %v1980
        %v1982 = vshrl.u32 %v1508, 16
        %v1984 = vor.u32 %v1982, %v1980
        %v1985 = vshll.u32 %v1509, 16
        %v1987 = vrot.slane %v1985, 1
        %v1988 = vsel %vm351, %v1984, %v1987
        %v1989 = vshrl.u32 %v1509, 16
        %v1991 = vor.u32 %v1989, %v1987
        %v1992 = vshll.u32 %v1510, 16
        %v1994 = vrot.slane %v1992, 1
        %v1995 = vsel %vm351, %v1991, %v1994
        %v1996 = vshrl.u32 %v1510, 16
        %v1998 = vor.u32 %v1996, %v1994
        %v2000 = vshll.u32 %v1829, 16
        %v2002 = vrot.slane %v2000, 1
        %v2003 = vsel %vm351, %v1998, %v2002
        %v2005 = vsel %vm548, %v1841, 0
        %v2008 = vsel %vm548, %v1848, 0
        %v2011 = vsel %vm548, %v1855, 0
        %v2014 = vsel %vm548, %v1862, 0
        %v2017 = vsel %vm548, %v1869, 0
        %v2020 = vsel %vm548, %v1876, 0
        %v2023 = vsel %vm548, %v1883, 0
        %v2026 = vsel %vm548, %v1890, 0
        %v2029 = vsel %vm548, %v1897, 0
        %v2032 = vsel %vm548, %v1904, 0
        %v2035 = vsel %vm548, %v1911, 0
        %v2038 = vsel %vm548, %v1918, 0
        %v2041 = vsel %vm548, %v1925, 0
        %v2044 = vsel %vm548, %v1932, 0
        %v2047 = vsel %vm548, %v1939, 0
        %v2050 = vsel %vm548, %v1946, 0
        %v2053 = vsel %vm548, %v1953, 0
        %v2056 = vsel %vm548, %v1960, 0
        %v2059 = vsel %vm548, %v1967, 0
        %v2062 = vsel %vm548, %v1974, 0
        %v2065 = vsel %vm548, %v1981, 0
        %v2068 = vsel %vm548, %v1988, 0
        %v2071 = vsel %vm548, %v1995, 0
        %v2074 = vsel %vm548, %v2003, 0
        %v2077 = vsel %vm621, %v1831, 0
        %2079 = vmatprep.subr.bf16.mxu0 0
        %2080 = vmatpush1.bf16.msra.mxu0 0
        %2081 = vmatprep.subr.bf16.mxu0 0
        %2082 = vmatpush1.bf16.msra.mxu0 0
        %2083 = vmatprep.subr.bf16.mxu0 0
        %2084 = vmatpush1.bf16.msra.mxu0 0
        %2085 = vmatprep.subr.bf16.mxu0 0
        %2086 = vmatpush1.bf16.msra.mxu0 0
        %2087 = vmatprep.subr.bf16.mxu0 0
        %2088 = vmatpush1.bf16.msra.mxu0 0
        %2089 = vmatprep.subr.bf16.mxu0 0
        %2090 = vmatpush1.bf16.msra.mxu0 0
        %2091 = vmatprep.subr.bf16.mxu0 0
        %2092 = vmatpush1.bf16.msra.mxu0 0
        %2093 = vmatprep.subr.bf16.mxu0 0
        %2094 = vmatpush1.bf16.msra.mxu0 %v2077
        %2095 = vmatprep.subr.bf16.mxu0 0
        %2096 = vmatpush2.bf16.msra.mxu0 0
        %2097 = vmatprep.subr.bf16.mxu0 0
        %2098 = vmatpush2.bf16.msra.mxu0 0
        %2099 = vmatprep.subr.bf16.mxu0 0
        %2100 = vmatpush2.bf16.msra.mxu0 0
        %2101 = vmatprep.subr.bf16.mxu0 0
        %2102 = vmatpush2.bf16.msra.mxu0 0
        %2103 = vmatprep.subr.bf16.mxu0 0
        %2104 = vmatpush2.bf16.msra.mxu0 0
        %2105 = vmatprep.subr.bf16.mxu0 0
        %2106 = vmatpush2.bf16.msra.mxu0 0
        %2107 = vmatprep.subr.bf16.mxu0 0
        %2108 = vmatpush2.bf16.msra.mxu0 0
        %2109 = vmatprep.subr.bf16.mxu0 0
        %2110 = vmatpush2.bf16.msra.mxu0 0
        %2111 = vmatprep.mubr.bf16.mxu0 0
        %2112 = vmatmul.mubr.bf16.gmra.mxu0 %v2005
        %v2113 = vpop.f32.mrf.mxu0
        %v2114 = vadd.f32 0.0, %v2113
        %v2115 = vpop.f32.mrf.mxu0
        %v2116 = vpop.f32.mrf.mxu0
        %v2117 = vadd.f32 0.0, %v2116
        %v2118 = vpop.f32.mrf.mxu0
        %2119 = vmatprep.mubr.bf16.mxu0 0
        %2120 = vmatmul.mubr.bf16.gmra.mxu0 %v2008
        %v2121 = vpop.f32.mrf.mxu0
        %v2122 = vpop.f32.mrf.mxu0
        %v2123 = vpop.f32.mrf.mxu0
        %v2124 = vadd.f32 0.0, %v2123
        %v2125 = vpop.f32.mrf.mxu0
        %2126 = vmatprep.mubr.bf16.mxu0 0
        %2127 = vmatmul.mubr.bf16.gmra.mxu0 %v2011
        %v2128 = vpop.f32.mrf.mxu0
        %v2129 = vadd.f32 0.0, %v2128
        %v2130 = vpop.f32.mrf.mxu0
        %v2131 = vpop.f32.mrf.mxu0
        %v2132 = vpop.f32.mrf.mxu0
        %2133 = vmatprep.mubr.bf16.mxu0 0
        %2134 = vmatmul.mubr.bf16.gmra.mxu0 %v2014
        %v2135 = vpop.f32.mrf.mxu0
        %v2136 = vadd.f32 0.0, %v2135
        %v2137 = vpop.f32.mrf.mxu0
        %v2138 = vpop.f32.mrf.mxu0
        %v2139 = vadd.f32 0.0, %v2138
        %v2140 = vpop.f32.mrf.mxu0
        %2141 = vmatprep.mubr.bf16.mxu0 0
        %2142 = vmatmul.mubr.bf16.gmra.mxu0 %v2017
        %v2143 = vpop.f32.mrf.mxu0
        %v2144 = vpop.f32.mrf.mxu0
        %v2145 = vpop.f32.mrf.mxu0
        %v2146 = vadd.f32 0.0, %v2145
        %v2147 = vpop.f32.mrf.mxu0
        %2148 = vmatprep.mubr.bf16.mxu0 0
        %2149 = vmatmul.mubr.bf16.gmra.mxu0 %v2020
        %v2150 = vpop.f32.mrf.mxu0
        %v2151 = vadd.f32 0.0, %v2150
        %v2152 = vpop.f32.mrf.mxu0
        %v2153 = vpop.f32.mrf.mxu0
        %v2154 = vpop.f32.mrf.mxu0
        %2155 = vmatprep.mubr.bf16.mxu0 0
        %2156 = vmatmul.mubr.bf16.gmra.mxu0 %v2023
        %v2157 = vpop.f32.mrf.mxu0
        %v2158 = vadd.f32 0.0, %v2157
        %v2159 = vpop.f32.mrf.mxu0
        %v2160 = vpop.f32.mrf.mxu0
        %v2161 = vadd.f32 0.0, %v2160
        %v2162 = vpop.f32.mrf.mxu0
        %2163 = vmatprep.mubr.bf16.mxu0 0
        %2164 = vmatmul.mubr.bf16.gmra.mxu0 %v2026
        %v2165 = vpop.f32.mrf.mxu0
        %v2166 = vpop.f32.mrf.mxu0
        %v2167 = vpop.f32.mrf.mxu0
        %v2168 = vadd.f32 0.0, %v2167
        %v2169 = vpop.f32.mrf.mxu0
        %2170 = vmatprep.mubr.bf16.mxu0 0
        %2171 = vmatmul.mubr.bf16.gmra.mxu0 %v2029
        %v2172 = vpop.f32.mrf.mxu0
        %v2173 = vadd.f32 0.0, %v2172
        %v2174 = vpop.f32.mrf.mxu0
        %v2175 = vpop.f32.mrf.mxu0
        %v2176 = vpop.f32.mrf.mxu0
        %2177 = vmatprep.mubr.bf16.mxu0 0
        %2178 = vmatmul.mubr.bf16.gmra.mxu0 %v2032
        %v2179 = vpop.f32.mrf.mxu0
        %v2180 = vadd.f32 0.0, %v2179
        %v2181 = vpop.f32.mrf.mxu0
        %v2182 = vpop.f32.mrf.mxu0
        %v2183 = vadd.f32 0.0, %v2182
        %v2184 = vpop.f32.mrf.mxu0
        %2185 = vmatprep.mubr.bf16.mxu0 0
        %2186 = vmatmul.mubr.bf16.gmra.mxu0 %v2035
        %v2187 = vpop.f32.mrf.mxu0
        %v2188 = vpop.f32.mrf.mxu0
        %v2189 = vpop.f32.mrf.mxu0
        %v2190 = vadd.f32 0.0, %v2189
        %v2191 = vpop.f32.mrf.mxu0
        %2192 = vmatprep.mubr.bf16.mxu0 0
        %2193 = vmatmul.mubr.bf16.gmra.mxu0 %v2038
        %v2194 = vpop.f32.mrf.mxu0
        %v2195 = vadd.f32 0.0, %v2194
        %v2196 = vpop.f32.mrf.mxu0
        %v2197 = vpop.f32.mrf.mxu0
        %v2198 = vpop.f32.mrf.mxu0
        %2199 = vmatprep.mubr.bf16.mxu0 0
        %2200 = vmatmul.mubr.bf16.gmra.mxu0 %v2041
        %v2201 = vpop.f32.mrf.mxu0
        %v2202 = vadd.f32 0.0, %v2201
        %v2203 = vpop.f32.mrf.mxu0
        %v2204 = vpop.f32.mrf.mxu0
        %v2205 = vadd.f32 0.0, %v2204
        %v2206 = vpop.f32.mrf.mxu0
        %2207 = vmatprep.mubr.bf16.mxu0 0
        %2208 = vmatmul.mubr.bf16.gmra.mxu0 %v2044
        %v2209 = vpop.f32.mrf.mxu0
        %v2210 = vpop.f32.mrf.mxu0
        %v2211 = vpop.f32.mrf.mxu0
        %v2212 = vadd.f32 0.0, %v2211
        %v2213 = vpop.f32.mrf.mxu0
        %2214 = vmatprep.mubr.bf16.mxu0 0
        %2215 = vmatmul.mubr.bf16.gmra.mxu0 %v2047
        %v2216 = vpop.f32.mrf.mxu0
        %v2217 = vadd.f32 0.0, %v2216
        %v2218 = vpop.f32.mrf.mxu0
        %v2219 = vpop.f32.mrf.mxu0
        %v2220 = vpop.f32.mrf.mxu0
        %2221 = vmatprep.mubr.bf16.mxu0 0
        %2222 = vmatmul.mubr.bf16.gmra.mxu0 %v2050
        %v2223 = vpop.f32.mrf.mxu0
        %v2224 = vadd.f32 0.0, %v2223
        %v2225 = vpop.f32.mrf.mxu0
        %v2226 = vpop.f32.mrf.mxu0
        %v2227 = vadd.f32 0.0, %v2226
        %v2228 = vpop.f32.mrf.mxu0
        %2229 = vmatprep.mubr.bf16.mxu0 0
        %2230 = vmatmul.mubr.bf16.gmra.mxu0 %v2053
        %v2231 = vpop.f32.mrf.mxu0
        %v2232 = vpop.f32.mrf.mxu0
        %v2233 = vpop.f32.mrf.mxu0
        %v2234 = vadd.f32 0.0, %v2233
        %v2235 = vpop.f32.mrf.mxu0
        %2236 = vmatprep.mubr.bf16.mxu0 0
        %2237 = vmatmul.mubr.bf16.gmra.mxu0 %v2056
        %v2238 = vpop.f32.mrf.mxu0
        %v2239 = vadd.f32 0.0, %v2238
        %v2240 = vpop.f32.mrf.mxu0
        %v2241 = vpop.f32.mrf.mxu0
        %v2242 = vpop.f32.mrf.mxu0
        %2243 = vmatprep.mubr.bf16.mxu0 0
        %2244 = vmatmul.mubr.bf16.gmra.mxu0 %v2059
        %v2245 = vpop.f32.mrf.mxu0
        %v2246 = vadd.f32 0.0, %v2245
        %v2247 = vpop.f32.mrf.mxu0
        %v2248 = vpop.f32.mrf.mxu0
        %v2249 = vadd.f32 0.0, %v2248
        %v2250 = vpop.f32.mrf.mxu0
        %2251 = vmatprep.mubr.bf16.mxu0 0
        %2252 = vmatmul.mubr.bf16.gmra.mxu0 %v2062
        %v2253 = vpop.f32.mrf.mxu0
        %v2254 = vpop.f32.mrf.mxu0
        %v2255 = vpop.f32.mrf.mxu0
        %v2256 = vadd.f32 0.0, %v2255
        %v2257 = vpop.f32.mrf.mxu0
        %2258 = vmatprep.mubr.bf16.mxu0 0
        %2259 = vmatmul.mubr.bf16.gmra.mxu0 %v2065
        %v2260 = vpop.f32.mrf.mxu0
        %v2261 = vadd.f32 0.0, %v2260
        %v2262 = vpop.f32.mrf.mxu0
        %v2263 = vpop.f32.mrf.mxu0
        %v2264 = vpop.f32.mrf.mxu0
        %2265 = vmatprep.mubr.bf16.mxu0 0
        %2266 = vmatmul.mubr.bf16.gmra.mxu0 %v2068
        %v2267 = vpop.f32.mrf.mxu0
        %v2268 = vadd.f32 0.0, %v2267
        %v2269 = vpop.f32.mrf.mxu0
        %v2270 = vpop.f32.mrf.mxu0
        %v2271 = vadd.f32 0.0, %v2270
        %v2272 = vpop.f32.mrf.mxu0
        %2273 = vmatprep.mubr.bf16.mxu0 0
        %2274 = vmatmul.mubr.bf16.gmra.mxu0 %v2071
        %v2275 = vpop.f32.mrf.mxu0
        %v2276 = vpop.f32.mrf.mxu0
        %v2277 = vpop.f32.mrf.mxu0
        %v2278 = vadd.f32 0.0, %v2277
        %v2279 = vpop.f32.mrf.mxu0
        %2280 = vmatprep.mubr.bf16.mxu0 0
        %2281 = vmatmul.mubr.bf16.gmra.mxu0 %v2074
        %v2282 = vpop.f32.mrf.mxu0
        %v2283 = vadd.f32 0.0, %v2282
        %v2284 = vpop.f32.mrf.mxu0
        %v2285 = vpop.f32.mrf.mxu0
        %v2286 = vpop.f32.mrf.mxu0
        %2287 = vdwg.mxu0
        %v2288 = vadd.f32 %v1797, %v2114
        %v2289 = vadd.f32 %v1798, %v2117
        %v2290 = vadd.f32 %v1799, %v2124
        %v2291 = vadd.f32 %v1800, %v2129
        %v2292 = vadd.f32 %v1801, %v2136
        %v2293 = vadd.f32 %v1802, %v2139
        %v2294 = vadd.f32 %v1803, %v2146
        %v2295 = vadd.f32 %v1804, %v2151
        %v2296 = vadd.f32 %v1805, %v2158
        %v2297 = vadd.f32 %v1806, %v2161
        %v2298 = vadd.f32 %v1807, %v2168
        %v2299 = vadd.f32 %v1808, %v2173
        %v2300 = vadd.f32 %v1809, %v2180
        %v2301 = vadd.f32 %v1810, %v2183
        %v2302 = vadd.f32 %v1811, %v2190
        %v2303 = vadd.f32 %v1812, %v2195
        %v2304 = vadd.f32 %v1813, %v2202
        %v2305 = vadd.f32 %v1814, %v2205
        %v2306 = vadd.f32 %v1815, %v2212
        %v2307 = vadd.f32 %v1816, %v2217
        %v2308 = vadd.f32 %v1817, %v2224
        %v2309 = vadd.f32 %v1818, %v2227
        %v2310 = vadd.f32 %v1819, %v2234
        %v2311 = vadd.f32 %v1820, %v2239
        %v2312 = vadd.f32 %v1821, %v2246
        %v2313 = vadd.f32 %v1822, %v2249
        %v2314 = vadd.f32 %v1823, %v2256
        %v2315 = vadd.f32 %v1824, %v2261
        %v2316 = vadd.f32 %v1825, %v2268
        %v2317 = vadd.f32 %v1826, %v2271
        %v2318 = vadd.f32 %v1827, %v2278
        %v2319 = vadd.f32 %v1828, %v2283
        %s2320 = scalar_lea.vmem %s1, 10
        %v2321 = vld [vmem:[%s2320] sm:$0x3]
        %v2347 = vrot.slane %v1487, 1
        %v2348 = vrot.slane %v1488, 1
        %v2349 = vsel %vm1121, %v2347, %v2348
        %v2350 = vrot.slane %v1489, 1
        %v2351 = vsel %vm1121, %v2348, %v2350
        %v2352 = vrot.slane %v1490, 1
        %v2353 = vsel %vm1121, %v2350, %v2352
        %v2354 = vrot.slane %v1491, 1
        %v2355 = vsel %vm1121, %v2352, %v2354
        %v2356 = vrot.slane %v1492, 1
        %v2357 = vsel %vm1121, %v2354, %v2356
        %v2358 = vrot.slane %v1493, 1
        %v2359 = vsel %vm1121, %v2356, %v2358
        %v2360 = vrot.slane %v1494, 1
        %v2361 = vsel %vm1121, %v2358, %v2360
        %v2362 = vrot.slane %v1495, 1
        %v2363 = vsel %vm1121, %v2360, %v2362
        %v2364 = vrot.slane %v1496, 1
        %v2365 = vsel %vm1121, %v2362, %v2364
        %v2366 = vrot.slane %v1497, 1
        %v2367 = vsel %vm1121, %v2364, %v2366
        %v2368 = vrot.slane %v1498, 1
        %v2369 = vsel %vm1121, %v2366, %v2368
        %v2370 = vrot.slane %v1499, 1
        %v2371 = vsel %vm1121, %v2368, %v2370
        %v2372 = vrot.slane %v1500, 1
        %v2373 = vsel %vm1121, %v2370, %v2372
        %v2374 = vrot.slane %v1501, 1
        %v2375 = vsel %vm1121, %v2372, %v2374
        %v2376 = vrot.slane %v1502, 1
        %v2377 = vsel %vm1121, %v2374, %v2376
        %v2378 = vrot.slane %v1503, 1
        %v2379 = vsel %vm1121, %v2376, %v2378
        %v2380 = vrot.slane %v1504, 1
        %v2381 = vsel %vm1121, %v2378, %v2380
        %v2382 = vrot.slane %v1505, 1
        %v2383 = vsel %vm1121, %v2380, %v2382
        %v2384 = vrot.slane %v1506, 1
        %v2385 = vsel %vm1121, %v2382, %v2384
        %v2386 = vrot.slane %v1507, 1
        %v2387 = vsel %vm1121, %v2384, %v2386
        %v2388 = vrot.slane %v1508, 1
        %v2389 = vsel %vm1121, %v2386, %v2388
        %v2390 = vrot.slane %v1509, 1
        %v2391 = vsel %vm1121, %v2388, %v2390
        %v2392 = vrot.slane %v1510, 1
        %v2393 = vsel %vm1121, %v2390, %v2392
        %v2394 = vrot.slane %v1829, 1
        %v2395 = vsel %vm1121, %v2392, %v2394
        %v2397 = vsel %vm548, %v2349, 0
        %v2400 = vsel %vm548, %v2351, 0
        %v2403 = vsel %vm548, %v2353, 0
        %v2406 = vsel %vm548, %v2355, 0
        %v2409 = vsel %vm548, %v2357, 0
        %v2412 = vsel %vm548, %v2359, 0
        %v2415 = vsel %vm548, %v2361, 0
        %v2418 = vsel %vm548, %v2363, 0
        %v2421 = vsel %vm548, %v2365, 0
        %v2424 = vsel %vm548, %v2367, 0
        %v2427 = vsel %vm548, %v2369, 0
        %v2430 = vsel %vm548, %v2371, 0
        %v2433 = vsel %vm548, %v2373, 0
        %v2436 = vsel %vm548, %v2375, 0
        %v2439 = vsel %vm548, %v2377, 0
        %v2442 = vsel %vm548, %v2379, 0
        %v2445 = vsel %vm548, %v2381, 0
        %v2448 = vsel %vm548, %v2383, 0
        %v2451 = vsel %vm548, %v2385, 0
        %v2454 = vsel %vm548, %v2387, 0
        %v2457 = vsel %vm548, %v2389, 0
        %v2460 = vsel %vm548, %v2391, 0
        %v2463 = vsel %vm548, %v2393, 0
        %v2466 = vsel %vm548, %v2395, 0
        %v2469 = vsel %vm621, %v2321, 0
        %2471 = vmatprep.subr.bf16.mxu0 0
        %2472 = vmatpush1.bf16.msra.mxu0 0
        %2473 = vmatprep.subr.bf16.mxu0 0
        %2474 = vmatpush1.bf16.msra.mxu0 0
        %2475 = vmatprep.subr.bf16.mxu0 0
        %2476 = vmatpush1.bf16.msra.mxu0 0
        %2477 = vmatprep.subr.bf16.mxu0 0
        %2478 = vmatpush1.bf16.msra.mxu0 0
        %2479 = vmatprep.subr.bf16.mxu0 0
        %2480 = vmatpush1.bf16.msra.mxu0 0
        %2481 = vmatprep.subr.bf16.mxu0 0
        %2482 = vmatpush1.bf16.msra.mxu0 0
        %2483 = vmatprep.subr.bf16.mxu0 0
        %2484 = vmatpush1.bf16.msra.mxu0 0
        %2485 = vmatprep.subr.bf16.mxu0 0
        %2486 = vmatpush1.bf16.msra.mxu0 %v2469
        %2487 = vmatprep.subr.bf16.mxu0 0
        %2488 = vmatpush2.bf16.msra.mxu0 0
        %2489 = vmatprep.subr.bf16.mxu0 0
        %2490 = vmatpush2.bf16.msra.mxu0 0
        %2491 = vmatprep.subr.bf16.mxu0 0
        %2492 = vmatpush2.bf16.msra.mxu0 0
        %2493 = vmatprep.subr.bf16.mxu0 0
        %2494 = vmatpush2.bf16.msra.mxu0 0
        %2495 = vmatprep.subr.bf16.mxu0 0
        %2496 = vmatpush2.bf16.msra.mxu0 0
        %2497 = vmatprep.subr.bf16.mxu0 0
        %2498 = vmatpush2.bf16.msra.mxu0 0
        %2499 = vmatprep.subr.bf16.mxu0 0
        %2500 = vmatpush2.bf16.msra.mxu0 0
        %2501 = vmatprep.subr.bf16.mxu0 0
        %2502 = vmatpush2.bf16.msra.mxu0 0
        %2503 = vmatprep.mubr.bf16.mxu0 0
        %2504 = vmatmul.mubr.bf16.gmra.mxu0 %v2397
        %v2505 = vpop.f32.mrf.mxu0
        %v2506 = vadd.f32 0.0, %v2505
        %v2507 = vpop.f32.mrf.mxu0
        %v2508 = vpop.f32.mrf.mxu0
        %v2509 = vadd.f32 0.0, %v2508
        %v2510 = vpop.f32.mrf.mxu0
        %2511 = vmatprep.mubr.bf16.mxu0 0
        %2512 = vmatmul.mubr.bf16.gmra.mxu0 %v2400
        %v2513 = vpop.f32.mrf.mxu0
        %v2514 = vpop.f32.mrf.mxu0
        %v2515 = vpop.f32.mrf.mxu0
        %v2516 = vadd.f32 0.0, %v2515
        %v2517 = vpop.f32.mrf.mxu0
        %2518 = vmatprep.mubr.bf16.mxu0 0
        %2519 = vmatmul.mubr.bf16.gmra.mxu0 %v2403
        %v2520 = vpop.f32.mrf.mxu0
        %v2521 = vadd.f32 0.0, %v2520
        %v2522 = vpop.f32.mrf.mxu0
        %v2523 = vpop.f32.mrf.mxu0
        %v2524 = vpop.f32.mrf.mxu0
        %2525 = vmatprep.mubr.bf16.mxu0 0
        %2526 = vmatmul.mubr.bf16.gmra.mxu0 %v2406
        %v2527 = vpop.f32.mrf.mxu0
        %v2528 = vadd.f32 0.0, %v2527
        %v2529 = vpop.f32.mrf.mxu0
        %v2530 = vpop.f32.mrf.mxu0
        %v2531 = vadd.f32 0.0, %v2530
        %v2532 = vpop.f32.mrf.mxu0
        %2533 = vmatprep.mubr.bf16.mxu0 0
        %2534 = vmatmul.mubr.bf16.gmra.mxu0 %v2409
        %v2535 = vpop.f32.mrf.mxu0
        %v2536 = vpop.f32.mrf.mxu0
        %v2537 = vpop.f32.mrf.mxu0
        %v2538 = vadd.f32 0.0, %v2537
        %v2539 = vpop.f32.mrf.mxu0
        %2540 = vmatprep.mubr.bf16.mxu0 0
        %2541 = vmatmul.mubr.bf16.gmra.mxu0 %v2412
        %v2542 = vpop.f32.mrf.mxu0
        %v2543 = vadd.f32 0.0, %v2542
        %v2544 = vpop.f32.mrf.mxu0
        %v2545 = vpop.f32.mrf.mxu0
        %v2546 = vpop.f32.mrf.mxu0
        %2547 = vmatprep.mubr.bf16.mxu0 0
        %2548 = vmatmul.mubr.bf16.gmra.mxu0 %v2415
        %v2549 = vpop.f32.mrf.mxu0
        %v2550 = vadd.f32 0.0, %v2549
        %v2551 = vpop.f32.mrf.mxu0
        %v2552 = vpop.f32.mrf.mxu0
        %v2553 = vadd.f32 0.0, %v2552
        %v2554 = vpop.f32.mrf.mxu0
        %2555 = vmatprep.mubr.bf16.mxu0 0
        %2556 = vmatmul.mubr.bf16.gmra.mxu0 %v2418
        %v2557 = vpop.f32.mrf.mxu0
        %v2558 = vpop.f32.mrf.mxu0
        %v2559 = vpop.f32.mrf.mxu0
        %v2560 = vadd.f32 0.0, %v2559
        %v2561 = vpop.f32.mrf.mxu0
        %2562 = vmatprep.mubr.bf16.mxu0 0
        %2563 = vmatmul.mubr.bf16.gmra.mxu0 %v2421
        %v2564 = vpop.f32.mrf.mxu0
        %v2565 = vadd.f32 0.0, %v2564
        %v2566 = vpop.f32.mrf.mxu0
        %v2567 = vpop.f32.mrf.mxu0
        %v2568 = vpop.f32.mrf.mxu0
        %2569 = vmatprep.mubr.bf16.mxu0 0
        %2570 = vmatmul.mubr.bf16.gmra.mxu0 %v2424
        %v2571 = vpop.f32.mrf.mxu0
        %v2572 = vadd.f32 0.0, %v2571
        %v2573 = vpop.f32.mrf.mxu0
        %v2574 = vpop.f32.mrf.mxu0
        %v2575 = vadd.f32 0.0, %v2574
        %v2576 = vpop.f32.mrf.mxu0
        %2577 = vmatprep.mubr.bf16.mxu0 0
        %2578 = vmatmul.mubr.bf16.gmra.mxu0 %v2427
        %v2579 = vpop.f32.mrf.mxu0
        %v2580 = vpop.f32.mrf.mxu0
        %v2581 = vpop.f32.mrf.mxu0
        %v2582 = vadd.f32 0.0, %v2581
        %v2583 = vpop.f32.mrf.mxu0
        %2584 = vmatprep.mubr.bf16.mxu0 0
        %2585 = vmatmul.mubr.bf16.gmra.mxu0 %v2430
        %v2586 = vpop.f32.mrf.mxu0
        %v2587 = vadd.f32 0.0, %v2586
        %v2588 = vpop.f32.mrf.mxu0
        %v2589 = vpop.f32.mrf.mxu0
        %v2590 = vpop.f32.mrf.mxu0
        %2591 = vmatprep.mubr.bf16.mxu0 0
        %2592 = vmatmul.mubr.bf16.gmra.mxu0 %v2433
        %v2593 = vpop.f32.mrf.mxu0
        %v2594 = vadd.f32 0.0, %v2593
        %v2595 = vpop.f32.mrf.mxu0
        %v2596 = vpop.f32.mrf.mxu0
        %v2597 = vadd.f32 0.0, %v2596
        %v2598 = vpop.f32.mrf.mxu0
        %2599 = vmatprep.mubr.bf16.mxu0 0
        %2600 = vmatmul.mubr.bf16.gmra.mxu0 %v2436
        %v2601 = vpop.f32.mrf.mxu0
        %v2602 = vpop.f32.mrf.mxu0
        %v2603 = vpop.f32.mrf.mxu0
        %v2604 = vadd.f32 0.0, %v2603
        %v2605 = vpop.f32.mrf.mxu0
        %2606 = vmatprep.mubr.bf16.mxu0 0
        %2607 = vmatmul.mubr.bf16.gmra.mxu0 %v2439
        %v2608 = vpop.f32.mrf.mxu0
        %v2609 = vadd.f32 0.0, %v2608
        %v2610 = vpop.f32.mrf.mxu0
        %v2611 = vpop.f32.mrf.mxu0
        %v2612 = vpop.f32.mrf.mxu0
        %2613 = vmatprep.mubr.bf16.mxu0 0
        %2614 = vmatmul.mubr.bf16.gmra.mxu0 %v2442
        %v2615 = vpop.f32.mrf.mxu0
        %v2616 = vadd.f32 0.0, %v2615
        %v2617 = vpop.f32.mrf.mxu0
        %v2618 = vpop.f32.mrf.mxu0
        %v2619 = vadd.f32 0.0, %v2618
        %v2620 = vpop.f32.mrf.mxu0
        %2621 = vmatprep.mubr.bf16.mxu0 0
        %2622 = vmatmul.mubr.bf16.gmra.mxu0 %v2445
        %v2623 = vpop.f32.mrf.mxu0
        %v2624 = vpop.f32.mrf.mxu0
        %v2625 = vpop.f32.mrf.mxu0
        %v2626 = vadd.f32 0.0, %v2625
        %v2627 = vpop.f32.mrf.mxu0
        %2628 = vmatprep.mubr.bf16.mxu0 0
        %2629 = vmatmul.mubr.bf16.gmra.mxu0 %v2448
        %v2630 = vpop.f32.mrf.mxu0
        %v2631 = vadd.f32 0.0, %v2630
        %v2632 = vpop.f32.mrf.mxu0
        %v2633 = vpop.f32.mrf.mxu0
        %v2634 = vpop.f32.mrf.mxu0
        %2635 = vmatprep.mubr.bf16.mxu0 0
        %2636 = vmatmul.mubr.bf16.gmra.mxu0 %v2451
        %v2637 = vpop.f32.mrf.mxu0
        %v2638 = vadd.f32 0.0, %v2637
        %v2639 = vpop.f32.mrf.mxu0
        %v2640 = vpop.f32.mrf.mxu0
        %v2641 = vadd.f32 0.0, %v2640
        %v2642 = vpop.f32.mrf.mxu0
        %2643 = vmatprep.mubr.bf16.mxu0 0
        %2644 = vmatmul.mubr.bf16.gmra.mxu0 %v2454
        %v2645 = vpop.f32.mrf.mxu0
        %v2646 = vpop.f32.mrf.mxu0
        %v2647 = vpop.f32.mrf.mxu0
        %v2648 = vadd.f32 0.0, %v2647
        %v2649 = vpop.f32.mrf.mxu0
        %2650 = vmatprep.mubr.bf16.mxu0 0
        %2651 = vmatmul.mubr.bf16.gmra.mxu0 %v2457
        %v2652 = vpop.f32.mrf.mxu0
        %v2653 = vadd.f32 0.0, %v2652
        %v2654 = vpop.f32.mrf.mxu0
        %v2655 = vpop.f32.mrf.mxu0
        %v2656 = vpop.f32.mrf.mxu0
        %2657 = vmatprep.mubr.bf16.mxu0 0
        %2658 = vmatmul.mubr.bf16.gmra.mxu0 %v2460
        %v2659 = vpop.f32.mrf.mxu0
        %v2660 = vadd.f32 0.0, %v2659
        %v2661 = vpop.f32.mrf.mxu0
        %v2662 = vpop.f32.mrf.mxu0
        %v2663 = vadd.f32 0.0, %v2662
        %v2664 = vpop.f32.mrf.mxu0
        %2665 = vmatprep.mubr.bf16.mxu0 0
        %2666 = vmatmul.mubr.bf16.gmra.mxu0 %v2463
        %v2667 = vpop.f32.mrf.mxu0
        %v2668 = vpop.f32.mrf.mxu0
        %v2669 = vpop.f32.mrf.mxu0
        %v2670 = vadd.f32 0.0, %v2669
        %v2671 = vpop.f32.mrf.mxu0
        %2672 = vmatprep.mubr.bf16.mxu0 0
        %2673 = vmatmul.mubr.bf16.gmra.mxu0 %v2466
        %v2674 = vpop.f32.mrf.mxu0
        %v2675 = vadd.f32 0.0, %v2674
        %v2676 = vpop.f32.mrf.mxu0
        %v2677 = vpop.f32.mrf.mxu0
        %v2678 = vpop.f32.mrf.mxu0
        %2679 = vdwg.mxu0
        %v2680 = vadd.f32 %v2288, %v2506
        %v2681 = vadd.f32 %v2289, %v2509
        %v2682 = vadd.f32 %v2290, %v2516
        %v2683 = vadd.f32 %v2291, %v2521
        %v2684 = vadd.f32 %v2292, %v2528
        %v2685 = vadd.f32 %v2293, %v2531
        %v2686 = vadd.f32 %v2294, %v2538
        %v2687 = vadd.f32 %v2295, %v2543
        %v2688 = vadd.f32 %v2296, %v2550
        %v2689 = vadd.f32 %v2297, %v2553
        %v2690 = vadd.f32 %v2298, %v2560
        %v2691 = vadd.f32 %v2299, %v2565
        %v2692 = vadd.f32 %v2300, %v2572
        %v2693 = vadd.f32 %v2301, %v2575
        %v2694 = vadd.f32 %v2302, %v2582
        %v2695 = vadd.f32 %v2303, %v2587
        %v2696 = vadd.f32 %v2304, %v2594
        %v2697 = vadd.f32 %v2305, %v2597
        %v2698 = vadd.f32 %v2306, %v2604
        %v2699 = vadd.f32 %v2307, %v2609
        %v2700 = vadd.f32 %v2308, %v2616
        %v2701 = vadd.f32 %v2309, %v2619
        %v2702 = vadd.f32 %v2310, %v2626
        %v2703 = vadd.f32 %v2311, %v2631
        %v2704 = vadd.f32 %v2312, %v2638
        %v2705 = vadd.f32 %v2313, %v2641
        %v2706 = vadd.f32 %v2314, %v2648
        %v2707 = vadd.f32 %v2315, %v2653
        %v2708 = vadd.f32 %v2316, %v2660
        %v2709 = vadd.f32 %v2317, %v2663
        %v2710 = vadd.f32 %v2318, %v2670
        %v2711 = vadd.f32 %v2319, %v2675
        %v2712 = vpack.c.bf16 %v317, %v316
        %v2713 = vpack.c.bf16 %v319, %v318
        %v2714 = vpack.c.bf16 %v321, %v320
        %s2715 = scalar_lea.vmem %s1, 12
        %v2716 = vld [vmem:[%s2715] sm:$0x3]
        %v2718 = vsel %vm548, %v2712, 0
        %v2721 = vsel %vm548, %v2713, 0
        %v2724 = vsel %vm548, %v2714, 0
        %v2727 = vsel %vm621, %v2716, 0
        %2729 = vmatprep.subr.bf16.mxu0 0
        %2730 = vmatpush1.bf16.msra.mxu0 0
        %2731 = vmatprep.subr.bf16.mxu0 0
        %2732 = vmatpush1.bf16.msra.mxu0 0
        %2733 = vmatprep.subr.bf16.mxu0 0
        %2734 = vmatpush1.bf16.msra.mxu0 0
        %2735 = vmatprep.subr.bf16.mxu0 0
        %2736 = vmatpush1.bf16.msra.mxu0 0
        %2737 = vmatprep.subr.bf16.mxu0 0
        %2738 = vmatpush1.bf16.msra.mxu0 0
        %2739 = vmatprep.subr.bf16.mxu0 0
        %2740 = vmatpush1.bf16.msra.mxu0 0
        %2741 = vmatprep.subr.bf16.mxu0 0
        %2742 = vmatpush1.bf16.msra.mxu0 0
        %2743 = vmatprep.subr.bf16.mxu0 0
        %2744 = vmatpush1.bf16.msra.mxu0 %v2727
        %2745 = vmatprep.subr.bf16.mxu0 0
        %2746 = vmatpush2.bf16.msra.mxu0 0
        %2747 = vmatprep.subr.bf16.mxu0 0
        %2748 = vmatpush2.bf16.msra.mxu0 0
        %2749 = vmatprep.subr.bf16.mxu0 0
        %2750 = vmatpush2.bf16.msra.mxu0 0
        %2751 = vmatprep.subr.bf16.mxu0 0
        %2752 = vmatpush2.bf16.msra.mxu0 0
        %2753 = vmatprep.subr.bf16.mxu0 0
        %2754 = vmatpush2.bf16.msra.mxu0 0
        %2755 = vmatprep.subr.bf16.mxu0 0
        %2756 = vmatpush2.bf16.msra.mxu0 0
        %2757 = vmatprep.subr.bf16.mxu0 0
        %2758 = vmatpush2.bf16.msra.mxu0 0
        %2759 = vmatprep.subr.bf16.mxu0 0
        %2760 = vmatpush2.bf16.msra.mxu0 0
        %2761 = vmatprep.mubr.bf16.mxu0 0
        %2762 = vmatmul.mubr.bf16.gmra.mxu0 %v840
        %v2763 = vpop.f32.mrf.mxu0
        %v2764 = vadd.f32 0.0, %v2763
        %v2765 = vpop.f32.mrf.mxu0
        %v2766 = vpop.f32.mrf.mxu0
        %v2767 = vadd.f32 0.0, %v2766
        %v2768 = vpop.f32.mrf.mxu0
        %2769 = vmatprep.mubr.bf16.mxu0 0
        %2770 = vmatmul.mubr.bf16.gmra.mxu0 %v842
        %v2771 = vpop.f32.mrf.mxu0
        %v2772 = vpop.f32.mrf.mxu0
        %v2773 = vpop.f32.mrf.mxu0
        %v2774 = vadd.f32 0.0, %v2773
        %v2775 = vpop.f32.mrf.mxu0
        %2776 = vmatprep.mubr.bf16.mxu0 0
        %2777 = vmatmul.mubr.bf16.gmra.mxu0 %v844
        %v2778 = vpop.f32.mrf.mxu0
        %v2779 = vadd.f32 0.0, %v2778
        %v2780 = vpop.f32.mrf.mxu0
        %v2781 = vpop.f32.mrf.mxu0
        %v2782 = vpop.f32.mrf.mxu0
        %2783 = vmatprep.mubr.bf16.mxu0 0
        %2784 = vmatmul.mubr.bf16.gmra.mxu0 %v846
        %v2785 = vpop.f32.mrf.mxu0
        %v2786 = vadd.f32 0.0, %v2785
        %v2787 = vpop.f32.mrf.mxu0
        %v2788 = vpop.f32.mrf.mxu0
        %v2789 = vadd.f32 0.0, %v2788
        %v2790 = vpop.f32.mrf.mxu0
        %2791 = vmatprep.mubr.bf16.mxu0 0
        %2792 = vmatmul.mubr.bf16.gmra.mxu0 %v848
        %v2793 = vpop.f32.mrf.mxu0
        %v2794 = vpop.f32.mrf.mxu0
        %v2795 = vpop.f32.mrf.mxu0
        %v2796 = vadd.f32 0.0, %v2795
        %v2797 = vpop.f32.mrf.mxu0
        %2798 = vmatprep.mubr.bf16.mxu0 0
        %2799 = vmatmul.mubr.bf16.gmra.mxu0 %v850
        %v2800 = vpop.f32.mrf.mxu0
        %v2801 = vadd.f32 0.0, %v2800
        %v2802 = vpop.f32.mrf.mxu0
        %v2803 = vpop.f32.mrf.mxu0
        %v2804 = vpop.f32.mrf.mxu0
        %2805 = vmatprep.mubr.bf16.mxu0 0
        %2806 = vmatmul.mubr.bf16.gmra.mxu0 %v852
        %v2807 = vpop.f32.mrf.mxu0
        %v2808 = vadd.f32 0.0, %v2807
        %v2809 = vpop.f32.mrf.mxu0
        %v2810 = vpop.f32.mrf.mxu0
        %v2811 = vadd.f32 0.0, %v2810
        %v2812 = vpop.f32.mrf.mxu0
        %2813 = vmatprep.mubr.bf16.mxu0 0
        %2814 = vmatmul.mubr.bf16.gmra.mxu0 %v854
        %v2815 = vpop.f32.mrf.mxu0
        %v2816 = vpop.f32.mrf.mxu0
        %v2817 = vpop.f32.mrf.mxu0
        %v2818 = vadd.f32 0.0, %v2817
        %v2819 = vpop.f32.mrf.mxu0
        %2820 = vmatprep.mubr.bf16.mxu0 0
        %2821 = vmatmul.mubr.bf16.gmra.mxu0 %v856
        %v2822 = vpop.f32.mrf.mxu0
        %v2823 = vadd.f32 0.0, %v2822
        %v2824 = vpop.f32.mrf.mxu0
        %v2825 = vpop.f32.mrf.mxu0
        %v2826 = vpop.f32.mrf.mxu0
        %2827 = vmatprep.mubr.bf16.mxu0 0
        %2828 = vmatmul.mubr.bf16.gmra.mxu0 %v858
        %v2829 = vpop.f32.mrf.mxu0
        %v2830 = vadd.f32 0.0, %v2829
        %v2831 = vpop.f32.mrf.mxu0
        %v2832 = vpop.f32.mrf.mxu0
        %v2833 = vadd.f32 0.0, %v2832
        %v2834 = vpop.f32.mrf.mxu0
        %2835 = vmatprep.mubr.bf16.mxu0 0
        %2836 = vmatmul.mubr.bf16.gmra.mxu0 %v860
        %v2837 = vpop.f32.mrf.mxu0
        %v2838 = vpop.f32.mrf.mxu0
        %v2839 = vpop.f32.mrf.mxu0
        %v2840 = vadd.f32 0.0, %v2839
        %v2841 = vpop.f32.mrf.mxu0
        %2842 = vmatprep.mubr.bf16.mxu0 0
        %2843 = vmatmul.mubr.bf16.gmra.mxu0 %v862
        %v2844 = vpop.f32.mrf.mxu0
        %v2845 = vadd.f32 0.0, %v2844
        %v2846 = vpop.f32.mrf.mxu0
        %v2847 = vpop.f32.mrf.mxu0
        %v2848 = vpop.f32.mrf.mxu0
        %2849 = vmatprep.mubr.bf16.mxu0 0
        %2850 = vmatmul.mubr.bf16.gmra.mxu0 %v864
        %v2851 = vpop.f32.mrf.mxu0
        %v2852 = vadd.f32 0.0, %v2851
        %v2853 = vpop.f32.mrf.mxu0
        %v2854 = vpop.f32.mrf.mxu0
        %v2855 = vadd.f32 0.0, %v2854
        %v2856 = vpop.f32.mrf.mxu0
        %2857 = vmatprep.mubr.bf16.mxu0 0
        %2858 = vmatmul.mubr.bf16.gmra.mxu0 %v866
        %v2859 = vpop.f32.mrf.mxu0
        %v2860 = vpop.f32.mrf.mxu0
        %v2861 = vpop.f32.mrf.mxu0
        %v2862 = vadd.f32 0.0, %v2861
        %v2863 = vpop.f32.mrf.mxu0
        %2864 = vmatprep.mubr.bf16.mxu0 0
        %2865 = vmatmul.mubr.bf16.gmra.mxu0 %v868
        %v2866 = vpop.f32.mrf.mxu0
        %v2867 = vadd.f32 0.0, %v2866
        %v2868 = vpop.f32.mrf.mxu0
        %v2869 = vpop.f32.mrf.mxu0
        %v2870 = vpop.f32.mrf.mxu0
        %2871 = vmatprep.mubr.bf16.mxu0 0
        %2872 = vmatmul.mubr.bf16.gmra.mxu0 %v870
        %v2873 = vpop.f32.mrf.mxu0
        %v2874 = vadd.f32 0.0, %v2873
        %v2875 = vpop.f32.mrf.mxu0
        %v2876 = vpop.f32.mrf.mxu0
        %v2877 = vadd.f32 0.0, %v2876
        %v2878 = vpop.f32.mrf.mxu0
        %2879 = vmatprep.mubr.bf16.mxu0 0
        %2880 = vmatmul.mubr.bf16.gmra.mxu0 %v872
        %v2881 = vpop.f32.mrf.mxu0
        %v2882 = vpop.f32.mrf.mxu0
        %v2883 = vpop.f32.mrf.mxu0
        %v2884 = vadd.f32 0.0, %v2883
        %v2885 = vpop.f32.mrf.mxu0
        %2886 = vmatprep.mubr.bf16.mxu0 0
        %2887 = vmatmul.mubr.bf16.gmra.mxu0 %v874
        %v2888 = vpop.f32.mrf.mxu0
        %v2889 = vadd.f32 0.0, %v2888
        %v2890 = vpop.f32.mrf.mxu0
        %v2891 = vpop.f32.mrf.mxu0
        %v2892 = vpop.f32.mrf.mxu0
        %2893 = vmatprep.mubr.bf16.mxu0 0
        %2894 = vmatmul.mubr.bf16.gmra.mxu0 %v876
        %v2895 = vpop.f32.mrf.mxu0
        %v2896 = vadd.f32 0.0, %v2895
        %v2897 = vpop.f32.mrf.mxu0
        %v2898 = vpop.f32.mrf.mxu0
        %v2899 = vadd.f32 0.0, %v2898
        %v2900 = vpop.f32.mrf.mxu0
        %2901 = vmatprep.mubr.bf16.mxu0 0
        %2902 = vmatmul.mubr.bf16.gmra.mxu0 %v878
        %v2903 = vpop.f32.mrf.mxu0
        %v2904 = vpop.f32.mrf.mxu0
        %v2905 = vpop.f32.mrf.mxu0
        %v2906 = vadd.f32 0.0, %v2905
        %v2907 = vpop.f32.mrf.mxu0
        %2908 = vmatprep.mubr.bf16.mxu0 0
        %2909 = vmatmul.mubr.bf16.gmra.mxu0 %v880
        %v2910 = vpop.f32.mrf.mxu0
        %v2911 = vadd.f32 0.0, %v2910
        %v2912 = vpop.f32.mrf.mxu0
        %v2913 = vpop.f32.mrf.mxu0
        %v2914 = vpop.f32.mrf.mxu0
        %2915 = vmatprep.mubr.bf16.mxu0 0
        %2916 = vmatmul.mubr.bf16.gmra.mxu0 %v2718
        %v2917 = vpop.f32.mrf.mxu0
        %v2918 = vadd.f32 0.0, %v2917
        %v2919 = vpop.f32.mrf.mxu0
        %v2920 = vpop.f32.mrf.mxu0
        %v2921 = vadd.f32 0.0, %v2920
        %v2922 = vpop.f32.mrf.mxu0
        %2923 = vmatprep.mubr.bf16.mxu0 0
        %2924 = vmatmul.mubr.bf16.gmra.mxu0 %v2721
        %v2925 = vpop.f32.mrf.mxu0
        %v2926 = vpop.f32.mrf.mxu0
        %v2927 = vpop.f32.mrf.mxu0
        %v2928 = vadd.f32 0.0, %v2927
        %v2929 = vpop.f32.mrf.mxu0
        %2930 = vmatprep.mubr.bf16.mxu0 0
        %2931 = vmatmul.mubr.bf16.gmra.mxu0 %v2724
        %v2932 = vpop.f32.mrf.mxu0
        %v2933 = vadd.f32 0.0, %v2932
        %v2934 = vpop.f32.mrf.mxu0
        %v2935 = vpop.f32.mrf.mxu0
        %v2936 = vpop.f32.mrf.mxu0
        %2937 = vdwg.mxu0
        %v2938 = vadd.f32 %v2680, %v2764
        %v2939 = vadd.f32 %v2681, %v2767
        %v2940 = vadd.f32 %v2682, %v2774
        %v2941 = vadd.f32 %v2683, %v2779
        %v2942 = vadd.f32 %v2684, %v2786
        %v2943 = vadd.f32 %v2685, %v2789
        %v2944 = vadd.f32 %v2686, %v2796
        %v2945 = vadd.f32 %v2687, %v2801
        %v2946 = vadd.f32 %v2688, %v2808
        %v2947 = vadd.f32 %v2689, %v2811
        %v2948 = vadd.f32 %v2690, %v2818
        %v2949 = vadd.f32 %v2691, %v2823
        %v2950 = vadd.f32 %v2692, %v2830
        %v2951 = vadd.f32 %v2693, %v2833
        %v2952 = vadd.f32 %v2694, %v2840
        %v2953 = vadd.f32 %v2695, %v2845
        %v2954 = vadd.f32 %v2696, %v2852
        %v2955 = vadd.f32 %v2697, %v2855
        %v2956 = vadd.f32 %v2698, %v2862
        %v2957 = vadd.f32 %v2699, %v2867
        %v2958 = vadd.f32 %v2700, %v2874
        %v2959 = vadd.f32 %v2701, %v2877
        %v2960 = vadd.f32 %v2702, %v2884
        %v2961 = vadd.f32 %v2703, %v2889
        %v2962 = vadd.f32 %v2704, %v2896
        %v2963 = vadd.f32 %v2705, %v2899
        %v2964 = vadd.f32 %v2706, %v2906
        %v2965 = vadd.f32 %v2707, %v2911
        %v2966 = vadd.f32 %v2708, %v2918
        %v2967 = vadd.f32 %v2709, %v2921
        %v2968 = vadd.f32 %v2710, %v2928
        %v2969 = vadd.f32 %v2711, %v2933
        %v2970 = vpack.c.bf16 %v322, %v322
        %s2971 = scalar_lea.vmem %s1, 14
        %v2972 = vld [vmem:[%s2971] sm:$0x3]
        %v2973 = vshll.u32 %v2712, 16
        %v2975 = vrot.slane %v2973, 1
        %v2976 = vsel %vm351, %v542, %v2975
        %v2977 = vshrl.u32 %v2712, 16
        %v2979 = vor.u32 %v2977, %v2975
        %v2980 = vshll.u32 %v2713, 16
        %v2982 = vrot.slane %v2980, 1
        %v2983 = vsel %vm351, %v2979, %v2982
        %v2984 = vshrl.u32 %v2713, 16
        %v2986 = vor.u32 %v2984, %v2982
        %v2987 = vshll.u32 %v2714, 16
        %v2989 = vrot.slane %v2987, 1
        %v2990 = vsel %vm351, %v2986, %v2989
        %v2991 = vshrl.u32 %v2714, 16
        %v2993 = vor.u32 %v2991, %v2989
        %v2995 = vshll.u32 %v2970, 16
        %v2997 = vrot.slane %v2995, 1
        %v2998 = vsel %vm351, %v2993, %v2997
        %v3000 = vsel %vm548, %v2976, 0
        %v3003 = vsel %vm548, %v2983, 0
        %v3006 = vsel %vm548, %v2990, 0
        %v3009 = vsel %vm548, %v2998, 0
        %v3012 = vsel %vm621, %v2972, 0
        %3014 = vmatprep.subr.bf16.mxu0 0
        %3015 = vmatpush1.bf16.msra.mxu0 0
        %3016 = vmatprep.subr.bf16.mxu0 0
        %3017 = vmatpush1.bf16.msra.mxu0 0
        %3018 = vmatprep.subr.bf16.mxu0 0
        %3019 = vmatpush1.bf16.msra.mxu0 0
        %3020 = vmatprep.subr.bf16.mxu0 0
        %3021 = vmatpush1.bf16.msra.mxu0 0
        %3022 = vmatprep.subr.bf16.mxu0 0
        %3023 = vmatpush1.bf16.msra.mxu0 0
        %3024 = vmatprep.subr.bf16.mxu0 0
        %3025 = vmatpush1.bf16.msra.mxu0 0
        %3026 = vmatprep.subr.bf16.mxu0 0
        %3027 = vmatpush1.bf16.msra.mxu0 0
        %3028 = vmatprep.subr.bf16.mxu0 0
        %3029 = vmatpush1.bf16.msra.mxu0 %v3012
        %3030 = vmatprep.subr.bf16.mxu0 0
        %3031 = vmatpush2.bf16.msra.mxu0 0
        %3032 = vmatprep.subr.bf16.mxu0 0
        %3033 = vmatpush2.bf16.msra.mxu0 0
        %3034 = vmatprep.subr.bf16.mxu0 0
        %3035 = vmatpush2.bf16.msra.mxu0 0
        %3036 = vmatprep.subr.bf16.mxu0 0
        %3037 = vmatpush2.bf16.msra.mxu0 0
        %3038 = vmatprep.subr.bf16.mxu0 0
        %3039 = vmatpush2.bf16.msra.mxu0 0
        %3040 = vmatprep.subr.bf16.mxu0 0
        %3041 = vmatpush2.bf16.msra.mxu0 0
        %3042 = vmatprep.subr.bf16.mxu0 0
        %3043 = vmatpush2.bf16.msra.mxu0 0
        %3044 = vmatprep.subr.bf16.mxu0 0
        %3045 = vmatpush2.bf16.msra.mxu0 0
        %3046 = vmatprep.mubr.bf16.mxu0 0
        %3047 = vmatmul.mubr.bf16.gmra.mxu0 %v559
        %v3048 = vpop.f32.mrf.mxu0
        %v3049 = vadd.f32 0.0, %v3048
        %v3050 = vpop.f32.mrf.mxu0
        %v3051 = vpop.f32.mrf.mxu0
        %v3052 = vadd.f32 0.0, %v3051
        %v3053 = vpop.f32.mrf.mxu0
        %3054 = vmatprep.mubr.bf16.mxu0 0
        %3055 = vmatmul.mubr.bf16.gmra.mxu0 %v562
        %v3056 = vpop.f32.mrf.mxu0
        %v3057 = vpop.f32.mrf.mxu0
        %v3058 = vpop.f32.mrf.mxu0
        %v3059 = vadd.f32 0.0, %v3058
        %v3060 = vpop.f32.mrf.mxu0
        %3061 = vmatprep.mubr.bf16.mxu0 0
        %3062 = vmatmul.mubr.bf16.gmra.mxu0 %v565
        %v3063 = vpop.f32.mrf.mxu0
        %v3064 = vadd.f32 0.0, %v3063
        %v3065 = vpop.f32.mrf.mxu0
        %v3066 = vpop.f32.mrf.mxu0
        %v3067 = vpop.f32.mrf.mxu0
        %3068 = vmatprep.mubr.bf16.mxu0 0
        %3069 = vmatmul.mubr.bf16.gmra.mxu0 %v568
        %v3070 = vpop.f32.mrf.mxu0
        %v3071 = vadd.f32 0.0, %v3070
        %v3072 = vpop.f32.mrf.mxu0
        %v3073 = vpop.f32.mrf.mxu0
        %v3074 = vadd.f32 0.0, %v3073
        %v3075 = vpop.f32.mrf.mxu0
        %3076 = vmatprep.mubr.bf16.mxu0 0
        %3077 = vmatmul.mubr.bf16.gmra.mxu0 %v571
        %v3078 = vpop.f32.mrf.mxu0
        %v3079 = vpop.f32.mrf.mxu0
        %v3080 = vpop.f32.mrf.mxu0
        %v3081 = vadd.f32 0.0, %v3080
        %v3082 = vpop.f32.mrf.mxu0
        %3083 = vmatprep.mubr.bf16.mxu0 0
        %3084 = vmatmul.mubr.bf16.gmra.mxu0 %v574
        %v3085 = vpop.f32.mrf.mxu0
        %v3086 = vadd.f32 0.0, %v3085
        %v3087 = vpop.f32.mrf.mxu0
        %v3088 = vpop.f32.mrf.mxu0
        %v3089 = vpop.f32.mrf.mxu0
        %3090 = vmatprep.mubr.bf16.mxu0 0
        %3091 = vmatmul.mubr.bf16.gmra.mxu0 %v577
        %v3092 = vpop.f32.mrf.mxu0
        %v3093 = vadd.f32 0.0, %v3092
        %v3094 = vpop.f32.mrf.mxu0
        %v3095 = vpop.f32.mrf.mxu0
        %v3096 = vadd.f32 0.0, %v3095
        %v3097 = vpop.f32.mrf.mxu0
        %3098 = vmatprep.mubr.bf16.mxu0 0
        %3099 = vmatmul.mubr.bf16.gmra.mxu0 %v580
        %v3100 = vpop.f32.mrf.mxu0
        %v3101 = vpop.f32.mrf.mxu0
        %v3102 = vpop.f32.mrf.mxu0
        %v3103 = vadd.f32 0.0, %v3102
        %v3104 = vpop.f32.mrf.mxu0
        %3105 = vmatprep.mubr.bf16.mxu0 0
        %3106 = vmatmul.mubr.bf16.gmra.mxu0 %v583
        %v3107 = vpop.f32.mrf.mxu0
        %v3108 = vadd.f32 0.0, %v3107
        %v3109 = vpop.f32.mrf.mxu0
        %v3110 = vpop.f32.mrf.mxu0
        %v3111 = vpop.f32.mrf.mxu0
        %3112 = vmatprep.mubr.bf16.mxu0 0
        %3113 = vmatmul.mubr.bf16.gmra.mxu0 %v586
        %v3114 = vpop.f32.mrf.mxu0
        %v3115 = vadd.f32 0.0, %v3114
        %v3116 = vpop.f32.mrf.mxu0
        %v3117 = vpop.f32.mrf.mxu0
        %v3118 = vadd.f32 0.0, %v3117
        %v3119 = vpop.f32.mrf.mxu0
        %3120 = vmatprep.mubr.bf16.mxu0 0
        %3121 = vmatmul.mubr.bf16.gmra.mxu0 %v589
        %v3122 = vpop.f32.mrf.mxu0
        %v3123 = vpop.f32.mrf.mxu0
        %v3124 = vpop.f32.mrf.mxu0
        %v3125 = vadd.f32 0.0, %v3124
        %v3126 = vpop.f32.mrf.mxu0
        %3127 = vmatprep.mubr.bf16.mxu0 0
        %3128 = vmatmul.mubr.bf16.gmra.mxu0 %v592
        %v3129 = vpop.f32.mrf.mxu0
        %v3130 = vadd.f32 0.0, %v3129
        %v3131 = vpop.f32.mrf.mxu0
        %v3132 = vpop.f32.mrf.mxu0
        %v3133 = vpop.f32.mrf.mxu0
        %3134 = vmatprep.mubr.bf16.mxu0 0
        %3135 = vmatmul.mubr.bf16.gmra.mxu0 %v595
        %v3136 = vpop.f32.mrf.mxu0
        %v3137 = vadd.f32 0.0, %v3136
        %v3138 = vpop.f32.mrf.mxu0
        %v3139 = vpop.f32.mrf.mxu0
        %v3140 = vadd.f32 0.0, %v3139
        %v3141 = vpop.f32.mrf.mxu0
        %3142 = vmatprep.mubr.bf16.mxu0 0
        %3143 = vmatmul.mubr.bf16.gmra.mxu0 %v598
        %v3144 = vpop.f32.mrf.mxu0
        %v3145 = vpop.f32.mrf.mxu0
        %v3146 = vpop.f32.mrf.mxu0
        %v3147 = vadd.f32 0.0, %v3146
        %v3148 = vpop.f32.mrf.mxu0
        %3149 = vmatprep.mubr.bf16.mxu0 0
        %3150 = vmatmul.mubr.bf16.gmra.mxu0 %v601
        %v3151 = vpop.f32.mrf.mxu0
        %v3152 = vadd.f32 0.0, %v3151
        %v3153 = vpop.f32.mrf.mxu0
        %v3154 = vpop.f32.mrf.mxu0
        %v3155 = vpop.f32.mrf.mxu0
        %3156 = vmatprep.mubr.bf16.mxu0 0
        %3157 = vmatmul.mubr.bf16.gmra.mxu0 %v604
        %v3158 = vpop.f32.mrf.mxu0
        %v3159 = vadd.f32 0.0, %v3158
        %v3160 = vpop.f32.mrf.mxu0
        %v3161 = vpop.f32.mrf.mxu0
        %v3162 = vadd.f32 0.0, %v3161
        %v3163 = vpop.f32.mrf.mxu0
        %3164 = vmatprep.mubr.bf16.mxu0 0
        %3165 = vmatmul.mubr.bf16.gmra.mxu0 %v607
        %v3166 = vpop.f32.mrf.mxu0
        %v3167 = vpop.f32.mrf.mxu0
        %v3168 = vpop.f32.mrf.mxu0
        %v3169 = vadd.f32 0.0, %v3168
        %v3170 = vpop.f32.mrf.mxu0
        %3171 = vmatprep.mubr.bf16.mxu0 0
        %3172 = vmatmul.mubr.bf16.gmra.mxu0 %v610
        %v3173 = vpop.f32.mrf.mxu0
        %v3174 = vadd.f32 0.0, %v3173
        %v3175 = vpop.f32.mrf.mxu0
        %v3176 = vpop.f32.mrf.mxu0
        %v3177 = vpop.f32.mrf.mxu0
        %3178 = vmatprep.mubr.bf16.mxu0 0
        %3179 = vmatmul.mubr.bf16.gmra.mxu0 %v613
        %v3180 = vpop.f32.mrf.mxu0
        %v3181 = vadd.f32 0.0, %v3180
        %v3182 = vpop.f32.mrf.mxu0
        %v3183 = vpop.f32.mrf.mxu0
        %v3184 = vadd.f32 0.0, %v3183
        %v3185 = vpop.f32.mrf.mxu0
        %3186 = vmatprep.mubr.bf16.mxu0 0
        %3187 = vmatmul.mubr.bf16.gmra.mxu0 %v616
        %v3188 = vpop.f32.mrf.mxu0
        %v3189 = vpop.f32.mrf.mxu0
        %v3190 = vpop.f32.mrf.mxu0
        %v3191 = vadd.f32 0.0, %v3190
        %v3192 = vpop.f32.mrf.mxu0
        %3193 = vmatprep.mubr.bf16.mxu0 0
        %3194 = vmatmul.mubr.bf16.gmra.mxu0 %v3000
        %v3195 = vpop.f32.mrf.mxu0
        %v3196 = vadd.f32 0.0, %v3195
        %v3197 = vpop.f32.mrf.mxu0
        %v3198 = vpop.f32.mrf.mxu0
        %v3199 = vpop.f32.mrf.mxu0
        %3200 = vmatprep.mubr.bf16.mxu0 0
        %3201 = vmatmul.mubr.bf16.gmra.mxu0 %v3003
        %v3202 = vpop.f32.mrf.mxu0
        %v3203 = vadd.f32 0.0, %v3202
        %v3204 = vpop.f32.mrf.mxu0
        %v3205 = vpop.f32.mrf.mxu0
        %v3206 = vadd.f32 0.0, %v3205
        %v3207 = vpop.f32.mrf.mxu0
        %3208 = vmatprep.mubr.bf16.mxu0 0
        %3209 = vmatmul.mubr.bf16.gmra.mxu0 %v3006
        %v3210 = vpop.f32.mrf.mxu0
        %v3211 = vpop.f32.mrf.mxu0
        %v3212 = vpop.f32.mrf.mxu0
        %v3213 = vadd.f32 0.0, %v3212
        %v3214 = vpop.f32.mrf.mxu0
        %3215 = vmatprep.mubr.bf16.mxu0 0
        %3216 = vmatmul.mubr.bf16.gmra.mxu0 %v3009
        %v3217 = vpop.f32.mrf.mxu0
        %v3218 = vadd.f32 0.0, %v3217
        %v3219 = vpop.f32.mrf.mxu0
        %v3220 = vpop.f32.mrf.mxu0
        %v3221 = vpop.f32.mrf.mxu0
        %3222 = vdwg.mxu0
        %v3223 = vadd.f32 %v2938, %v3049
        %v3224 = vadd.f32 %v2939, %v3052
        %v3225 = vadd.f32 %v2940, %v3059
        %v3226 = vadd.f32 %v2941, %v3064
        %v3227 = vadd.f32 %v2942, %v3071
        %v3228 = vadd.f32 %v2943, %v3074
        %v3229 = vadd.f32 %v2944, %v3081
        %v3230 = vadd.f32 %v2945, %v3086
        %v3231 = vadd.f32 %v2946, %v3093
        %v3232 = vadd.f32 %v2947, %v3096
        %v3233 = vadd.f32 %v2948, %v3103
        %v3234 = vadd.f32 %v2949, %v3108
        %v3235 = vadd.f32 %v2950, %v3115
        %v3236 = vadd.f32 %v2951, %v3118
        %v3237 = vadd.f32 %v2952, %v3125
        %v3238 = vadd.f32 %v2953, %v3130
        %v3239 = vadd.f32 %v2954, %v3137
        %v3240 = vadd.f32 %v2955, %v3140
        %v3241 = vadd.f32 %v2956, %v3147
        %v3242 = vadd.f32 %v2957, %v3152
        %v3243 = vadd.f32 %v2958, %v3159
        %v3244 = vadd.f32 %v2959, %v3162
        %v3245 = vadd.f32 %v2960, %v3169
        %v3246 = vadd.f32 %v2961, %v3174
        %v3247 = vadd.f32 %v2962, %v3181
        %v3248 = vadd.f32 %v2963, %v3184
        %v3249 = vadd.f32 %v2964, %v3191
        %v3250 = vadd.f32 %v2965, %v3196
        %v3251 = vadd.f32 %v2966, %v3203
        %v3252 = vadd.f32 %v2967, %v3206
        %v3253 = vadd.f32 %v2968, %v3213
        %v3254 = vadd.f32 %v2969, %v3218
        %s3255 = scalar_lea.vmem %s1, 16
        %v3256 = vld [vmem:[%s3255] sm:$0x3]
        %v3261 = vrot.slane %v2712, 1
        %v3262 = vsel %vm1121, %v1167, %v3261
        %v3263 = vrot.slane %v2713, 1
        %v3264 = vsel %vm1121, %v3261, %v3263
        %v3265 = vrot.slane %v2714, 1
        %v3266 = vsel %vm1121, %v3263, %v3265
        %v3267 = vrot.slane %v2970, 1
        %v3268 = vsel %vm1121, %v3265, %v3267
        %v3270 = vsel %vm548, %v3262, 0
        %v3273 = vsel %vm548, %v3264, 0
        %v3276 = vsel %vm548, %v3266, 0
        %v3279 = vsel %vm548, %v3268, 0
        %v3282 = vsel %vm621, %v3256, 0
        %3284 = vmatprep.subr.bf16.mxu0 0
        %3285 = vmatpush1.bf16.msra.mxu0 0
        %3286 = vmatprep.subr.bf16.mxu0 0
        %3287 = vmatpush1.bf16.msra.mxu0 0
        %3288 = vmatprep.subr.bf16.mxu0 0
        %3289 = vmatpush1.bf16.msra.mxu0 0
        %3290 = vmatprep.subr.bf16.mxu0 0
        %3291 = vmatpush1.bf16.msra.mxu0 0
        %3292 = vmatprep.subr.bf16.mxu0 0
        %3293 = vmatpush1.bf16.msra.mxu0 0
        %3294 = vmatprep.subr.bf16.mxu0 0
        %3295 = vmatpush1.bf16.msra.mxu0 0
        %3296 = vmatprep.subr.bf16.mxu0 0
        %3297 = vmatpush1.bf16.msra.mxu0 0
        %3298 = vmatprep.subr.bf16.mxu0 0
        %3299 = vmatpush1.bf16.msra.mxu0 %v3282
        %3300 = vmatprep.subr.bf16.mxu0 0
        %3301 = vmatpush2.bf16.msra.mxu0 0
        %3302 = vmatprep.subr.bf16.mxu0 0
        %3303 = vmatpush2.bf16.msra.mxu0 0
        %3304 = vmatprep.subr.bf16.mxu0 0
        %3305 = vmatpush2.bf16.msra.mxu0 0
        %3306 = vmatprep.subr.bf16.mxu0 0
        %3307 = vmatpush2.bf16.msra.mxu0 0
        %3308 = vmatprep.subr.bf16.mxu0 0
        %3309 = vmatpush2.bf16.msra.mxu0 0
        %3310 = vmatprep.subr.bf16.mxu0 0
        %3311 = vmatpush2.bf16.msra.mxu0 0
        %3312 = vmatprep.subr.bf16.mxu0 0
        %3313 = vmatpush2.bf16.msra.mxu0 0
        %3314 = vmatprep.subr.bf16.mxu0 0
        %3315 = vmatpush2.bf16.msra.mxu0 0
        %3316 = vmatprep.mubr.bf16.mxu0 0
        %3317 = vmatmul.mubr.bf16.gmra.mxu0 %v1181
        %v3318 = vpop.f32.mrf.mxu0
        %v3319 = vadd.f32 0.0, %v3318
        %v3320 = vpop.f32.mrf.mxu0
        %v3321 = vpop.f32.mrf.mxu0
        %v3322 = vadd.f32 0.0, %v3321
        %v3323 = vpop.f32.mrf.mxu0
        %3324 = vmatprep.mubr.bf16.mxu0 0
        %3325 = vmatmul.mubr.bf16.gmra.mxu0 %v1184
        %v3326 = vpop.f32.mrf.mxu0
        %v3327 = vpop.f32.mrf.mxu0
        %v3328 = vpop.f32.mrf.mxu0
        %v3329 = vadd.f32 0.0, %v3328
        %v3330 = vpop.f32.mrf.mxu0
        %3331 = vmatprep.mubr.bf16.mxu0 0
        %3332 = vmatmul.mubr.bf16.gmra.mxu0 %v1187
        %v3333 = vpop.f32.mrf.mxu0
        %v3334 = vadd.f32 0.0, %v3333
        %v3335 = vpop.f32.mrf.mxu0
        %v3336 = vpop.f32.mrf.mxu0
        %v3337 = vpop.f32.mrf.mxu0
        %3338 = vmatprep.mubr.bf16.mxu0 0
        %3339 = vmatmul.mubr.bf16.gmra.mxu0 %v1190
        %v3340 = vpop.f32.mrf.mxu0
        %v3341 = vadd.f32 0.0, %v3340
        %v3342 = vpop.f32.mrf.mxu0
        %v3343 = vpop.f32.mrf.mxu0
        %v3344 = vadd.f32 0.0, %v3343
        %v3345 = vpop.f32.mrf.mxu0
        %3346 = vmatprep.mubr.bf16.mxu0 0
        %3347 = vmatmul.mubr.bf16.gmra.mxu0 %v1193
        %v3348 = vpop.f32.mrf.mxu0
        %v3349 = vpop.f32.mrf.mxu0
        %v3350 = vpop.f32.mrf.mxu0
        %v3351 = vadd.f32 0.0, %v3350
        %v3352 = vpop.f32.mrf.mxu0
        %3353 = vmatprep.mubr.bf16.mxu0 0
        %3354 = vmatmul.mubr.bf16.gmra.mxu0 %v1196
        %v3355 = vpop.f32.mrf.mxu0
        %v3356 = vadd.f32 0.0, %v3355
        %v3357 = vpop.f32.mrf.mxu0
        %v3358 = vpop.f32.mrf.mxu0
        %v3359 = vpop.f32.mrf.mxu0
        %3360 = vmatprep.mubr.bf16.mxu0 0
        %3361 = vmatmul.mubr.bf16.gmra.mxu0 %v1199
        %v3362 = vpop.f32.mrf.mxu0
        %v3363 = vadd.f32 0.0, %v3362
        %v3364 = vpop.f32.mrf.mxu0
        %v3365 = vpop.f32.mrf.mxu0
        %v3366 = vadd.f32 0.0, %v3365
        %v3367 = vpop.f32.mrf.mxu0
        %3368 = vmatprep.mubr.bf16.mxu0 0
        %3369 = vmatmul.mubr.bf16.gmra.mxu0 %v1202
        %v3370 = vpop.f32.mrf.mxu0
        %v3371 = vpop.f32.mrf.mxu0
        %v3372 = vpop.f32.mrf.mxu0
        %v3373 = vadd.f32 0.0, %v3372
        %v3374 = vpop.f32.mrf.mxu0
        %3375 = vmatprep.mubr.bf16.mxu0 0
        %3376 = vmatmul.mubr.bf16.gmra.mxu0 %v1205
        %v3377 = vpop.f32.mrf.mxu0
        %v3378 = vadd.f32 0.0, %v3377
        %v3379 = vpop.f32.mrf.mxu0
        %v3380 = vpop.f32.mrf.mxu0
        %v3381 = vpop.f32.mrf.mxu0
        %3382 = vmatprep.mubr.bf16.mxu0 0
        %3383 = vmatmul.mubr.bf16.gmra.mxu0 %v1208
        %v3384 = vpop.f32.mrf.mxu0
        %v3385 = vadd.f32 0.0, %v3384
        %v3386 = vpop.f32.mrf.mxu0
        %v3387 = vpop.f32.mrf.mxu0
        %v3388 = vadd.f32 0.0, %v3387
        %v3389 = vpop.f32.mrf.mxu0
        %3390 = vmatprep.mubr.bf16.mxu0 0
        %3391 = vmatmul.mubr.bf16.gmra.mxu0 %v1211
        %v3392 = vpop.f32.mrf.mxu0
        %v3393 = vpop.f32.mrf.mxu0
        %v3394 = vpop.f32.mrf.mxu0
        %v3395 = vadd.f32 0.0, %v3394
        %v3396 = vpop.f32.mrf.mxu0
        %3397 = vmatprep.mubr.bf16.mxu0 0
        %3398 = vmatmul.mubr.bf16.gmra.mxu0 %v1214
        %v3399 = vpop.f32.mrf.mxu0
        %v3400 = vadd.f32 0.0, %v3399
        %v3401 = vpop.f32.mrf.mxu0
        %v3402 = vpop.f32.mrf.mxu0
        %v3403 = vpop.f32.mrf.mxu0
        %3404 = vmatprep.mubr.bf16.mxu0 0
        %3405 = vmatmul.mubr.bf16.gmra.mxu0 %v1217
        %v3406 = vpop.f32.mrf.mxu0
        %v3407 = vadd.f32 0.0, %v3406
        %v3408 = vpop.f32.mrf.mxu0
        %v3409 = vpop.f32.mrf.mxu0
        %v3410 = vadd.f32 0.0, %v3409
        %v3411 = vpop.f32.mrf.mxu0
        %3412 = vmatprep.mubr.bf16.mxu0 0
        %3413 = vmatmul.mubr.bf16.gmra.mxu0 %v1220
        %v3414 = vpop.f32.mrf.mxu0
        %v3415 = vpop.f32.mrf.mxu0
        %v3416 = vpop.f32.mrf.mxu0
        %v3417 = vadd.f32 0.0, %v3416
        %v3418 = vpop.f32.mrf.mxu0
        %3419 = vmatprep.mubr.bf16.mxu0 0
        %3420 = vmatmul.mubr.bf16.gmra.mxu0 %v1223
        %v3421 = vpop.f32.mrf.mxu0
        %v3422 = vadd.f32 0.0, %v3421
        %v3423 = vpop.f32.mrf.mxu0
        %v3424 = vpop.f32.mrf.mxu0
        %v3425 = vpop.f32.mrf.mxu0
        %3426 = vmatprep.mubr.bf16.mxu0 0
        %3427 = vmatmul.mubr.bf16.gmra.mxu0 %v1226
        %v3428 = vpop.f32.mrf.mxu0
        %v3429 = vadd.f32 0.0, %v3428
        %v3430 = vpop.f32.mrf.mxu0
        %v3431 = vpop.f32.mrf.mxu0
        %v3432 = vadd.f32 0.0, %v3431
        %v3433 = vpop.f32.mrf.mxu0
        %3434 = vmatprep.mubr.bf16.mxu0 0
        %3435 = vmatmul.mubr.bf16.gmra.mxu0 %v1229
        %v3436 = vpop.f32.mrf.mxu0
        %v3437 = vpop.f32.mrf.mxu0
        %v3438 = vpop.f32.mrf.mxu0
        %v3439 = vadd.f32 0.0, %v3438
        %v3440 = vpop.f32.mrf.mxu0
        %3441 = vmatprep.mubr.bf16.mxu0 0
        %3442 = vmatmul.mubr.bf16.gmra.mxu0 %v1232
        %v3443 = vpop.f32.mrf.mxu0
        %v3444 = vadd.f32 0.0, %v3443
        %v3445 = vpop.f32.mrf.mxu0
        %v3446 = vpop.f32.mrf.mxu0
        %v3447 = vpop.f32.mrf.mxu0
        %3448 = vmatprep.mubr.bf16.mxu0 0
        %3449 = vmatmul.mubr.bf16.gmra.mxu0 %v1235
        %v3450 = vpop.f32.mrf.mxu0
        %v3451 = vadd.f32 0.0, %v3450
        %v3452 = vpop.f32.mrf.mxu0
        %v3453 = vpop.f32.mrf.mxu0
        %v3454 = vadd.f32 0.0, %v3453
        %v3455 = vpop.f32.mrf.mxu0
        %3456 = vmatprep.mubr.bf16.mxu0 0
        %3457 = vmatmul.mubr.bf16.gmra.mxu0 %v1238
        %v3458 = vpop.f32.mrf.mxu0
        %v3459 = vpop.f32.mrf.mxu0
        %v3460 = vpop.f32.mrf.mxu0
        %v3461 = vadd.f32 0.0, %v3460
        %v3462 = vpop.f32.mrf.mxu0
        %3463 = vmatprep.mubr.bf16.mxu0 0
        %3464 = vmatmul.mubr.bf16.gmra.mxu0 %v3270
        %v3465 = vpop.f32.mrf.mxu0
        %v3466 = vadd.f32 0.0, %v3465
        %v3467 = vpop.f32.mrf.mxu0
        %v3468 = vpop.f32.mrf.mxu0
        %v3469 = vpop.f32.mrf.mxu0
        %3470 = vmatprep.mubr.bf16.mxu0 0
        %3471 = vmatmul.mubr.bf16.gmra.mxu0 %v3273
        %v3472 = vpop.f32.mrf.mxu0
        %v3473 = vadd.f32 0.0, %v3472
        %v3474 = vpop.f32.mrf.mxu0
        %v3475 = vpop.f32.mrf.mxu0
        %v3476 = vadd.f32 0.0, %v3475
        %v3477 = vpop.f32.mrf.mxu0
        %3478 = vmatprep.mubr.bf16.mxu0 0
        %3479 = vmatmul.mubr.bf16.gmra.mxu0 %v3276
        %v3480 = vpop.f32.mrf.mxu0
        %v3481 = vpop.f32.mrf.mxu0
        %v3482 = vpop.f32.mrf.mxu0
        %v3483 = vadd.f32 0.0, %v3482
        %v3484 = vpop.f32.mrf.mxu0
        %3485 = vmatprep.mubr.bf16.mxu0 0
        %3486 = vmatmul.mubr.bf16.gmra.mxu0 %v3279
        %v3487 = vpop.f32.mrf.mxu0
        %v3488 = vadd.f32 0.0, %v3487
        %v3489 = vpop.f32.mrf.mxu0
        %v3490 = vpop.f32.mrf.mxu0
        %v3491 = vpop.f32.mrf.mxu0
        %3492 = vdwg.mxu0
        %v3493 = vadd.f32 %v3223, %v3319
        %v3494 = vadd.f32 %v3224, %v3322
        %v3495 = vadd.f32 %v3225, %v3329
        %v3496 = vadd.f32 %v3226, %v3334
        %v3497 = vadd.f32 %v3227, %v3341
        %v3498 = vadd.f32 %v3228, %v3344
        %v3499 = vadd.f32 %v3229, %v3351
        %v3500 = vadd.f32 %v3230, %v3356
        %v3501 = vadd.f32 %v3231, %v3363
        %v3502 = vadd.f32 %v3232, %v3366
        %v3503 = vadd.f32 %v3233, %v3373
        %v3504 = vadd.f32 %v3234, %v3378
        %v3505 = vadd.f32 %v3235, %v3385
        %v3506 = vadd.f32 %v3236, %v3388
        %v3507 = vadd.f32 %v3237, %v3395
        %v3508 = vadd.f32 %v3238, %v3400
        %v3509 = vadd.f32 %v3239, %v3407
        %v3510 = vadd.f32 %v3240, %v3410
        %v3511 = vadd.f32 %v3241, %v3417
        %v3512 = vadd.f32 %v3242, %v3422
        %v3513 = vadd.f32 %v3243, %v3429
        %v3514 = vadd.f32 %v3244, %v3432
        %v3515 = vadd.f32 %v3245, %v3439
        %v3516 = vadd.f32 %v3246, %v3444
        %v3517 = vadd.f32 %v3247, %v3451
        %v3518 = vadd.f32 %v3248, %v3454
        %v3519 = vadd.f32 %v3249, %v3461
        %v3520 = vadd.f32 %v3250, %v3466
        %v3521 = vadd.f32 %v3251, %v3473
        %v3522 = vadd.f32 %v3252, %v3476
        %v3523 = vadd.f32 %v3253, %v3483
        %v3524 = vadd.f32 %v3254, %v3488
        %3525 = vst [vmem:[%s194] sm:$0xff] %v3493
        %3526 = vst [vmem:[%s194 + $0x8] sm:$0xff] %v3494
        %3527 = vst [vmem:[%s194 + $0x10] sm:$0xff] %v3495
        %3528 = vst [vmem:[%s194 + $0x18] sm:$0xff] %v3496
        %3529 = vst [vmem:[%s194 + $0x20] sm:$0xff] %v3497
        %3530 = vst [vmem:[%s194 + $0x28] sm:$0xff] %v3498
        %3531 = vst [vmem:[%s194 + $0x30] sm:$0xff] %v3499
        %3532 = vst [vmem:[%s194 + $0x38] sm:$0xff] %v3500
        %3533 = vst [vmem:[%s194 + $0x40] sm:$0xff] %v3501
        %3534 = vst [vmem:[%s194 + $0x48] sm:$0xff] %v3502
        %3535 = vst [vmem:[%s194 + $0x50] sm:$0xff] %v3503
        %3536 = vst [vmem:[%s194 + $0x58] sm:$0xff] %v3504
        %3537 = vst [vmem:[%s194 + $0x60] sm:$0xff] %v3505
        %3538 = vst [vmem:[%s194 + $0x68] sm:$0xff] %v3506
        %3539 = vst [vmem:[%s194 + $0x70] sm:$0xff] %v3507
        %3540 = vst [vmem:[%s194 + $0x78] sm:$0xff] %v3508
        %3541 = vst [vmem:[%s194 + $0x80] sm:$0xff] %v3509
        %3542 = vst [vmem:[%s194 + $0x88] sm:$0xff] %v3510
        %3543 = vst [vmem:[%s194 + $0x90] sm:$0xff] %v3511
        %3544 = vst [vmem:[%s194 + $0x98] sm:$0xff] %v3512
        %3545 = vst [vmem:[%s194 + $0xa0] sm:$0xff] %v3513
        %3546 = vst [vmem:[%s194 + $0xa8] sm:$0xff] %v3514
        %3547 = vst [vmem:[%s194 + $0xb0] sm:$0xff] %v3515
        %3548 = vst [vmem:[%s194 + $0xb8] sm:$0xff] %v3516
        %3549 = vst [vmem:[%s194 + $0xc0] sm:$0xff] %v3517
        %3550 = vst [vmem:[%s194 + $0xc8] sm:$0xff] %v3518
        %3551 = vst [vmem:[%s194 + $0xd0] sm:$0xff] %v3519
        %3552 = vst [vmem:[%s194 + $0xd8] sm:$0xff] %v3520
        %3553 = vst [vmem:[%s194 + $0xe0] sm:$0xff] %v3521
        %3554 = vst [vmem:[%s194 + $0xe8] sm:$0xff] %v3522
        %3555 = vst [vmem:[%s194 + $0xf0] sm:$0xff] %v3523
        %3556 = vst [vmem:[%s194 + $0xf8] sm:$0xff] %v3524
        %v3557 = vadd.f32 %v3493, %v3495
        %v3558 = vadd.f32 %v3557, %v3497
        %v3559 = vadd.f32 %v3558, %v3499
        %v3560 = vadd.f32 %v3559, %v3501
        %v3561 = vadd.f32 %v3560, %v3503
        %v3562 = vadd.f32 %v3561, %v3505
        %v3563 = vadd.f32 %v3562, %v3507
        %v3564 = vadd.f32 %v3563, %v3509
        %v3565 = vadd.f32 %v3564, %v3511
        %v3566 = vadd.f32 %v3565, %v3513
        %v3567 = vadd.f32 %v3566, %v3515
        %v3568 = vadd.f32 %v3567, %v3517
        %v3569 = vadd.f32 %v3568, %v3519
        %v3570 = vadd.f32 %v3569, %v3521
        %v3571 = vadd.f32 %v3570, %v3523
        %v3572 = vadd.f32 %v3494, %v3496
        %v3573 = vadd.f32 %v3572, %v3498
        %v3574 = vadd.f32 %v3573, %v3500
        %v3575 = vadd.f32 %v3574, %v3502
        %v3576 = vadd.f32 %v3575, %v3504
        %v3577 = vadd.f32 %v3576, %v3506
        %v3578 = vadd.f32 %v3577, %v3508
        %v3579 = vadd.f32 %v3578, %v3510
        %v3580 = vadd.f32 %v3579, %v3512
        %v3581 = vadd.f32 %v3580, %v3514
        %v3582 = vadd.f32 %v3581, %v3516
        %v3583 = vadd.f32 %v3582, %v3518
        %v3584 = vadd.f32 %v3583, %v3520
        %v3585 = vadd.f32 %v3584, %v3522
        %v3586 = vadd.f32 %v3585, %v3524
        %v3587 = vadd.f32 %v3571, %v3586
        %v3588 = vrot.slane %v3587, 4
        %v3589 = vadd.f32 %v3587, %v3588
        %v3590 = vrot.slane %v3589, 2
        %v3591 = vadd.f32 %v3589, %v3590
        %v3592 = vrot.slane %v3591, 1
        %v3593 = vadd.f32 %v3591, %v3592
        %3594 = vst [vmem:[%s200] sm:$0x1] %v3593
        %v3595 = vmul.f32 %v3493, %v3493
        %v3596 = vmul.f32 %v3494, %v3494
        %v3597 = vmul.f32 %v3495, %v3495
        %v3598 = vmul.f32 %v3496, %v3496
        %v3599 = vmul.f32 %v3497, %v3497
        %v3600 = vmul.f32 %v3498, %v3498
        %v3601 = vmul.f32 %v3499, %v3499
        %v3602 = vmul.f32 %v3500, %v3500
        %v3603 = vmul.f32 %v3501, %v3501
        %v3604 = vmul.f32 %v3502, %v3502
        %v3605 = vmul.f32 %v3503, %v3503
        %v3606 = vmul.f32 %v3504, %v3504
        %v3607 = vmul.f32 %v3505, %v3505
        %v3608 = vmul.f32 %v3506, %v3506
        %v3609 = vmul.f32 %v3507, %v3507
        %v3610 = vmul.f32 %v3508, %v3508
        %v3611 = vmul.f32 %v3509, %v3509
        %v3612 = vmul.f32 %v3510, %v3510
        %v3613 = vmul.f32 %v3511, %v3511
        %v3614 = vmul.f32 %v3512, %v3512
        %v3615 = vmul.f32 %v3513, %v3513
        %v3616 = vmul.f32 %v3514, %v3514
        %v3617 = vmul.f32 %v3515, %v3515
        %v3618 = vmul.f32 %v3516, %v3516
        %v3619 = vmul.f32 %v3517, %v3517
        %v3620 = vmul.f32 %v3518, %v3518
        %v3621 = vmul.f32 %v3519, %v3519
        %v3622 = vmul.f32 %v3520, %v3520
        %v3623 = vmul.f32 %v3521, %v3521
        %v3624 = vmul.f32 %v3522, %v3522
        %v3625 = vmul.f32 %v3523, %v3523
        %v3626 = vmul.f32 %v3524, %v3524
        %v3627 = vadd.f32 %v3595, %v3597
        %v3628 = vadd.f32 %v3627, %v3599
        %v3629 = vadd.f32 %v3628, %v3601
        %v3630 = vadd.f32 %v3629, %v3603
        %v3631 = vadd.f32 %v3630, %v3605
        %v3632 = vadd.f32 %v3631, %v3607
        %v3633 = vadd.f32 %v3632, %v3609
        %v3634 = vadd.f32 %v3633, %v3611
        %v3635 = vadd.f32 %v3634, %v3613
        %v3636 = vadd.f32 %v3635, %v3615
        %v3637 = vadd.f32 %v3636, %v3617
        %v3638 = vadd.f32 %v3637, %v3619
        %v3639 = vadd.f32 %v3638, %v3621
        %v3640 = vadd.f32 %v3639, %v3623
        %v3641 = vadd.f32 %v3640, %v3625
        %v3642 = vadd.f32 %v3596, %v3598
        %v3643 = vadd.f32 %v3642, %v3600
        %v3644 = vadd.f32 %v3643, %v3602
        %v3645 = vadd.f32 %v3644, %v3604
        %v3646 = vadd.f32 %v3645, %v3606
        %v3647 = vadd.f32 %v3646, %v3608
        %v3648 = vadd.f32 %v3647, %v3610
        %v3649 = vadd.f32 %v3648, %v3612
        %v3650 = vadd.f32 %v3649, %v3614
        %v3651 = vadd.f32 %v3650, %v3616
        %v3652 = vadd.f32 %v3651, %v3618
        %v3653 = vadd.f32 %v3652, %v3620
        %v3654 = vadd.f32 %v3653, %v3622
        %v3655 = vadd.f32 %v3654, %v3624
        %v3656 = vadd.f32 %v3655, %v3626
        %v3657 = vadd.f32 %v3641, %v3656
        %v3658 = vrot.slane %v3657, 4
        %v3659 = vadd.f32 %v3657, %v3658
        %v3660 = vrot.slane %v3659, 2
        %v3661 = vadd.f32 %v3659, %v3660
        %v3662 = vrot.slane %v3661, 1
        %v3663 = vadd.f32 %v3661, %v3662
        %3664 = vst [vmem:[%s206] sm:$0x1] %v3663
        %s3665 = sand.u32 %s77, 1
        %s3666 = scalar_lea.sflag [#allocation3], %s3665
        %s3667 = sand.u32 %s77, 1
        %s3668 = smul.addr %s3667, 256
        %s3669 = scalar_lea.vmem [#allocation2], %s3668
        %s3670 = sand.u32 %s22, 1
        %s3671 = scalar_lea.sflag [#allocation5], %s3670
        %s3672 = sand.u32 %s103, 1
        %s3673 = scalar_lea.vmem [#allocation4], %s3672
        %s3674 = sand.u32 %s22, 1
        %s3675 = scalar_lea.sflag [#allocation5], %s3674
        %s3676 = sand.u32 %s129, 1
        %s3677 = scalar_lea.vmem [#allocation6], %s3676
        // Predicated region
        $region29: #{tpu_custom_call.1} parent=27 // pred_check
          %p3678 = pneg %p87
        $region30: #{tpu_custom_call.1} parent=27 // pred_check_branch
          %3680 = sbr.rel (%p3678) target = $region32
        $region31: #{tpu_custom_call.1} parent=27 // pred_region
          %s3682 = ssub.s32 4096, 4096
          %3683 = vsyncadd %s3666, %s3682
          %s3684 = smul.addr %s22, 32
          %s3685 = smul.addr %s3684, 128
          %s3686 = scalar_lea.hbm %s2, %s3685
          %s3687 = sshll.u32 %s3669, 4
          %s3688 = int_to_ptr.vmem [resolvable:$true] %s3687
          %3693 = dma.vmem_to_hbm [thread:$0]  %s3688, 4096, %s3686, %s3666, 128, 128, 8
        $region32: #{tpu_custom_call.1} parent=27 // pred_fallthru
          _
        // Predicated region
        $region33: #{tpu_custom_call.1} parent=27 // pred_check
          %p3694 = pneg %p113
        $region34: #{tpu_custom_call.1} parent=27 // pred_check_branch
          %3696 = sbr.rel (%p3694) target = $region36
        $region35: #{tpu_custom_call.1} parent=27 // pred_region
          %s3698 = ssub.s32 16, 16
          %3699 = vsyncadd %s3671, %s3698
          %s3700 = smul.addr %s22, 16
          %s3701 = scalar_lea.hbm %s3, %s3700
          %s3703 = sshll.u32 %s3673, 4
          %s3704 = int_to_ptr.vmem [resolvable:$true] %s3703
          %3706 = dma.vmem_to_hbm [thread:$0]  %s3704, 16, %s3701, %s3671
        $region36: #{tpu_custom_call.1} parent=27 // pred_fallthru
          _
        // Predicated region
        $region37: #{tpu_custom_call.1} parent=27 // pred_check
          %p3707 = pneg %p139
        $region38: #{tpu_custom_call.1} parent=27 // pred_check_branch
          %3709 = sbr.rel (%p3707) target = $region40
        $region39: #{tpu_custom_call.1} parent=27 // pred_region
          %s3711 = ssub.s32 16, 16
          %3712 = vsyncadd %s3675, %s3711
          %s3713 = smul.addr %s22, 16
          %s3714 = scalar_lea.hbm %s4, %s3713
          %s3716 = sshll.u32 %s3677, 4
          %s3717 = int_to_ptr.vmem [resolvable:$true] %s3716
          %3719 = dma.vmem_to_hbm [thread:$0]  %s3717, 16, %s3714, %s3675
        $region40: #{tpu_custom_call.1} parent=27 // pred_fallthru
          _
      $region28: #{tpu_custom_call.1} parent=5 // pred_fallthru
        _
      %p3720 = scmp.le.s32.totalorder 2, %s17
      // Predicated region
      $region41: #{tpu_custom_call.1} parent=5 // pred_check
        %p3721 = pneg %p3720
      $region42: #{tpu_custom_call.1} parent=5 // pred_check_branch
        %3723 = sbr.rel (%p3721) target = $region44
      $region43: #{tpu_custom_call.1} parent=5 // pred_region
        %s3724 = ssub.s32 %s17, 2
        // Predicated region
        $region45: #{tpu_custom_call.1} parent=43 // pred_check
          %p3725 = pneg %p93
        $region46: #{tpu_custom_call.1} parent=43 // pred_check_branch
          %3727 = sbr.rel (%p3725) target = $region48
        $region47: #{tpu_custom_call.1} parent=43 // pred_region
          %s3728 = sand.u32 %s78, 1
          %s3729 = scalar_lea.sflag [#allocation3], %s3728
          %s3730 = sand.u32 %s78, 1
          %s3731 = smul.addr %s3730, 256
          %s3732 = scalar_lea.vmem [#allocation2], %s3731
          %3733 = dma.done %s3729, 4096
        $region48: #{tpu_custom_call.1} parent=43 // pred_fallthru
          _
        // Predicated region
        $region49: #{tpu_custom_call.1} parent=43 // pred_check
          %p3734 = pneg %p119
        $region50: #{tpu_custom_call.1} parent=43 // pred_check_branch
          %3736 = sbr.rel (%p3734) target = $region52
        $region51: #{tpu_custom_call.1} parent=43 // pred_region
          %s3737 = sand.u32 %s23, 1
          %s3738 = scalar_lea.sflag [#allocation5], %s3737
          %s3739 = sand.u32 %s104, 1
          %s3740 = scalar_lea.vmem [#allocation4], %s3739
          %3741 = dma.done %s3738, 16
        $region52: #{tpu_custom_call.1} parent=43 // pred_fallthru
          _
        // Predicated region
        $region53: #{tpu_custom_call.1} parent=43 // pred_check
          %p3742 = pneg %p145
        $region54: #{tpu_custom_call.1} parent=43 // pred_check_branch
          %3744 = sbr.rel (%p3742) target = $region56
        $region55: #{tpu_custom_call.1} parent=43 // pred_region
          %s3745 = sand.u32 %s23, 1
          %s3746 = scalar_lea.sflag [#allocation5], %s3745
          %s3747 = sand.u32 %s130, 1
          %s3748 = scalar_lea.vmem [#allocation6], %s3747
          %3749 = dma.done %s3746, 16
        $region56: #{tpu_custom_call.1} parent=43 // pred_fallthru
          _
      $region44: #{tpu_custom_call.1} parent=5 // pred_fallthru
        _
    $region6: #{tpu_custom_call.1} parent=1 // loop_footer
      %s21 = sadd.s32 1, %s17
    $region7: #{tpu_custom_call.1} parent=1 // loop_footer_branch
      %16 = sbr.rel target = $region3
    $region8: #{tpu_custom_call.1} parent=1 // loop_exit
      _
    %3750 = vsyncpa [#allocation3], 1
    %s3751 = scalar_lea.sflag [#allocation3], 1
    %3752 = vsyncpa %s3751, 1
    %3753 = vsyncpa [#allocation5], 1
    %s3754 = scalar_lea.sflag [#allocation5], 1
    %3755 = vsyncpa %s3754, 1

</llo_original>
